<compile_context>
chip_gen: v6e
topology: v6e:2x2x1
jax: 0.10.0
libtpu: 0.0.40
codegen_flags: <defaults>
</compile_context>

<pallas_src>
import math

import jax
import jax.numpy as jnp
from jax.experimental import pallas as pl
from jax.experimental.pallas import tpu as pltpu

MXU_DTYPE = jnp.bfloat16        # matmul-operand dtype (f32 accumulation)
NEG_INF_MASK = -1e10            # matches reference `mask * -10000000000.0`
LN_EPS = 1e-6                   # matches LayerNorm(eps=1e-06)


# ----------------------------- kernel -----------------------------

def _make_decoder_layer_kernel(num_heads, depth, has_la_mask, has_pad_mask):
    hidden = num_heads * depth

    def kernel(*refs):
        i = 2
        x_ref, enc_ref = refs[0], refs[1]
        la_ref = pad_ref = None
        if has_la_mask:
            la_ref = refs[i]; i += 1
        if has_pad_mask:
            pad_ref = refs[i]; i += 1
        (wqkv1, bqkv1, wo1, bo1,
         wq2, bq2, wkv2, bkv2, wo2, bo2,
         w1, b1, w2, b2,
         g1, be1, g2, be2, g3, be3) = refs[i:i + 20]
        out_ref, aw1_ref, aw2_ref = refs[i + 20:i + 23]

        Bb, S, D = x_ref.shape
        S_enc = enc_ref.shape[1]
        R, R_e = Bb * S, Bb * S_enc
        scale = 1.0 / math.sqrt(depth)

        def linear(a, w_ref, b_ref):
            return (jnp.dot(a.astype(MXU_DTYPE), w_ref[...],
                            preferred_element_type=jnp.float32) + b_ref[...])

        def layer_norm(y, g_ref, b_ref):
            mu = jnp.mean(y, axis=-1, keepdims=True)
            var = jnp.mean(jnp.square(y - mu), axis=-1, keepdims=True)
            return (y - mu) * jax.lax.rsqrt(var + LN_EPS) * g_ref[...] + b_ref[...]

        def attention(q2d, k2d, v2d, mask3, Sq, Sk, aw_ref):
            # q2d: (Bb*Sq, hidden) f32, already scaled; k2d/v2d: (Bb*Sk, hidden) f32
            q3 = q2d.reshape(Bb, Sq, hidden).astype(MXU_DTYPE)
            k3 = k2d.reshape(Bb, Sk, hidden).astype(MXU_DTYPE)
            v3 = v2d.reshape(Bb, Sk, hidden).astype(MXU_DTYPE)
            ctx_heads = []
            for h in range(num_heads):
                sl = slice(h * depth, (h + 1) * depth)
                qh, kh, vh = q3[:, :, sl], k3[:, :, sl], v3[:, :, sl]
                s = jnp.einsum('bqd,bkd->bqk', qh, kh,
                               preferred_element_type=jnp.float32)
                if mask3 is not None:
                    s = s + mask3 * NEG_INF_MASK
                m = jnp.max(s, axis=-1, keepdims=True)
                e = jnp.exp(s - m)
                w = e * pl.reciprocal(jnp.sum(e, axis=-1, keepdims=True), approx=True)
                aw_ref[h] = w  # (Bb, Sq, Sk) f32, head-major output slab
                ctx_heads.append(
                    jnp.einsum('bqk,bkd->bqd', w.astype(MXU_DTYPE), vh,
                               preferred_element_type=jnp.float32))
            ctx = jnp.concatenate(ctx_heads, axis=-1)        # (Bb, Sq, hidden)
            return ctx.reshape(Bb * Sq, hidden)

        x = x_ref[...].reshape(R, D)           # (Bb*S, D) f32
        enc = enc_ref[...].reshape(R_e, D)     # (Bb*S_enc, D) f32

        # ---- MHA1: masked self-attention (fused QKV projection) ----
        qkv = linear(x, wqkv1, bqkv1)
        q1 = qkv[:, :hidden] * scale
        k1 = qkv[:, hidden:2 * hidden]
        v1 = qkv[:, 2 * hidden:]
        la = la_ref[...] if has_la_mask else None
        ctx1 = attention(q1, k1, v1, la, S, S, aw1_ref)
        attn1 = linear(ctx1, wo1, bo1)                      # dropout1 = identity
        out1 = layer_norm(attn1 + x, g1, be1)

        # ---- MHA2: cross-attention over enc_output (fused K/V projection) ----
        q2 = linear(out1, wq2, bq2) * scale
        kv = linear(enc, wkv2, bkv2)
        k2, v2 = kv[:, :hidden], kv[:, hidden:]
        pm = pad_ref[...] if has_pad_mask else None
        ctx2 = attention(q2, k2, v2, pm, S, S_enc, aw2_ref)
        attn2 = linear(ctx2, wo2, bo2)                      # dropout2 = identity
        out2 = layer_norm(attn2 + out1, g2, be2)

        # ---- Pointwise feed-forward ----
        h1 = jnp.maximum(linear(out2, w1, b1), 0.0)         # relu
        ffn = linear(h1, w2, b2)                            # dropout3 = identity
        out3 = layer_norm(ffn + out2, g3, be3)

        out_ref[...] = out3.reshape(Bb, S, D)

    return kernel


# ----------------------------- wrapper -----------------------------

def decoder_layer_pallas(x, enc_output, params, num_heads,
                         look_ahead_mask=None, padding_mask=None, block_b=None):
    """x: (B, S, D), enc_output: (B, S_enc, D); masks (optional): (B, S_k) float,
    1.0 = masked (reference's `mask * -1e10` additive semantics)."""
    B, S, D = x.shape
    _, S_enc, _ = enc_output.shape
    hidden = params["wo1"].shape[0]
    depth = hidden // num_heads

    if block_b is None:
        # Block enough batch elements so each grid step has ~256 matmul rows.
        block_b = min(B, max(1, 256 // max(S, 1)))
        while B % block_b:
            block_b -= 1
    grid = (B // block_b,)

    inputs = [x, enc_output]
    in_specs = [pl.BlockSpec((block_b, S, D), lambda b: (b, 0, 0)),
                pl.BlockSpec((block_b, S_enc, D), lambda b: (b, 0, 0))]

    has_la = look_ahead_mask is not None
    has_pad = padding_mask is not None
    if has_la:
        inputs.append(look_ahead_mask.astype(jnp.float32).reshape(B, 1, S))
        in_specs.append(pl.BlockSpec((block_b, 1, S), lambda b: (b, 0, 0)))
    if has_pad:
        inputs.append(padding_mask.astype(jnp.float32).reshape(B, 1, S_enc))
        in_specs.append(pl.BlockSpec((block_b, 1, S_enc), lambda b: (b, 0, 0)))

    weight_order = ["wqkv1", "bqkv1", "wo1", "bo1",
                    "wq2", "bq2", "wkv2", "bkv2", "wo2", "bo2",
                    "w1", "b1", "w2", "b2",
                    "g1", "be1", "g2", "be2", "g3", "be3"]
    for name in weight_order:
        w = params[name]
        inputs.append(w)
        in_specs.append(pl.BlockSpec(w.shape, lambda b, n=w.ndim: (0,) * n))

    H = num_heads
    out_shape = (jax.ShapeDtypeStruct((B, S, D), jnp.float32),
                 jax.ShapeDtypeStruct((H, B, S, S), jnp.float32),
                 jax.ShapeDtypeStruct((H, B, S, S_enc), jnp.float32))
    out_specs = [pl.BlockSpec((block_b, S, D), lambda b: (b, 0, 0)),
                 pl.BlockSpec((H, block_b, S, S), lambda b: (0, b, 0, 0)),
                 pl.BlockSpec((H, block_b, S, S_enc), lambda b: (0, b, 0, 0))]

    kernel = _make_decoder_layer_kernel(num_heads, depth, has_la, has_pad)

    out3, aw1, aw2 = pl.pallas_call(
        kernel,
        out_shape=out_shape,
        grid_spec=pltpu.PrefetchScalarGridSpec(
            num_scalar_prefetch=0, grid=grid,
            in_specs=in_specs, out_specs=out_specs),
        compiler_params=pltpu.CompilerParams(
            dimension_semantics=("parallel",),
            vmem_limit_bytes=48 * 1024 * 1024),
    )(*inputs)

    # Reference layout for attention weights: (B, H, Sq, Sk).
    return out3, jnp.transpose(aw1, (1, 0, 2, 3)), jnp.transpose(aw2, (1, 0, 2, 3))


# ----------------------------- parameters -----------------------------

def _make_linear(key, in_dim, out_dim):
    kw, kb = jax.random.split(key)
    bound = 1.0 / math.sqrt(in_dim)
    w = jax.random.uniform(kw, (in_dim, out_dim), jnp.float32, -bound, bound)
    b = jax.random.uniform(kb, (1, out_dim), jnp.float32, -bound, bound)
    return w, b


def make_decoder_layer_params(key, d_model, num_heads, dff, mha_hidden=None):
    hidden = d_model if mha_hidden is None else mha_hidden
    keys = jax.random.split(key, 10)
    wq1, bq1 = _make_linear(keys[0], d_model, hidden)
    wk1, bk1 = _make_linear(keys[1], d_model, hidden)
    wv1, bv1 = _make_linear(keys[2], d_model, hidden)
    wo1, bo1 = _make_linear(keys[3], hidden, d_model)
    wq2, bq2 = _make_linear(keys[4], d_model, hidden)
    wk2, bk2 = _make_linear(keys[5], d_model, hidden)
    wv2, bv2 = _make_linear(keys[6], d_model, hidden)
    wo2, bo2 = _make_linear(keys[7], hidden, d_model)
    w1, b1 = _make_linear(keys[8], d_model, dff)
    w2, b2 = _make_linear(keys[9], dff, d_model)
    f32 = jnp.float32
    return dict(
        # Fused QKV (self-attn) and KV (cross-attn) weights; MXU operands in bf16.
        wqkv1=jnp.concatenate([wq1, wk1, wv1], axis=1).astype(MXU_DTYPE),
        bqkv1=jnp.concatenate([bq1, bk1, bv1], axis=1),
        wo1=wo1.astype(MXU_DTYPE), bo1=bo1,
        wq2=wq2.astype(MXU_DTYPE), bq2=bq2,
        wkv2=jnp.concatenate([wk2, wv2], axis=1).astype(MXU_DTYPE),
        bkv2=jnp.concatenate([bk2, bv2], axis=1),
        wo2=wo2.astype(MXU_DTYPE), bo2=bo2,
        w1=w1.astype(MXU_DTYPE), b1=b1,
        w2=w2.astype(MXU_DTYPE), b2=b2,
        g1=jnp.ones((1, d_model), f32), be1=jnp.zeros((1, d_model), f32),
        g2=jnp.ones((1, d_model), f32), be2=jnp.zeros((1, d_model), f32),
        g3=jnp.ones((1, d_model), f32), be3=jnp.zeros((1, d_model), f32),
    )


# ----------------------------- pure-JAX reference -----------------------------

def decoder_layer_reference(x, enc, p, num_heads,
                            look_ahead_mask=None, padding_mask=None):
    B, S, D = x.shape
    S_enc = enc.shape[1]
    hidden = p["wo1"].shape[0]
    depth = hidden // num_heads
    scale = 1.0 / math.sqrt(depth)

    def linear(a, w, b):
        return jnp.dot(a.astype(MXU_DTYPE), w, preferred_element_type=jnp.float32) + b

    def layer_norm(y, g, b):
        mu = jnp.mean(y, axis=-1, keepdims=True)
        var = jnp.mean(jnp.square(y - mu), axis=-1, keepdims=True)
        return (y - mu) * jax.lax.rsqrt(var + LN_EPS) * g + b

    def attention(q, k, v, mask, Sq, Sk):
        q4 = q.reshape(B, Sq, num_heads, depth).transpose(0, 2, 1, 3).astype(MXU_DTYPE)
        k4 = k.reshape(B, Sk, num_heads, depth).transpose(0, 2, 1, 3).astype(MXU_DTYPE)
        v4 = v.reshape(B, Sk, num_heads, depth).transpose(0, 2, 1, 3).astype(MXU_DTYPE)
        s = jnp.einsum('bhqd,bhkd->bhqk', q4, k4, preferred_element_type=jnp.float32)
        if mask is not None:
            s = s + mask[:, None, None, :].astype(jnp.float32) * NEG_INF_MASK
        s = s - jnp.max(s, axis=-1, keepdims=True)
        e = jnp.exp(s)
        w = e / jnp.sum(e, axis=-1, keepdims=True)
        ctx = jnp.einsum('bhqk,bhkd->bhqd', w.astype(MXU_DTYPE), v4,
                         preferred_element_type=jnp.float32)
        return ctx.transpose(0, 2, 1, 3).reshape(B, Sq, hidden), w

    qkv = linear(x, p["wqkv1"], p["bqkv1"])
    q1 = qkv[..., :hidden] * scale
    k1 = qkv[..., hidden:2 * hidden]
    v1 = qkv[..., 2 * hidden:]
    ctx1, aw1 = attention(q1, k1, v1, look_ahead_mask, S, S)
    out1 = layer_norm(linear(ctx1, p["wo1"], p["bo1"]) + x, p["g1"], p["be1"])

    q2 = linear(out1, p["wq2"], p["bq2"]) * scale
    kv = linear(enc, p["wkv2"], p["bkv2"])
    k2, v2 = kv[..., :hidden], kv[..., hidden:]
    ctx2, aw2 = attention(q2, k2, v2, padding_mask, S, S_enc)
    out2 = layer_norm(linear(ctx2, p["wo2"], p["bo2"]) + out1, p["g2"], p["be2"])

    h1 = jnp.maximum(linear(out2, p["w1"], p["b1"]), 0.0)
    out3 = layer_norm(linear(h1, p["w2"], p["b2"]) + out2, p["g3"], p["be3"])
    return out3, aw1, aw2


# ----------------------------- demo -----------------------------

if __name__ == "__main__":
    d_model, num_heads, dff = 32, 4, 64
    B, S, S_enc = 2, 8, 8

    key = jax.random.PRNGKey(0)
    key, kx, ke, kp = jax.random.split(key, 4)
    x = jax.random.normal(kx, (B, S, d_model), jnp.float32)
    enc_output = jax.random.normal(ke, (B, S_enc, d_model), jnp.float32)
    params = make_decoder_layer_params(kp, d_model, num_heads, dff)

    # Padding mask over encoder keys (1.0 = masked), as in the reference module.
    padding_mask = jnp.broadcast_to(
        (jnp.arange(S_enc) >= S_enc - 2).astype(jnp.float32)[None, :], (B, S_enc))
    look_ahead_mask = None  # default path of the reference forward

    out3, aw1, aw2 = decoder_layer_pallas(
        x, enc_output, params, num_heads,
        look_ahead_mask=look_ahead_mask, padding_mask=padding_mask)
    out3, aw1, aw2 = jax.block_until_ready((out3, aw1, aw2))

    assert out3.shape == (B, S, d_model) and out3.dtype == jnp.float32
    assert aw1.shape == (B, num_heads, S, S)
    assert aw2.shape == (B, num_heads, S, S_enc)
    assert bool(jnp.all(jnp.isfinite(out3)))
    # Masked encoder positions must receive ~zero cross-attention weight.
    assert float(jnp.max(aw2[..., S_enc - 2:])) < 1e-6

    ref_out3, ref_aw1, ref_aw2 = decoder_layer_reference(
        x, enc_output, params, num_heads,
        look_ahead_mask=look_ahead_mask, padding_mask=padding_mask)
    assert float(jnp.max(jnp.abs(out3 - ref_out3))) < 5e-2
    assert float(jnp.max(jnp.abs(aw1 - ref_aw1))) < 5e-2
    assert float(jnp.max(jnp.abs(aw2 - ref_aw2))) < 5e-2

    print("KERNEL_OK")
</pallas_src>

<mosaic_0001>
module attributes {stable_mosaic.version = 11 : i64} {
  func.func @kernel(%arg0: i32, %arg1: memref<2x8x32xf32, #tpu.memory_space<vmem>>, %arg2: memref<2x8x32xf32, #tpu.memory_space<vmem>>, %arg3: memref<2x1x8xf32, #tpu.memory_space<vmem>>, %arg4: memref<32x96xbf16, #tpu.memory_space<vmem>>, %arg5: memref<1x96xf32, #tpu.memory_space<vmem>>, %arg6: memref<32x32xbf16, #tpu.memory_space<vmem>>, %arg7: memref<1x32xf32, #tpu.memory_space<vmem>>, %arg8: memref<32x32xbf16, #tpu.memory_space<vmem>>, %arg9: memref<1x32xf32, #tpu.memory_space<vmem>>, %arg10: memref<32x64xbf16, #tpu.memory_space<vmem>>, %arg11: memref<1x64xf32, #tpu.memory_space<vmem>>, %arg12: memref<32x32xbf16, #tpu.memory_space<vmem>>, %arg13: memref<1x32xf32, #tpu.memory_space<vmem>>, %arg14: memref<32x64xbf16, #tpu.memory_space<vmem>>, %arg15: memref<1x64xf32, #tpu.memory_space<vmem>>, %arg16: memref<64x32xbf16, #tpu.memory_space<vmem>>, %arg17: memref<1x32xf32, #tpu.memory_space<vmem>>, %arg18: memref<1x32xf32, #tpu.memory_space<vmem>>, %arg19: memref<1x32xf32, #tpu.memory_space<vmem>>, %arg20: memref<1x32xf32, #tpu.memory_space<vmem>>, %arg21: memref<1x32xf32, #tpu.memory_space<vmem>>, %arg22: memref<1x32xf32, #tpu.memory_space<vmem>>, %arg23: memref<1x32xf32, #tpu.memory_space<vmem>>, %arg24: memref<2x8x32xf32, #tpu.memory_space<vmem>>, %arg25: memref<4x2x8x8xf32, #tpu.memory_space<vmem>>, %arg26: memref<4x2x8x8xf32, #tpu.memory_space<vmem>>) attributes {dimension_semantics = [#tpu.dimension_semantics<parallel>], iteration_bounds = array<i64: 1>, scalar_prefetch = 0 : i64, scratch_operands = 0 : i64, tpu.core_type = #tpu.core_type<tc>, window_params = [{transform_indices = @transform_0, window_bounds = array<i64: 2, 8, 32>}, {transform_indices = @transform_1, window_bounds = array<i64: 2, 8, 32>}, {transform_indices = @transform_2, window_bounds = array<i64: 2, 1, 8>}, {pipeline_mode = #tpu.pipeline_mode<synchronous>, transform_indices = @transform_3, window_bounds = array<i64: 32, 96>}, {pipeline_mode = #tpu.pipeline_mode<synchronous>, transform_indices = @transform_4, window_bounds = array<i64: 1, 96>}, {pipeline_mode = #tpu.pipeline_mode<synchronous>, transform_indices = @transform_5, window_bounds = array<i64: 32, 32>}, {pipeline_mode = #tpu.pipeline_mode<synchronous>, transform_indices = @transform_6, window_bounds = array<i64: 1, 32>}, {pipeline_mode = #tpu.pipeline_mode<synchronous>, transform_indices = @transform_7, window_bounds = array<i64: 32, 32>}, {pipeline_mode = #tpu.pipeline_mode<synchronous>, transform_indices = @transform_8, window_bounds = array<i64: 1, 32>}, {pipeline_mode = #tpu.pipeline_mode<synchronous>, transform_indices = @transform_9, window_bounds = array<i64: 32, 64>}, {pipeline_mode = #tpu.pipeline_mode<synchronous>, transform_indices = @transform_10, window_bounds = array<i64: 1, 64>}, {pipeline_mode = #tpu.pipeline_mode<synchronous>, transform_indices = @transform_11, window_bounds = array<i64: 32, 32>}, {pipeline_mode = #tpu.pipeline_mode<synchronous>, transform_indices = @transform_12, window_bounds = array<i64: 1, 32>}, {pipeline_mode = #tpu.pipeline_mode<synchronous>, transform_indices = @transform_13, window_bounds = array<i64: 32, 64>}, {pipeline_mode = #tpu.pipeline_mode<synchronous>, transform_indices = @transform_14, window_bounds = array<i64: 1, 64>}, {pipeline_mode = #tpu.pipeline_mode<synchronous>, transform_indices = @transform_15, window_bounds = array<i64: 64, 32>}, {pipeline_mode = #tpu.pipeline_mode<synchronous>, transform_indices = @transform_16, window_bounds = array<i64: 1, 32>}, {pipeline_mode = #tpu.pipeline_mode<synchronous>, transform_indices = @transform_17, window_bounds = array<i64: 1, 32>}, {pipeline_mode = #tpu.pipeline_mode<synchronous>, transform_indices = @transform_18, window_bounds = array<i64: 1, 32>}, {pipeline_mode = #tpu.pipeline_mode<synchronous>, transform_indices = @transform_19, window_bounds = array<i64: 1, 32>}, {pipeline_mode = #tpu.pipeline_mode<synchronous>, transform_indices = @transform_20, window_bounds = array<i64: 1, 32>}, {pipeline_mode = #tpu.pipeline_mode<synchronous>, transform_indices = @transform_21, window_bounds = array<i64: 1, 32>}, {pipeline_mode = #tpu.pipeline_mode<synchronous>, transform_indices = @transform_22, window_bounds = array<i64: 1, 32>}, {transform_indices = @transform_23, window_bounds = array<i64: 2, 8, 32>}, {transform_indices = @transform_24, window_bounds = array<i64: 4, 2, 8, 8>}, {transform_indices = @transform_25, window_bounds = array<i64: 4, 2, 8, 8>}]} {
    %c0 = arith.constant 0 : index
    %c0_0 = arith.constant 0 : index
    %c0_1 = arith.constant 0 : index
    %0 = vector.load %arg1[%c0, %c0_0, %c0_1] : memref<2x8x32xf32, #tpu.memory_space<vmem>>, vector<2x8x32xf32>
    %1 = vector.shape_cast %0 : vector<2x8x32xf32> to vector<16x32xf32>
    %c0_2 = arith.constant 0 : index
    %c0_3 = arith.constant 0 : index
    %c0_4 = arith.constant 0 : index
    %2 = vector.load %arg2[%c0_2, %c0_3, %c0_4] : memref<2x8x32xf32, #tpu.memory_space<vmem>>, vector<2x8x32xf32>
    %3 = vector.shape_cast %2 : vector<2x8x32xf32> to vector<16x32xf32>
    %4 = arith.truncf %1 : vector<16x32xf32> to vector<16x32xbf16>
    %c0_5 = arith.constant 0 : index
    %c0_6 = arith.constant 0 : index
    %5 = vector.load %arg4[%c0_5, %c0_6] : memref<32x96xbf16, #tpu.memory_space<vmem>>, vector<32x96xbf16>
    %cst = arith.constant dense<0.000000e+00> : vector<16x96xf32>
    %6 = tpu.matmul %4, %5, %cst {dimension_numbers = #tpu.dot_dimension_numbers<[1], [0], [0], [1], [0, 0, 1, 1], [], []>} : vector<16x32xbf16>, vector<32x96xbf16>, vector<16x96xf32> -> vector<16x96xf32>
    %c0_7 = arith.constant 0 : index
    %c0_8 = arith.constant 0 : index
    %7 = vector.load %arg5[%c0_7, %c0_8] : memref<1x96xf32, #tpu.memory_space<vmem>>, vector<1x96xf32>
    %8 = vector.broadcast %7 : vector<1x96xf32> to vector<16x96xf32>
    %9 = arith.addf %6, %8 : vector<16x96xf32>
    %10 = vector.extract_strided_slice %9 {offsets = [0, 0], sizes = [16, 32], strides = [1, 1]} : vector<16x96xf32> to vector<16x32xf32>
    %cst_9 = arith.constant 0.353553385 : f32
    %11 = vector.broadcast %cst_9 : f32 to vector<16x32xf32>
    %12 = arith.mulf %10, %11 : vector<16x32xf32>
    %13 = vector.extract_strided_slice %9 {offsets = [0, 32], sizes = [16, 32], strides = [1, 1]} : vector<16x96xf32> to vector<16x32xf32>
    %14 = vector.extract_strided_slice %9 {offsets = [0, 64], sizes = [16, 32], strides = [1, 1]} : vector<16x96xf32> to vector<16x32xf32>
    %15 = vector.shape_cast %12 : vector<16x32xf32> to vector<2x8x32xf32>
    %16 = arith.truncf %15 : vector<2x8x32xf32> to vector<2x8x32xbf16>
    %17 = vector.shape_cast %13 : vector<16x32xf32> to vector<2x8x32xf32>
    %18 = arith.truncf %17 : vector<2x8x32xf32> to vector<2x8x32xbf16>
    %19 = vector.shape_cast %14 : vector<16x32xf32> to vector<2x8x32xf32>
    %20 = arith.truncf %19 : vector<2x8x32xf32> to vector<2x8x32xbf16>
    %21 = vector.extract_strided_slice %16 {offsets = [0, 0, 0], sizes = [2, 8, 8], strides = [1, 1, 1]} : vector<2x8x32xbf16> to vector<2x8x8xbf16>
    %22 = vector.extract_strided_slice %18 {offsets = [0, 0, 0], sizes = [2, 8, 8], strides = [1, 1, 1]} : vector<2x8x32xbf16> to vector<2x8x8xbf16>
    %23 = vector.extract_strided_slice %20 {offsets = [0, 0, 0], sizes = [2, 8, 8], strides = [1, 1, 1]} : vector<2x8x32xbf16> to vector<2x8x8xbf16>
    "tpu.trace_start"() <{level = 10 : i32, message = "bqd,bkd->bqk"}> : () -> ()
    %cst_10 = arith.constant dense<0.000000e+00> : vector<2x8x8xf32>
    %24 = tpu.matmul %21, %22, %cst_10 {dimension_numbers = #tpu.dot_dimension_numbers<[2], [2], [1], [1], [0, 0, 0, 1, 1, 1], [0], [0]>} : vector<2x8x8xbf16>, vector<2x8x8xbf16>, vector<2x8x8xf32> -> vector<2x8x8xf32>
    "tpu.trace_stop"() : () -> ()
    %cst_11 = arith.constant dense<0xFF800000> : vector<2x8xf32>
    %25 = vector.multi_reduction <maximumf>, %24, %cst_11 [2] : vector<2x8x8xf32> to vector<2x8xf32>
    %26 = vector.shape_cast %25 : vector<2x8xf32> to vector<2x8x1xf32>
    %27 = vector.broadcast %26 : vector<2x8x1xf32> to vector<2x8x8xf32>
    %28 = arith.subf %24, %27 : vector<2x8x8xf32>
    %29 = math.exp %28 : vector<2x8x8xf32>
    %cst_12 = arith.constant dense<0.000000e+00> : vector<2x8xf32>
    %30 = vector.multi_reduction <add>, %29, %cst_12 [2] : vector<2x8x8xf32> to vector<2x8xf32>
    %31 = vector.shape_cast %30 : vector<2x8xf32> to vector<2x8x1xf32>
    %32 = tpu.reciprocal %31 {approx = true} : vector<2x8x1xf32> -> vector<2x8x1xf32>
    %33 = vector.broadcast %32 : vector<2x8x1xf32> to vector<2x8x8xf32>
    %34 = arith.mulf %29, %33 : vector<2x8x8xf32>
    %c0_13 = arith.constant 0 : index
    %c0_14 = arith.constant 0 : index
    %c0_15 = arith.constant 0 : index
    %c0_16 = arith.constant 0 : index
    %35 = vector.load %arg25[%c0_13, %c0_14, %c0_15, %c0_16] : memref<4x2x8x8xf32, #tpu.memory_space<vmem>>, vector<1x2x8x8xf32>
    %36 = vector.shape_cast %35 : vector<1x2x8x8xf32> to vector<2x8x8xf32>
    %37 = vector.shape_cast %34 : vector<2x8x8xf32> to vector<1x2x8x8xf32>
    tpu.vector_store %arg25[%c0_13, %c0_14, %c0_15, %c0_16], %37 {strides = array<i32>} : memref<4x2x8x8xf32, #tpu.memory_space<vmem>>, vector<1x2x8x8xf32>,
    %38 = arith.truncf %34 : vector<2x8x8xf32> to vector<2x8x8xbf16>
    "tpu.trace_start"() <{level = 10 : i32, message = "bqk,bkd->bqd"}> : () -> ()
    %cst_17 = arith.constant dense<0.000000e+00> : vector<2x8x8xf32>
    %39 = tpu.matmul %38, %23, %cst_17 {dimension_numbers = #tpu.dot_dimension_numbers<[2], [1], [1], [2], [0, 0, 0, 1, 1, 2], [0], [0]>} : vector<2x8x8xbf16>, vector<2x8x8xbf16>, vector<2x8x8xf32> -> vector<2x8x8xf32>
    "tpu.trace_stop"() : () -> ()
    %40 = vector.extract_strided_slice %16 {offsets = [0, 0, 8], sizes = [2, 8, 8], strides = [1, 1, 1]} : vector<2x8x32xbf16> to vector<2x8x8xbf16>
    %41 = vector.extract_strided_slice %18 {offsets = [0, 0, 8], sizes = [2, 8, 8], strides = [1, 1, 1]} : vector<2x8x32xbf16> to vector<2x8x8xbf16>
    %42 = vector.extract_strided_slice %20 {offsets = [0, 0, 8], sizes = [2, 8, 8], strides = [1, 1, 1]} : vector<2x8x32xbf16> to vector<2x8x8xbf16>
    "tpu.trace_start"() <{level = 10 : i32, message = "bqd,bkd->bqk"}> : () -> ()
    %cst_18 = arith.constant dense<0.000000e+00> : vector<2x8x8xf32>
    %43 = tpu.matmul %40, %41, %cst_18 {dimension_numbers = #tpu.dot_dimension_numbers<[2], [2], [1], [1], [0, 0, 0, 1, 1, 1], [0], [0]>} : vector<2x8x8xbf16>, vector<2x8x8xbf16>, vector<2x8x8xf32> -> vector<2x8x8xf32>
    "tpu.trace_stop"() : () -> ()
    %cst_19 = arith.constant dense<0xFF800000> : vector<2x8xf32>
    %44 = vector.multi_reduction <maximumf>, %43, %cst_19 [2] : vector<2x8x8xf32> to vector<2x8xf32>
    %45 = vector.shape_cast %44 : vector<2x8xf32> to vector<2x8x1xf32>
    %46 = vector.broadcast %45 : vector<2x8x1xf32> to vector<2x8x8xf32>
    %47 = arith.subf %43, %46 : vector<2x8x8xf32>
    %48 = math.exp %47 : vector<2x8x8xf32>
    %cst_20 = arith.constant dense<0.000000e+00> : vector<2x8xf32>
    %49 = vector.multi_reduction <add>, %48, %cst_20 [2] : vector<2x8x8xf32> to vector<2x8xf32>
    %50 = vector.shape_cast %49 : vector<2x8xf32> to vector<2x8x1xf32>
    %51 = tpu.reciprocal %50 {approx = true} : vector<2x8x1xf32> -> vector<2x8x1xf32>
    %52 = vector.broadcast %51 : vector<2x8x1xf32> to vector<2x8x8xf32>
    %53 = arith.mulf %48, %52 : vector<2x8x8xf32>
    %c1 = arith.constant 1 : index
    %c0_21 = arith.constant 0 : index
    %c0_22 = arith.constant 0 : index
    %c0_23 = arith.constant 0 : index
    %54 = vector.load %arg25[%c1, %c0_21, %c0_22, %c0_23] : memref<4x2x8x8xf32, #tpu.memory_space<vmem>>, vector<1x2x8x8xf32>
    %55 = vector.shape_cast %54 : vector<1x2x8x8xf32> to vector<2x8x8xf32>
    %56 = vector.shape_cast %53 : vector<2x8x8xf32> to vector<1x2x8x8xf32>
    tpu.vector_store %arg25[%c1, %c0_21, %c0_22, %c0_23], %56 {strides = array<i32>} : memref<4x2x8x8xf32, #tpu.memory_space<vmem>>, vector<1x2x8x8xf32>,
    %57 = arith.truncf %53 : vector<2x8x8xf32> to vector<2x8x8xbf16>
    "tpu.trace_start"() <{level = 10 : i32, message = "bqk,bkd->bqd"}> : () -> ()
    %cst_24 = arith.constant dense<0.000000e+00> : vector<2x8x8xf32>
    %58 = tpu.matmul %57, %42, %cst_24 {dimension_numbers = #tpu.dot_dimension_numbers<[2], [1], [1], [2], [0, 0, 0, 1, 1, 2], [0], [0]>} : vector<2x8x8xbf16>, vector<2x8x8xbf16>, vector<2x8x8xf32> -> vector<2x8x8xf32>
    "tpu.trace_stop"() : () -> ()
    %59 = vector.extract_strided_slice %16 {offsets = [0, 0, 16], sizes = [2, 8, 8], strides = [1, 1, 1]} : vector<2x8x32xbf16> to vector<2x8x8xbf16>
    %60 = vector.extract_strided_slice %18 {offsets = [0, 0, 16], sizes = [2, 8, 8], strides = [1, 1, 1]} : vector<2x8x32xbf16> to vector<2x8x8xbf16>
    %61 = vector.extract_strided_slice %20 {offsets = [0, 0, 16], sizes = [2, 8, 8], strides = [1, 1, 1]} : vector<2x8x32xbf16> to vector<2x8x8xbf16>
    "tpu.trace_start"() <{level = 10 : i32, message = "bqd,bkd->bqk"}> : () -> ()
    %cst_25 = arith.constant dense<0.000000e+00> : vector<2x8x8xf32>
    %62 = tpu.matmul %59, %60, %cst_25 {dimension_numbers = #tpu.dot_dimension_numbers<[2], [2], [1], [1], [0, 0, 0, 1, 1, 1], [0], [0]>} : vector<2x8x8xbf16>, vector<2x8x8xbf16>, vector<2x8x8xf32> -> vector<2x8x8xf32>
    "tpu.trace_stop"() : () -> ()
    %cst_26 = arith.constant dense<0xFF800000> : vector<2x8xf32>
    %63 = vector.multi_reduction <maximumf>, %62, %cst_26 [2] : vector<2x8x8xf32> to vector<2x8xf32>
    %64 = vector.shape_cast %63 : vector<2x8xf32> to vector<2x8x1xf32>
    %65 = vector.broadcast %64 : vector<2x8x1xf32> to vector<2x8x8xf32>
    %66 = arith.subf %62, %65 : vector<2x8x8xf32>
    %67 = math.exp %66 : vector<2x8x8xf32>
    %cst_27 = arith.constant dense<0.000000e+00> : vector<2x8xf32>
    %68 = vector.multi_reduction <add>, %67, %cst_27 [2] : vector<2x8x8xf32> to vector<2x8xf32>
    %69 = vector.shape_cast %68 : vector<2x8xf32> to vector<2x8x1xf32>
    %70 = tpu.reciprocal %69 {approx = true} : vector<2x8x1xf32> -> vector<2x8x1xf32>
    %71 = vector.broadcast %70 : vector<2x8x1xf32> to vector<2x8x8xf32>
    %72 = arith.mulf %67, %71 : vector<2x8x8xf32>
    %c2 = arith.constant 2 : index
    %c0_28 = arith.constant 0 : index
    %c0_29 = arith.constant 0 : index
    %c0_30 = arith.constant 0 : index
    %73 = vector.load %arg25[%c2, %c0_28, %c0_29, %c0_30] : memref<4x2x8x8xf32, #tpu.memory_space<vmem>>, vector<1x2x8x8xf32>
    %74 = vector.shape_cast %73 : vector<1x2x8x8xf32> to vector<2x8x8xf32>
    %75 = vector.shape_cast %72 : vector<2x8x8xf32> to vector<1x2x8x8xf32>
    tpu.vector_store %arg25[%c2, %c0_28, %c0_29, %c0_30], %75 {strides = array<i32>} : memref<4x2x8x8xf32, #tpu.memory_space<vmem>>, vector<1x2x8x8xf32>,
    %76 = arith.truncf %72 : vector<2x8x8xf32> to vector<2x8x8xbf16>
    "tpu.trace_start"() <{level = 10 : i32, message = "bqk,bkd->bqd"}> : () -> ()
    %cst_31 = arith.constant dense<0.000000e+00> : vector<2x8x8xf32>
    %77 = tpu.matmul %76, %61, %cst_31 {dimension_numbers = #tpu.dot_dimension_numbers<[2], [1], [1], [2], [0, 0, 0, 1, 1, 2], [0], [0]>} : vector<2x8x8xbf16>, vector<2x8x8xbf16>, vector<2x8x8xf32> -> vector<2x8x8xf32>
    "tpu.trace_stop"() : () -> ()
    %78 = vector.extract_strided_slice %16 {offsets = [0, 0, 24], sizes = [2, 8, 8], strides = [1, 1, 1]} : vector<2x8x32xbf16> to vector<2x8x8xbf16>
    %79 = vector.extract_strided_slice %18 {offsets = [0, 0, 24], sizes = [2, 8, 8], strides = [1, 1, 1]} : vector<2x8x32xbf16> to vector<2x8x8xbf16>
    %80 = vector.extract_strided_slice %20 {offsets = [0, 0, 24], sizes = [2, 8, 8], strides = [1, 1, 1]} : vector<2x8x32xbf16> to vector<2x8x8xbf16>
    "tpu.trace_start"() <{level = 10 : i32, message = "bqd,bkd->bqk"}> : () -> ()
    %cst_32 = arith.constant dense<0.000000e+00> : vector<2x8x8xf32>
    %81 = tpu.matmul %78, %79, %cst_32 {dimension_numbers = #tpu.dot_dimension_numbers<[2], [2], [1], [1], [0, 0, 0, 1, 1, 1], [0], [0]>} : vector<2x8x8xbf16>, vector<2x8x8xbf16>, vector<2x8x8xf32> -> vector<2x8x8xf32>
    "tpu.trace_stop"() : () -> ()
    %cst_33 = arith.constant dense<0xFF800000> : vector<2x8xf32>
    %82 = vector.multi_reduction <maximumf>, %81, %cst_33 [2] : vector<2x8x8xf32> to vector<2x8xf32>
    %83 = vector.shape_cast %82 : vector<2x8xf32> to vector<2x8x1xf32>
    %84 = vector.broadcast %83 : vector<2x8x1xf32> to vector<2x8x8xf32>
    %85 = arith.subf %81, %84 : vector<2x8x8xf32>
    %86 = math.exp %85 : vector<2x8x8xf32>
    %cst_34 = arith.constant dense<0.000000e+00> : vector<2x8xf32>
    %87 = vector.multi_reduction <add>, %86, %cst_34 [2] : vector<2x8x8xf32> to vector<2x8xf32>
    %88 = vector.shape_cast %87 : vector<2x8xf32> to vector<2x8x1xf32>
    %89 = tpu.reciprocal %88 {approx = true} : vector<2x8x1xf32> -> vector<2x8x1xf32>
    %90 = vector.broadcast %89 : vector<2x8x1xf32> to vector<2x8x8xf32>
    %91 = arith.mulf %86, %90 : vector<2x8x8xf32>
    %c3 = arith.constant 3 : index
    %c0_35 = arith.constant 0 : index
    %c0_36 = arith.constant 0 : index
    %c0_37 = arith.constant 0 : index
    %92 = vector.load %arg25[%c3, %c0_35, %c0_36, %c0_37] : memref<4x2x8x8xf32, #tpu.memory_space<vmem>>, vector<1x2x8x8xf32>
    %93 = vector.shape_cast %92 : vector<1x2x8x8xf32> to vector<2x8x8xf32>
    %94 = vector.shape_cast %91 : vector<2x8x8xf32> to vector<1x2x8x8xf32>
    tpu.vector_store %arg25[%c3, %c0_35, %c0_36, %c0_37], %94 {strides = array<i32>} : memref<4x2x8x8xf32, #tpu.memory_space<vmem>>, vector<1x2x8x8xf32>,
    %95 = arith.truncf %91 : vector<2x8x8xf32> to vector<2x8x8xbf16>
    "tpu.trace_start"() <{level = 10 : i32, message = "bqk,bkd->bqd"}> : () -> ()
    %cst_38 = arith.constant dense<0.000000e+00> : vector<2x8x8xf32>
    %96 = tpu.matmul %95, %80, %cst_38 {dimension_numbers = #tpu.dot_dimension_numbers<[2], [1], [1], [2], [0, 0, 0, 1, 1, 2], [0], [0]>} : vector<2x8x8xbf16>, vector<2x8x8xbf16>, vector<2x8x8xf32> -> vector<2x8x8xf32>
    "tpu.trace_stop"() : () -> ()
    %97 = tpu.concatenate %39, %58, %77, %96 in 2 : vector<2x8x8xf32>, vector<2x8x8xf32>, vector<2x8x8xf32>, vector<2x8x8xf32> -> vector<2x8x32xf32>
    %98 = vector.shape_cast %97 : vector<2x8x32xf32> to vector<16x32xf32>
    %99 = arith.truncf %98 : vector<16x32xf32> to vector<16x32xbf16>
    %c0_39 = arith.constant 0 : index
    %c0_40 = arith.constant 0 : index
    %100 = vector.load %arg6[%c0_39, %c0_40] : memref<32x32xbf16, #tpu.memory_space<vmem>>, vector<32x32xbf16>
    %cst_41 = arith.constant dense<0.000000e+00> : vector<16x32xf32>
    %101 = tpu.matmul %99, %100, %cst_41 {dimension_numbers = #tpu.dot_dimension_numbers<[1], [0], [0], [1], [0, 0, 1, 1], [], []>} : vector<16x32xbf16>, vector<32x32xbf16>, vector<16x32xf32> -> vector<16x32xf32>
    %c0_42 = arith.constant 0 : index
    %c0_43 = arith.constant 0 : index
    %102 = vector.load %arg7[%c0_42, %c0_43] : memref<1x32xf32, #tpu.memory_space<vmem>>, vector<1x32xf32>
    %103 = vector.broadcast %102 : vector<1x32xf32> to vector<16x32xf32>
    %104 = arith.addf %101, %103 : vector<16x32xf32>
    %105 = arith.addf %104, %1 : vector<16x32xf32>
    %cst_44 = arith.constant dense<0.000000e+00> : vector<16xf32>
    %106 = vector.multi_reduction <add>, %105, %cst_44 [1] : vector<16x32xf32> to vector<16xf32>
    %107 = vector.shape_cast %106 : vector<16xf32> to vector<16x1xf32>
    %cst_45 = arith.constant 3.200000e+01 : f32
    %108 = vector.broadcast %cst_45 : f32 to vector<16x1xf32>
    %109 = arith.divf %107, %108 : vector<16x1xf32>
    %110 = vector.broadcast %109 : vector<16x1xf32> to vector<16x32xf32>
    %111 = arith.subf %105, %110 : vector<16x32xf32>
    %112 = arith.mulf %111, %111 : vector<16x32xf32>
    %cst_46 = arith.constant dense<0.000000e+00> : vector<16xf32>
    %113 = vector.multi_reduction <add>, %112, %cst_46 [1] : vector<16x32xf32> to vector<16xf32>
    %114 = vector.shape_cast %113 : vector<16xf32> to vector<16x1xf32>
    %cst_47 = arith.constant 3.200000e+01 : f32
    %115 = vector.broadcast %cst_47 : f32 to vector<16x1xf32>
    %116 = arith.divf %114, %115 : vector<16x1xf32>
    %117 = vector.broadcast %109 : vector<16x1xf32> to vector<16x32xf32>
    %118 = arith.subf %105, %117 : vector<16x32xf32>
    %cst_48 = arith.constant 9.99999997E-7 : f32
    %119 = vector.broadcast %cst_48 : f32 to vector<16x1xf32>
    %120 = arith.addf %116, %119 : vector<16x1xf32>
    %121 = math.rsqrt %120 : vector<16x1xf32>
    %122 = vector.broadcast %121 : vector<16x1xf32> to vector<16x32xf32>
    %123 = arith.mulf %118, %122 : vector<16x32xf32>
    %c0_49 = arith.constant 0 : index
    %c0_50 = arith.constant 0 : index
    %124 = vector.load %arg18[%c0_49, %c0_50] : memref<1x32xf32, #tpu.memory_space<vmem>>, vector<1x32xf32>
    %125 = vector.broadcast %124 : vector<1x32xf32> to vector<16x32xf32>
    %126 = arith.mulf %123, %125 : vector<16x32xf32>
    %c0_51 = arith.constant 0 : index
    %c0_52 = arith.constant 0 : index
    %127 = vector.load %arg19[%c0_51, %c0_52] : memref<1x32xf32, #tpu.memory_space<vmem>>, vector<1x32xf32>
    %128 = vector.broadcast %127 : vector<1x32xf32> to vector<16x32xf32>
    %129 = arith.addf %126, %128 : vector<16x32xf32>
    %130 = arith.truncf %129 : vector<16x32xf32> to vector<16x32xbf16>
    %c0_53 = arith.constant 0 : index
    %c0_54 = arith.constant 0 : index
    %131 = vector.load %arg8[%c0_53, %c0_54] : memref<32x32xbf16, #tpu.memory_space<vmem>>, vector<32x32xbf16>
    %cst_55 = arith.constant dense<0.000000e+00> : vector<16x32xf32>
    %132 = tpu.matmul %130, %131, %cst_55 {dimension_numbers = #tpu.dot_dimension_numbers<[1], [0], [0], [1], [0, 0, 1, 1], [], []>} : vector<16x32xbf16>, vector<32x32xbf16>, vector<16x32xf32> -> vector<16x32xf32>
    %c0_56 = arith.constant 0 : index
    %c0_57 = arith.constant 0 : index
    %133 = vector.load %arg9[%c0_56, %c0_57] : memref<1x32xf32, #tpu.memory_space<vmem>>, vector<1x32xf32>
    %134 = vector.broadcast %133 : vector<1x32xf32> to vector<16x32xf32>
    %135 = arith.addf %132, %134 : vector<16x32xf32>
    %cst_58 = arith.constant 0.353553385 : f32
    %136 = vector.broadcast %cst_58 : f32 to vector<16x32xf32>
    %137 = arith.mulf %135, %136 : vector<16x32xf32>
    %138 = arith.truncf %3 : vector<16x32xf32> to vector<16x32xbf16>
    %c0_59 = arith.constant 0 : index
    %c0_60 = arith.constant 0 : index
    %139 = vector.load %arg10[%c0_59, %c0_60] : memref<32x64xbf16, #tpu.memory_space<vmem>>, vector<32x64xbf16>
    %cst_61 = arith.constant dense<0.000000e+00> : vector<16x64xf32>
    %140 = tpu.matmul %138, %139, %cst_61 {dimension_numbers = #tpu.dot_dimension_numbers<[1], [0], [0], [1], [0, 0, 1, 1], [], []>} : vector<16x32xbf16>, vector<32x64xbf16>, vector<16x64xf32> -> vector<16x64xf32>
    %c0_62 = arith.constant 0 : index
    %c0_63 = arith.constant 0 : index
    %141 = vector.load %arg11[%c0_62, %c0_63] : memref<1x64xf32, #tpu.memory_space<vmem>>, vector<1x64xf32>
    %142 = vector.broadcast %141 : vector<1x64xf32> to vector<16x64xf32>
    %143 = arith.addf %140, %142 : vector<16x64xf32>
    %144 = vector.extract_strided_slice %143 {offsets = [0, 0], sizes = [16, 32], strides = [1, 1]} : vector<16x64xf32> to vector<16x32xf32>
    %145 = vector.extract_strided_slice %143 {offsets = [0, 32], sizes = [16, 32], strides = [1, 1]} : vector<16x64xf32> to vector<16x32xf32>
    %c0_64 = arith.constant 0 : index
    %c0_65 = arith.constant 0 : index
    %c0_66 = arith.constant 0 : index
    %146 = vector.load %arg3[%c0_64, %c0_65, %c0_66] : memref<2x1x8xf32, #tpu.memory_space<vmem>>, vector<2x1x8xf32>
    %147 = vector.shape_cast %137 : vector<16x32xf32> to vector<2x8x32xf32>
    %148 = arith.truncf %147 : vector<2x8x32xf32> to vector<2x8x32xbf16>
    %149 = vector.shape_cast %144 : vector<16x32xf32> to vector<2x8x32xf32>
    %150 = arith.truncf %149 : vector<2x8x32xf32> to vector<2x8x32xbf16>
    %151 = vector.shape_cast %145 : vector<16x32xf32> to vector<2x8x32xf32>
    %152 = arith.truncf %151 : vector<2x8x32xf32> to vector<2x8x32xbf16>
    %153 = vector.extract_strided_slice %148 {offsets = [0, 0, 0], sizes = [2, 8, 8], strides = [1, 1, 1]} : vector<2x8x32xbf16> to vector<2x8x8xbf16>
    %154 = vector.extract_strided_slice %150 {offsets = [0, 0, 0], sizes = [2, 8, 8], strides = [1, 1, 1]} : vector<2x8x32xbf16> to vector<2x8x8xbf16>
    %155 = vector.extract_strided_slice %152 {offsets = [0, 0, 0], sizes = [2, 8, 8], strides = [1, 1, 1]} : vector<2x8x32xbf16> to vector<2x8x8xbf16>
    "tpu.trace_start"() <{level = 10 : i32, message = "bqd,bkd->bqk"}> : () -> ()
    %cst_67 = arith.constant dense<0.000000e+00> : vector<2x8x8xf32>
    %156 = tpu.matmul %153, %154, %cst_67 {dimension_numbers = #tpu.dot_dimension_numbers<[2], [2], [1], [1], [0, 0, 0, 1, 1, 1], [0], [0]>} : vector<2x8x8xbf16>, vector<2x8x8xbf16>, vector<2x8x8xf32> -> vector<2x8x8xf32>
    "tpu.trace_stop"() : () -> ()
    %cst_68 = arith.constant -1.000000e+10 : f32
    %157 = vector.broadcast %cst_68 : f32 to vector<2x1x8xf32>
    %158 = arith.mulf %146, %157 : vector<2x1x8xf32>
    %159 = vector.broadcast %158 : vector<2x1x8xf32> to vector<2x8x8xf32>
    %160 = arith.addf %156, %159 : vector<2x8x8xf32>
    %cst_69 = arith.constant dense<0xFF800000> : vector<2x8xf32>
    %161 = vector.multi_reduction <maximumf>, %160, %cst_69 [2] : vector<2x8x8xf32> to vector<2x8xf32>
    %162 = vector.shape_cast %161 : vector<2x8xf32> to vector<2x8x1xf32>
    %163 = vector.broadcast %162 : vector<2x8x1xf32> to vector<2x8x8xf32>
    %164 = arith.subf %160, %163 : vector<2x8x8xf32>
    %165 = math.exp %164 : vector<2x8x8xf32>
    %cst_70 = arith.constant dense<0.000000e+00> : vector<2x8xf32>
    %166 = vector.multi_reduction <add>, %165, %cst_70 [2] : vector<2x8x8xf32> to vector<2x8xf32>
    %167 = vector.shape_cast %166 : vector<2x8xf32> to vector<2x8x1xf32>
    %168 = tpu.reciprocal %167 {approx = true} : vector<2x8x1xf32> -> vector<2x8x1xf32>
    %169 = vector.broadcast %168 : vector<2x8x1xf32> to vector<2x8x8xf32>
    %170 = arith.mulf %165, %169 : vector<2x8x8xf32>
    %c0_71 = arith.constant 0 : index
    %c0_72 = arith.constant 0 : index
    %c0_73 = arith.constant 0 : index
    %c0_74 = arith.constant 0 : index
    %171 = vector.load %arg26[%c0_71, %c0_72, %c0_73, %c0_74] : memref<4x2x8x8xf32, #tpu.memory_space<vmem>>, vector<1x2x8x8xf32>
    %172 = vector.shape_cast %171 : vector<1x2x8x8xf32> to vector<2x8x8xf32>
    %173 = vector.shape_cast %170 : vector<2x8x8xf32> to vector<1x2x8x8xf32>
    tpu.vector_store %arg26[%c0_71, %c0_72, %c0_73, %c0_74], %173 {strides = array<i32>} : memref<4x2x8x8xf32, #tpu.memory_space<vmem>>, vector<1x2x8x8xf32>,
    %174 = arith.truncf %170 : vector<2x8x8xf32> to vector<2x8x8xbf16>
    "tpu.trace_start"() <{level = 10 : i32, message = "bqk,bkd->bqd"}> : () -> ()
    %cst_75 = arith.constant dense<0.000000e+00> : vector<2x8x8xf32>
    %175 = tpu.matmul %174, %155, %cst_75 {dimension_numbers = #tpu.dot_dimension_numbers<[2], [1], [1], [2], [0, 0, 0, 1, 1, 2], [0], [0]>} : vector<2x8x8xbf16>, vector<2x8x8xbf16>, vector<2x8x8xf32> -> vector<2x8x8xf32>
    "tpu.trace_stop"() : () -> ()
    %176 = vector.extract_strided_slice %148 {offsets = [0, 0, 8], sizes = [2, 8, 8], strides = [1, 1, 1]} : vector<2x8x32xbf16> to vector<2x8x8xbf16>
    %177 = vector.extract_strided_slice %150 {offsets = [0, 0, 8], sizes = [2, 8, 8], strides = [1, 1, 1]} : vector<2x8x32xbf16> to vector<2x8x8xbf16>
    %178 = vector.extract_strided_slice %152 {offsets = [0, 0, 8], sizes = [2, 8, 8], strides = [1, 1, 1]} : vector<2x8x32xbf16> to vector<2x8x8xbf16>
    "tpu.trace_start"() <{level = 10 : i32, message = "bqd,bkd->bqk"}> : () -> ()
    %cst_76 = arith.constant dense<0.000000e+00> : vector<2x8x8xf32>
    %179 = tpu.matmul %176, %177, %cst_76 {dimension_numbers = #tpu.dot_dimension_numbers<[2], [2], [1], [1], [0, 0, 0, 1, 1, 1], [0], [0]>} : vector<2x8x8xbf16>, vector<2x8x8xbf16>, vector<2x8x8xf32> -> vector<2x8x8xf32>
    "tpu.trace_stop"() : () -> ()
    %cst_77 = arith.constant -1.000000e+10 : f32
    %180 = vector.broadcast %cst_77 : f32 to vector<2x1x8xf32>
    %181 = arith.mulf %146, %180 : vector<2x1x8xf32>
    %182 = vector.broadcast %181 : vector<2x1x8xf32> to vector<2x8x8xf32>
    %183 = arith.addf %179, %182 : vector<2x8x8xf32>
    %cst_78 = arith.constant dense<0xFF800000> : vector<2x8xf32>
    %184 = vector.multi_reduction <maximumf>, %183, %cst_78 [2] : vector<2x8x8xf32> to vector<2x8xf32>
    %185 = vector.shape_cast %184 : vector<2x8xf32> to vector<2x8x1xf32>
    %186 = vector.broadcast %185 : vector<2x8x1xf32> to vector<2x8x8xf32>
    %187 = arith.subf %183, %186 : vector<2x8x8xf32>
    %188 = math.exp %187 : vector<2x8x8xf32>
    %cst_79 = arith.constant dense<0.000000e+00> : vector<2x8xf32>
    %189 = vector.multi_reduction <add>, %188, %cst_79 [2] : vector<2x8x8xf32> to vector<2x8xf32>
    %190 = vector.shape_cast %189 : vector<2x8xf32> to vector<2x8x1xf32>
    %191 = tpu.reciprocal %190 {approx = true} : vector<2x8x1xf32> -> vector<2x8x1xf32>
    %192 = vector.broadcast %191 : vector<2x8x1xf32> to vector<2x8x8xf32>
    %193 = arith.mulf %188, %192 : vector<2x8x8xf32>
    %c1_80 = arith.constant 1 : index
    %c0_81 = arith.constant 0 : index
    %c0_82 = arith.constant 0 : index
    %c0_83 = arith.constant 0 : index
    %194 = vector.load %arg26[%c1_80, %c0_81, %c0_82, %c0_83] : memref<4x2x8x8xf32, #tpu.memory_space<vmem>>, vector<1x2x8x8xf32>
    %195 = vector.shape_cast %194 : vector<1x2x8x8xf32> to vector<2x8x8xf32>
    %196 = vector.shape_cast %193 : vector<2x8x8xf32> to vector<1x2x8x8xf32>
    tpu.vector_store %arg26[%c1_80, %c0_81, %c0_82, %c0_83], %196 {strides = array<i32>} : memref<4x2x8x8xf32, #tpu.memory_space<vmem>>, vector<1x2x8x8xf32>,
    %197 = arith.truncf %193 : vector<2x8x8xf32> to vector<2x8x8xbf16>
    "tpu.trace_start"() <{level = 10 : i32, message = "bqk,bkd->bqd"}> : () -> ()
    %cst_84 = arith.constant dense<0.000000e+00> : vector<2x8x8xf32>
    %198 = tpu.matmul %197, %178, %cst_84 {dimension_numbers = #tpu.dot_dimension_numbers<[2], [1], [1], [2], [0, 0, 0, 1, 1, 2], [0], [0]>} : vector<2x8x8xbf16>, vector<2x8x8xbf16>, vector<2x8x8xf32> -> vector<2x8x8xf32>
    "tpu.trace_stop"() : () -> ()
    %199 = vector.extract_strided_slice %148 {offsets = [0, 0, 16], sizes = [2, 8, 8], strides = [1, 1, 1]} : vector<2x8x32xbf16> to vector<2x8x8xbf16>
    %200 = vector.extract_strided_slice %150 {offsets = [0, 0, 16], sizes = [2, 8, 8], strides = [1, 1, 1]} : vector<2x8x32xbf16> to vector<2x8x8xbf16>
    %201 = vector.extract_strided_slice %152 {offsets = [0, 0, 16], sizes = [2, 8, 8], strides = [1, 1, 1]} : vector<2x8x32xbf16> to vector<2x8x8xbf16>
    "tpu.trace_start"() <{level = 10 : i32, message = "bqd,bkd->bqk"}> : () -> ()
    %cst_85 = arith.constant dense<0.000000e+00> : vector<2x8x8xf32>
    %202 = tpu.matmul %199, %200, %cst_85 {dimension_numbers = #tpu.dot_dimension_numbers<[2], [2], [1], [1], [0, 0, 0, 1, 1, 1], [0], [0]>} : vector<2x8x8xbf16>, vector<2x8x8xbf16>, vector<2x8x8xf32> -> vector<2x8x8xf32>
    "tpu.trace_stop"() : () -> ()
    %cst_86 = arith.constant -1.000000e+10 : f32
    %203 = vector.broadcast %cst_86 : f32 to vector<2x1x8xf32>
    %204 = arith.mulf %146, %203 : vector<2x1x8xf32>
    %205 = vector.broadcast %204 : vector<2x1x8xf32> to vector<2x8x8xf32>
    %206 = arith.addf %202, %205 : vector<2x8x8xf32>
    %cst_87 = arith.constant dense<0xFF800000> : vector<2x8xf32>
    %207 = vector.multi_reduction <maximumf>, %206, %cst_87 [2] : vector<2x8x8xf32> to vector<2x8xf32>
    %208 = vector.shape_cast %207 : vector<2x8xf32> to vector<2x8x1xf32>
    %209 = vector.broadcast %208 : vector<2x8x1xf32> to vector<2x8x8xf32>
    %210 = arith.subf %206, %209 : vector<2x8x8xf32>
    %211 = math.exp %210 : vector<2x8x8xf32>
    %cst_88 = arith.constant dense<0.000000e+00> : vector<2x8xf32>
    %212 = vector.multi_reduction <add>, %211, %cst_88 [2] : vector<2x8x8xf32> to vector<2x8xf32>
    %213 = vector.shape_cast %212 : vector<2x8xf32> to vector<2x8x1xf32>
    %214 = tpu.reciprocal %213 {approx = true} : vector<2x8x1xf32> -> vector<2x8x1xf32>
    %215 = vector.broadcast %214 : vector<2x8x1xf32> to vector<2x8x8xf32>
    %216 = arith.mulf %211, %215 : vector<2x8x8xf32>
    %c2_89 = arith.constant 2 : index
    %c0_90 = arith.constant 0 : index
    %c0_91 = arith.constant 0 : index
    %c0_92 = arith.constant 0 : index
    %217 = vector.load %arg26[%c2_89, %c0_90, %c0_91, %c0_92] : memref<4x2x8x8xf32, #tpu.memory_space<vmem>>, vector<1x2x8x8xf32>
    %218 = vector.shape_cast %217 : vector<1x2x8x8xf32> to vector<2x8x8xf32>
    %219 = vector.shape_cast %216 : vector<2x8x8xf32> to vector<1x2x8x8xf32>
    tpu.vector_store %arg26[%c2_89, %c0_90, %c0_91, %c0_92], %219 {strides = array<i32>} : memref<4x2x8x8xf32, #tpu.memory_space<vmem>>, vector<1x2x8x8xf32>,
    %220 = arith.truncf %216 : vector<2x8x8xf32> to vector<2x8x8xbf16>
    "tpu.trace_start"() <{level = 10 : i32, message = "bqk,bkd->bqd"}> : () -> ()
    %cst_93 = arith.constant dense<0.000000e+00> : vector<2x8x8xf32>
    %221 = tpu.matmul %220, %201, %cst_93 {dimension_numbers = #tpu.dot_dimension_numbers<[2], [1], [1], [2], [0, 0, 0, 1, 1, 2], [0], [0]>} : vector<2x8x8xbf16>, vector<2x8x8xbf16>, vector<2x8x8xf32> -> vector<2x8x8xf32>
    "tpu.trace_stop"() : () -> ()
    %222 = vector.extract_strided_slice %148 {offsets = [0, 0, 24], sizes = [2, 8, 8], strides = [1, 1, 1]} : vector<2x8x32xbf16> to vector<2x8x8xbf16>
    %223 = vector.extract_strided_slice %150 {offsets = [0, 0, 24], sizes = [2, 8, 8], strides = [1, 1, 1]} : vector<2x8x32xbf16> to vector<2x8x8xbf16>
    %224 = vector.extract_strided_slice %152 {offsets = [0, 0, 24], sizes = [2, 8, 8], strides = [1, 1, 1]} : vector<2x8x32xbf16> to vector<2x8x8xbf16>
    "tpu.trace_start"() <{level = 10 : i32, message = "bqd,bkd->bqk"}> : () -> ()
    %cst_94 = arith.constant dense<0.000000e+00> : vector<2x8x8xf32>
    %225 = tpu.matmul %222, %223, %cst_94 {dimension_numbers = #tpu.dot_dimension_numbers<[2], [2], [1], [1], [0, 0, 0, 1, 1, 1], [0], [0]>} : vector<2x8x8xbf16>, vector<2x8x8xbf16>, vector<2x8x8xf32> -> vector<2x8x8xf32>
    "tpu.trace_stop"() : () -> ()
    %cst_95 = arith.constant -1.000000e+10 : f32
    %226 = vector.broadcast %cst_95 : f32 to vector<2x1x8xf32>
    %227 = arith.mulf %146, %226 : vector<2x1x8xf32>
    %228 = vector.broadcast %227 : vector<2x1x8xf32> to vector<2x8x8xf32>
    %229 = arith.addf %225, %228 : vector<2x8x8xf32>
    %cst_96 = arith.constant dense<0xFF800000> : vector<2x8xf32>
    %230 = vector.multi_reduction <maximumf>, %229, %cst_96 [2] : vector<2x8x8xf32> to vector<2x8xf32>
    %231 = vector.shape_cast %230 : vector<2x8xf32> to vector<2x8x1xf32>
    %232 = vector.broadcast %231 : vector<2x8x1xf32> to vector<2x8x8xf32>
    %233 = arith.subf %229, %232 : vector<2x8x8xf32>
    %234 = math.exp %233 : vector<2x8x8xf32>
    %cst_97 = arith.constant dense<0.000000e+00> : vector<2x8xf32>
    %235 = vector.multi_reduction <add>, %234, %cst_97 [2] : vector<2x8x8xf32> to vector<2x8xf32>
    %236 = vector.shape_cast %235 : vector<2x8xf32> to vector<2x8x1xf32>
    %237 = tpu.reciprocal %236 {approx = true} : vector<2x8x1xf32> -> vector<2x8x1xf32>
    %238 = vector.broadcast %237 : vector<2x8x1xf32> to vector<2x8x8xf32>
    %239 = arith.mulf %234, %238 : vector<2x8x8xf32>
    %c3_98 = arith.constant 3 : index
    %c0_99 = arith.constant 0 : index
    %c0_100 = arith.constant 0 : index
    %c0_101 = arith.constant 0 : index
    %240 = vector.load %arg26[%c3_98, %c0_99, %c0_100, %c0_101] : memref<4x2x8x8xf32, #tpu.memory_space<vmem>>, vector<1x2x8x8xf32>
    %241 = vector.shape_cast %240 : vector<1x2x8x8xf32> to vector<2x8x8xf32>
    %242 = vector.shape_cast %239 : vector<2x8x8xf32> to vector<1x2x8x8xf32>
    tpu.vector_store %arg26[%c3_98, %c0_99, %c0_100, %c0_101], %242 {strides = array<i32>} : memref<4x2x8x8xf32, #tpu.memory_space<vmem>>, vector<1x2x8x8xf32>,
    %243 = arith.truncf %239 : vector<2x8x8xf32> to vector<2x8x8xbf16>
    "tpu.trace_start"() <{level = 10 : i32, message = "bqk,bkd->bqd"}> : () -> ()
    %cst_102 = arith.constant dense<0.000000e+00> : vector<2x8x8xf32>
    %244 = tpu.matmul %243, %224, %cst_102 {dimension_numbers = #tpu.dot_dimension_numbers<[2], [1], [1], [2], [0, 0, 0, 1, 1, 2], [0], [0]>} : vector<2x8x8xbf16>, vector<2x8x8xbf16>, vector<2x8x8xf32> -> vector<2x8x8xf32>
    "tpu.trace_stop"() : () -> ()
    %245 = tpu.concatenate %175, %198, %221, %244 in 2 : vector<2x8x8xf32>, vector<2x8x8xf32>, vector<2x8x8xf32>, vector<2x8x8xf32> -> vector<2x8x32xf32>
    %246 = vector.shape_cast %245 : vector<2x8x32xf32> to vector<16x32xf32>
    %247 = arith.truncf %246 : vector<16x32xf32> to vector<16x32xbf16>
    %c0_103 = arith.constant 0 : index
    %c0_104 = arith.constant 0 : index
    %248 = vector.load %arg12[%c0_103, %c0_104] : memref<32x32xbf16, #tpu.memory_space<vmem>>, vector<32x32xbf16>
    %cst_105 = arith.constant dense<0.000000e+00> : vector<16x32xf32>
    %249 = tpu.matmul %247, %248, %cst_105 {dimension_numbers = #tpu.dot_dimension_numbers<[1], [0], [0], [1], [0, 0, 1, 1], [], []>} : vector<16x32xbf16>, vector<32x32xbf16>, vector<16x32xf32> -> vector<16x32xf32>
    %c0_106 = arith.constant 0 : index
    %c0_107 = arith.constant 0 : index
    %250 = vector.load %arg13[%c0_106, %c0_107] : memref<1x32xf32, #tpu.memory_space<vmem>>, vector<1x32xf32>
    %251 = vector.broadcast %250 : vector<1x32xf32> to vector<16x32xf32>
    %252 = arith.addf %249, %251 : vector<16x32xf32>
    %253 = arith.addf %252, %129 : vector<16x32xf32>
    %cst_108 = arith.constant dense<0.000000e+00> : vector<16xf32>
    %254 = vector.multi_reduction <add>, %253, %cst_108 [1] : vector<16x32xf32> to vector<16xf32>
    %255 = vector.shape_cast %254 : vector<16xf32> to vector<16x1xf32>
    %cst_109 = arith.constant 3.200000e+01 : f32
    %256 = vector.broadcast %cst_109 : f32 to vector<16x1xf32>
    %257 = arith.divf %255, %256 : vector<16x1xf32>
    %258 = vector.broadcast %257 : vector<16x1xf32> to vector<16x32xf32>
    %259 = arith.subf %253, %258 : vector<16x32xf32>
    %260 = arith.mulf %259, %259 : vector<16x32xf32>
    %cst_110 = arith.constant dense<0.000000e+00> : vector<16xf32>
    %261 = vector.multi_reduction <add>, %260, %cst_110 [1] : vector<16x32xf32> to vector<16xf32>
    %262 = vector.shape_cast %261 : vector<16xf32> to vector<16x1xf32>
    %cst_111 = arith.constant 3.200000e+01 : f32
    %263 = vector.broadcast %cst_111 : f32 to vector<16x1xf32>
    %264 = arith.divf %262, %263 : vector<16x1xf32>
    %265 = vector.broadcast %257 : vector<16x1xf32> to vector<16x32xf32>
    %266 = arith.subf %253, %265 : vector<16x32xf32>
    %cst_112 = arith.constant 9.99999997E-7 : f32
    %267 = vector.broadcast %cst_112 : f32 to vector<16x1xf32>
    %268 = arith.addf %264, %267 : vector<16x1xf32>
    %269 = math.rsqrt %268 : vector<16x1xf32>
    %270 = vector.broadcast %269 : vector<16x1xf32> to vector<16x32xf32>
    %271 = arith.mulf %266, %270 : vector<16x32xf32>
    %c0_113 = arith.constant 0 : index
    %c0_114 = arith.constant 0 : index
    %272 = vector.load %arg20[%c0_113, %c0_114] : memref<1x32xf32, #tpu.memory_space<vmem>>, vector<1x32xf32>
    %273 = vector.broadcast %272 : vector<1x32xf32> to vector<16x32xf32>
    %274 = arith.mulf %271, %273 : vector<16x32xf32>
    %c0_115 = arith.constant 0 : index
    %c0_116 = arith.constant 0 : index
    %275 = vector.load %arg21[%c0_115, %c0_116] : memref<1x32xf32, #tpu.memory_space<vmem>>, vector<1x32xf32>
    %276 = vector.broadcast %275 : vector<1x32xf32> to vector<16x32xf32>
    %277 = arith.addf %274, %276 : vector<16x32xf32>
    %278 = arith.truncf %277 : vector<16x32xf32> to vector<16x32xbf16>
    %c0_117 = arith.constant 0 : index
    %c0_118 = arith.constant 0 : index
    %279 = vector.load %arg14[%c0_117, %c0_118] : memref<32x64xbf16, #tpu.memory_space<vmem>>, vector<32x64xbf16>
    %cst_119 = arith.constant dense<0.000000e+00> : vector<16x64xf32>
    %280 = tpu.matmul %278, %279, %cst_119 {dimension_numbers = #tpu.dot_dimension_numbers<[1], [0], [0], [1], [0, 0, 1, 1], [], []>} : vector<16x32xbf16>, vector<32x64xbf16>, vector<16x64xf32> -> vector<16x64xf32>
    %c0_120 = arith.constant 0 : index
    %c0_121 = arith.constant 0 : index
    %281 = vector.load %arg15[%c0_120, %c0_121] : memref<1x64xf32, #tpu.memory_space<vmem>>, vector<1x64xf32>
    %282 = vector.broadcast %281 : vector<1x64xf32> to vector<16x64xf32>
    %283 = arith.addf %280, %282 : vector<16x64xf32>
    %cst_122 = arith.constant 0.000000e+00 : f32
    %284 = vector.broadcast %cst_122 : f32 to vector<16x64xf32>
    %285 = arith.maximumf %283, %284 : vector<16x64xf32>
    %286 = arith.truncf %285 : vector<16x64xf32> to vector<16x64xbf16>
    %c0_123 = arith.constant 0 : index
    %c0_124 = arith.constant 0 : index
    %287 = vector.load %arg16[%c0_123, %c0_124] : memref<64x32xbf16, #tpu.memory_space<vmem>>, vector<64x32xbf16>
    %cst_125 = arith.constant dense<0.000000e+00> : vector<16x32xf32>
    %288 = tpu.matmul %286, %287, %cst_125 {dimension_numbers = #tpu.dot_dimension_numbers<[1], [0], [0], [1], [0, 0, 1, 1], [], []>} : vector<16x64xbf16>, vector<64x32xbf16>, vector<16x32xf32> -> vector<16x32xf32>
    %c0_126 = arith.constant 0 : index
    %c0_127 = arith.constant 0 : index
    %289 = vector.load %arg17[%c0_126, %c0_127] : memref<1x32xf32, #tpu.memory_space<vmem>>, vector<1x32xf32>
    %290 = vector.broadcast %289 : vector<1x32xf32> to vector<16x32xf32>
    %291 = arith.addf %288, %290 : vector<16x32xf32>
    %292 = arith.addf %291, %277 : vector<16x32xf32>
    %cst_128 = arith.constant dense<0.000000e+00> : vector<16xf32>
    %293 = vector.multi_reduction <add>, %292, %cst_128 [1] : vector<16x32xf32> to vector<16xf32>
    %294 = vector.shape_cast %293 : vector<16xf32> to vector<16x1xf32>
    %cst_129 = arith.constant 3.200000e+01 : f32
    %295 = vector.broadcast %cst_129 : f32 to vector<16x1xf32>
    %296 = arith.divf %294, %295 : vector<16x1xf32>
    %297 = vector.broadcast %296 : vector<16x1xf32> to vector<16x32xf32>
    %298 = arith.subf %292, %297 : vector<16x32xf32>
    %299 = arith.mulf %298, %298 : vector<16x32xf32>
    %cst_130 = arith.constant dense<0.000000e+00> : vector<16xf32>
    %300 = vector.multi_reduction <add>, %299, %cst_130 [1] : vector<16x32xf32> to vector<16xf32>
    %301 = vector.shape_cast %300 : vector<16xf32> to vector<16x1xf32>
    %cst_131 = arith.constant 3.200000e+01 : f32
    %302 = vector.broadcast %cst_131 : f32 to vector<16x1xf32>
    %303 = arith.divf %301, %302 : vector<16x1xf32>
    %304 = vector.broadcast %296 : vector<16x1xf32> to vector<16x32xf32>
    %305 = arith.subf %292, %304 : vector<16x32xf32>
    %cst_132 = arith.constant 9.99999997E-7 : f32
    %306 = vector.broadcast %cst_132 : f32 to vector<16x1xf32>
    %307 = arith.addf %303, %306 : vector<16x1xf32>
    %308 = math.rsqrt %307 : vector<16x1xf32>
    %309 = vector.broadcast %308 : vector<16x1xf32> to vector<16x32xf32>
    %310 = arith.mulf %305, %309 : vector<16x32xf32>
    %c0_133 = arith.constant 0 : index
    %c0_134 = arith.constant 0 : index
    %311 = vector.load %arg22[%c0_133, %c0_134] : memref<1x32xf32, #tpu.memory_space<vmem>>, vector<1x32xf32>
    %312 = vector.broadcast %311 : vector<1x32xf32> to vector<16x32xf32>
    %313 = arith.mulf %310, %312 : vector<16x32xf32>
    %c0_135 = arith.constant 0 : index
    %c0_136 = arith.constant 0 : index
    %314 = vector.load %arg23[%c0_135, %c0_136] : memref<1x32xf32, #tpu.memory_space<vmem>>, vector<1x32xf32>
    %315 = vector.broadcast %314 : vector<1x32xf32> to vector<16x32xf32>
    %316 = arith.addf %313, %315 : vector<16x32xf32>
    %317 = vector.shape_cast %316 : vector<16x32xf32> to vector<2x8x32xf32>
    %c0_137 = arith.constant 0 : index
    %c0_138 = arith.constant 0 : index
    %c0_139 = arith.constant 0 : index
    %318 = vector.load %arg24[%c0_137, %c0_138, %c0_139] : memref<2x8x32xf32, #tpu.memory_space<vmem>>, vector<2x8x32xf32>
    tpu.vector_store %arg24[%c0_137, %c0_138, %c0_139], %317 {strides = array<i32>} : memref<2x8x32xf32, #tpu.memory_space<vmem>>, vector<2x8x32xf32>,
    return
  }
  func.func @transform_0(%arg0: i32) -> (i32, i32, i32) {
    %c0_i32 = arith.constant 0 : i32
    %c0_i32_0 = arith.constant 0 : i32
    %c0_i32_1 = arith.constant 0 : i32
    return %arg0, %c0_i32, %c0_i32_0 : i32, i32, i32
  }
  func.func @transform_1(%arg0: i32) -> (i32, i32, i32) {
    %c0_i32 = arith.constant 0 : i32
    %c0_i32_0 = arith.constant 0 : i32
    %c0_i32_1 = arith.constant 0 : i32
    return %arg0, %c0_i32, %c0_i32_0 : i32, i32, i32
  }
  func.func @transform_2(%arg0: i32) -> (i32, i32, i32) {
    %c0_i32 = arith.constant 0 : i32
    %c0_i32_0 = arith.constant 0 : i32
    %c0_i32_1 = arith.constant 0 : i32
    return %arg0, %c0_i32, %c0_i32_0 : i32, i32, i32
  }
  func.func @transform_3(%arg0: i32) -> (i32, i32) {
    %c0_i32 = arith.constant 0 : i32
    %c0_i32_0 = arith.constant 0 : i32
    %c0_i32_1 = arith.constant 0 : i32
    return %c0_i32, %c0_i32_0 : i32, i32
  }
  func.func @transform_4(%arg0: i32) -> (i32, i32) {
    %c0_i32 = arith.constant 0 : i32
    %c0_i32_0 = arith.constant 0 : i32
    %c0_i32_1 = arith.constant 0 : i32
    return %c0_i32, %c0_i32_0 : i32, i32
  }
  func.func @transform_5(%arg0: i32) -> (i32, i32) {
    %c0_i32 = arith.constant 0 : i32
    %c0_i32_0 = arith.constant 0 : i32
    %c0_i32_1 = arith.constant 0 : i32
    return %c0_i32, %c0_i32_0 : i32, i32
  }
  func.func @transform_6(%arg0: i32) -> (i32, i32) {
    %c0_i32 = arith.constant 0 : i32
    %c0_i32_0 = arith.constant 0 : i32
    %c0_i32_1 = arith.constant 0 : i32
    return %c0_i32, %c0_i32_0 : i32, i32
  }
  func.func @transform_7(%arg0: i32) -> (i32, i32) {
    %c0_i32 = arith.constant 0 : i32
    %c0_i32_0 = arith.constant 0 : i32
    %c0_i32_1 = arith.constant 0 : i32
    return %c0_i32, %c0_i32_0 : i32, i32
  }
  func.func @transform_8(%arg0: i32) -> (i32, i32) {
    %c0_i32 = arith.constant 0 : i32
    %c0_i32_0 = arith.constant 0 : i32
    %c0_i32_1 = arith.constant 0 : i32
    return %c0_i32, %c0_i32_0 : i32, i32
  }
  func.func @transform_9(%arg0: i32) -> (i32, i32) {
    %c0_i32 = arith.constant 0 : i32
    %c0_i32_0 = arith.constant 0 : i32
    %c0_i32_1 = arith.constant 0 : i32
    return %c0_i32, %c0_i32_0 : i32, i32
  }
  func.func @transform_10(%arg0: i32) -> (i32, i32) {
    %c0_i32 = arith.constant 0 : i32
    %c0_i32_0 = arith.constant 0 : i32
    %c0_i32_1 = arith.constant 0 : i32
    return %c0_i32, %c0_i32_0 : i32, i32
  }
  func.func @transform_11(%arg0: i32) -> (i32, i32) {
    %c0_i32 = arith.constant 0 : i32
    %c0_i32_0 = arith.constant 0 : i32
    %c0_i32_1 = arith.constant 0 : i32
    return %c0_i32, %c0_i32_0 : i32, i32
  }
  func.func @transform_12(%arg0: i32) -> (i32, i32) {
    %c0_i32 = arith.constant 0 : i32
    %c0_i32_0 = arith.constant 0 : i32
    %c0_i32_1 = arith.constant 0 : i32
    return %c0_i32, %c0_i32_0 : i32, i32
  }
  func.func @transform_13(%arg0: i32) -> (i32, i32) {
    %c0_i32 = arith.constant 0 : i32
    %c0_i32_0 = arith.constant 0 : i32
    %c0_i32_1 = arith.constant 0 : i32
    return %c0_i32, %c0_i32_0 : i32, i32
  }
  func.func @transform_14(%arg0: i32) -> (i32, i32) {
    %c0_i32 = arith.constant 0 : i32
    %c0_i32_0 = arith.constant 0 : i32
    %c0_i32_1 = arith.constant 0 : i32
    return %c0_i32, %c0_i32_0 : i32, i32
  }
  func.func @transform_15(%arg0: i32) -> (i32, i32) {
    %c0_i32 = arith.constant 0 : i32
    %c0_i32_0 = arith.constant 0 : i32
    %c0_i32_1 = arith.constant 0 : i32
    return %c0_i32, %c0_i32_0 : i32, i32
  }
  func.func @transform_16(%arg0: i32) -> (i32, i32) {
    %c0_i32 = arith.constant 0 : i32
    %c0_i32_0 = arith.constant 0 : i32
    %c0_i32_1 = arith.constant 0 : i32
    return %c0_i32, %c0_i32_0 : i32, i32
  }
  func.func @transform_17(%arg0: i32) -> (i32, i32) {
    %c0_i32 = arith.constant 0 : i32
    %c0_i32_0 = arith.constant 0 : i32
    %c0_i32_1 = arith.constant 0 : i32
    return %c0_i32, %c0_i32_0 : i32, i32
  }
  func.func @transform_18(%arg0: i32) -> (i32, i32) {
    %c0_i32 = arith.constant 0 : i32
    %c0_i32_0 = arith.constant 0 : i32
    %c0_i32_1 = arith.constant 0 : i32
    return %c0_i32, %c0_i32_0 : i32, i32
  }
  func.func @transform_19(%arg0: i32) -> (i32, i32) {
    %c0_i32 = arith.constant 0 : i32
    %c0_i32_0 = arith.constant 0 : i32
    %c0_i32_1 = arith.constant 0 : i32
    return %c0_i32, %c0_i32_0 : i32, i32
  }
  func.func @transform_20(%arg0: i32) -> (i32, i32) {
    %c0_i32 = arith.constant 0 : i32
    %c0_i32_0 = arith.constant 0 : i32
    %c0_i32_1 = arith.constant 0 : i32
    return %c0_i32, %c0_i32_0 : i32, i32
  }
  func.func @transform_21(%arg0: i32) -> (i32, i32) {
    %c0_i32 = arith.constant 0 : i32
    %c0_i32_0 = arith.constant 0 : i32
    %c0_i32_1 = arith.constant 0 : i32
    return %c0_i32, %c0_i32_0 : i32, i32
  }
  func.func @transform_22(%arg0: i32) -> (i32, i32) {
    %c0_i32 = arith.constant 0 : i32
    %c0_i32_0 = arith.constant 0 : i32
    %c0_i32_1 = arith.constant 0 : i32
    return %c0_i32, %c0_i32_0 : i32, i32
  }
  func.func @transform_23(%arg0: i32) -> (i32, i32, i32) {
    %c0_i32 = arith.constant 0 : i32
    %c0_i32_0 = arith.constant 0 : i32
    %c0_i32_1 = arith.constant 0 : i32
    return %arg0, %c0_i32, %c0_i32_0 : i32, i32, i32
  }
  func.func @transform_24(%arg0: i32) -> (i32, i32, i32, i32) {
    %c0_i32 = arith.constant 0 : i32
    %c0_i32_0 = arith.constant 0 : i32
    %c0_i32_1 = arith.constant 0 : i32
    %c0_i32_2 = arith.constant 0 : i32
    return %c0_i32, %arg0, %c0_i32_0, %c0_i32_1 : i32, i32, i32, i32
  }
  func.func @transform_25(%arg0: i32) -> (i32, i32, i32, i32) {
    %c0_i32 = arith.constant 0 : i32
    %c0_i32_0 = arith.constant 0 : i32
    %c0_i32_1 = arith.constant 0 : i32
    %c0_i32_2 = arith.constant 0 : i32
    return %c0_i32, %arg0, %c0_i32_0, %c0_i32_1 : i32, i32, i32, i32
  }
}

</mosaic_0001>

<llo_original>
// kernel: tpu_custom_call.1
$region0: #{tpu_custom_call.1}
  #allocation0 [shape = 'u32[]', space=smem, size = 0x4, offset = 0x4, fixed_abs, tag = 'smem constant byte address 0x4 - core index']
  #allocation1 [shape = 'u32[144,128]{1,0:T(1,128)}', space=vmem, size = 0x12000, scoped, tag = 'internal scratch']
  %s0 = inlined_call_operand.vmem [shape: f32[2,8,32], index: 0, kind: input, shape index: {}]
  %s1 = inlined_call_operand.vmem [shape: f32[2,8,32], index: 1, kind: input, shape index: {}]
  %s2 = inlined_call_operand.hbm [shape: f32[2,1,8], index: 2, kind: input, shape index: {}]
  %s3 = inlined_call_operand.vmem [shape: bf16[32,96], index: 3, kind: input, shape index: {}]
  %s4 = inlined_call_operand.hbm [shape: f32[1,96], index: 4, kind: input, shape index: {}]
  %s5 = inlined_call_operand.hbm [shape: bf16[32,32], index: 5, kind: input, shape index: {}]
  %s6 = inlined_call_operand.hbm [shape: f32[1,32], index: 6, kind: input, shape index: {}]
  %s7 = inlined_call_operand.hbm [shape: bf16[32,32], index: 7, kind: input, shape index: {}]
  %s8 = inlined_call_operand.hbm [shape: f32[1,32], index: 8, kind: input, shape index: {}]
  %s9 = inlined_call_operand.vmem [shape: bf16[32,64], index: 9, kind: input, shape index: {}]
  %s10 = inlined_call_operand.vmem [shape: f32[1,64], index: 10, kind: input, shape index: {}]
  %s11 = inlined_call_operand.hbm [shape: bf16[32,32], index: 11, kind: input, shape index: {}]
  %s12 = inlined_call_operand.vmem [shape: f32[1,32], index: 12, kind: input, shape index: {}]
  %s13 = inlined_call_operand.hbm [shape: bf16[32,64], index: 13, kind: input, shape index: {}]
  %s14 = inlined_call_operand.vmem [shape: f32[1,64], index: 14, kind: input, shape index: {}]
  %s15 = inlined_call_operand.vmem [shape: bf16[64,32], index: 15, kind: input, shape index: {}]
  %s16 = inlined_call_operand.vmem [shape: f32[1,32], index: 16, kind: input, shape index: {}]
  %s17 = inlined_call_operand.vmem [shape: f32[1,32], index: 17, kind: input, shape index: {}]
  %s18 = inlined_call_operand.vmem [shape: f32[1,32], index: 18, kind: input, shape index: {}]
  %s19 = inlined_call_operand.vmem [shape: f32[1,32], index: 19, kind: input, shape index: {}]
  %s20 = inlined_call_operand.vmem [shape: f32[1,32], index: 20, kind: input, shape index: {}]
  %s21 = inlined_call_operand.vmem [shape: f32[1,32], index: 21, kind: input, shape index: {}]
  %s22 = inlined_call_operand.vmem [shape: f32[1,32], index: 22, kind: input, shape index: {}]
  %s23 = inlined_call_operand.hbm [shape: f32[2,8,32], index: 23, kind: output, shape index: {0}]
  %s24 = inlined_call_operand.hbm [shape: f32[4,2,8,8], index: 24, kind: output, shape index: {1}]
  %s25 = inlined_call_operand.hbm [shape: f32[4,2,8,8], index: 25, kind: output, shape index: {2}]
  %26 = xla_tuple %s23, %s24, %s25
  %s27 = sld [smem:[#allocation0]]
  $region150: #{tpu_custom_call.1} parent=0
    _
  %s29 = ssub.s32 1, %s27
  %s30 = scalar_select 0, %s29, %s27
  $region1: #{tpu_custom_call.1} parent=0
    #allocation2 [shape = 'u8[1024]{0}', space=vmem, size = 0x400, scoped, tag = 'input window, operand 2, single buffered']
    #allocation3 [shape = 's32[1]{0}', space=sflag, size = 0x4, scoped, tag = 'scoped memory for tpu_custom_call.1']
    #allocation4 [shape = 's32[1]{0}', space=sflag, size = 0x4, scoped, tag = 'scoped memory for tpu_custom_call.1']
    #allocation5 [shape = 'u8[512]{0}', space=vmem, size = 0x400, scoped, tag = 'input window, operand 4, single buffered']
    #allocation6 [shape = 's32[1]{0}', space=sflag, size = 0x4, scoped, tag = 'scoped memory for tpu_custom_call.1']
    #allocation7 [shape = 'u8[8192]{0}', space=vmem, size = 0x2000, scoped, tag = 'input window, operand 5, single buffered']
    #allocation8 [shape = 'u8[512]{0}', space=vmem, size = 0x400, scoped, tag = 'input window, operand 6, single buffered']
    #allocation9 [shape = 's32[1]{0}', space=sflag, size = 0x4, scoped, tag = 'scoped memory for tpu_custom_call.1']
    #allocation10 [shape = 'u8[8192]{0}', space=vmem, size = 0x2000, scoped, tag = 'input window, operand 7, single buffered']
    #allocation11 [shape = 'u8[512]{0}', space=vmem, size = 0x400, scoped, tag = 'input window, operand 8, single buffered']
    #allocation12 [shape = 's32[1]{0}', space=sflag, size = 0x4, scoped, tag = 'scoped memory for tpu_custom_call.1']
    #allocation13 [shape = 'u8[8192]{0}', space=vmem, size = 0x2000, scoped, tag = 'input window, operand 11, single buffered']
    #allocation14 [shape = 'u8[8192]{0}', space=vmem, size = 0x2000, scoped, tag = 'input window, operand 13, single buffered']
    #allocation15 [shape = 's32[1]{0}', space=sflag, size = 0x4, scoped, tag = 'scoped memory for tpu_custom_call.1']
    #allocation16 [shape = 'u8[8192]{0}', space=vmem, size = 0x2000, scoped, tag = 'output window, operand 0, single buffered']
    #allocation17 [shape = 'u8[32768]{0}', space=vmem, size = 0x8000, scoped, tag = 'output window, operand 1, single buffered']
    #allocation18 [shape = 's32[1]{0}', space=sflag, size = 0x4, scoped, tag = 'scoped memory for tpu_custom_call.1']
    #allocation19 [shape = 'u8[32768]{0}', space=vmem, size = 0x8000, scoped, tag = 'output window, operand 2, single buffered']
    %31 = vsyncpa [#allocation3], 0
    %32 = vsyncpa [#allocation6], 0
    %33 = vsyncpa [#allocation9], 0
    %34 = vsyncpa [#allocation12], 0
    %35 = vsyncpa [#allocation15], 0
    %36 = vsyncpa [#allocation4], 0
    %37 = vsyncpa [#allocation18], 0
    // Predicated region
    $region2: #{tpu_custom_call.1} parent=1 // pred_check
      _
    $region3: #{tpu_custom_call.1} parent=1 // pred_check_branch
      %39 = sbr.rel (0) target = $region5
    $region4: #{tpu_custom_call.1} parent=1 // pred_region
      _
    $region5: #{tpu_custom_call.1} parent=1 // pred_fallthru
      _
    // Predicated region
    $region6: #{tpu_custom_call.1} parent=1 // pred_check
      _
    $region7: #{tpu_custom_call.1} parent=1 // pred_check_branch
      %41 = sbr.rel (0) target = $region9
    $region8: #{tpu_custom_call.1} parent=1 // pred_region
      _
    $region9: #{tpu_custom_call.1} parent=1 // pred_fallthru
      _
    // Predicated region
    $region10: #{tpu_custom_call.1} parent=1 // pred_check
      _
    $region11: #{tpu_custom_call.1} parent=1 // pred_check_branch
      %43 = sbr.rel (0) target = $region13
    $region12: #{tpu_custom_call.1} parent=1 // pred_region
      %s45 = ssub.s32 32, 32
      %46 = vsyncadd [#allocation3], %s45
      %s47 = sshll.u32 [#allocation2], 4
      %s48 = int_to_ptr.vmem [resolvable:$true] %s47
      %53 = dma.hbm_to_vmem [thread:$0]  %s2, 32, %s48, [#allocation3], 16, 16, 1
    $region13: #{tpu_custom_call.1} parent=1 // pred_fallthru
      _
    // Predicated region
    $region14: #{tpu_custom_call.1} parent=1 // pred_check
      _
    $region15: #{tpu_custom_call.1} parent=1 // pred_check_branch
      %55 = sbr.rel (0) target = $region17
    $region16: #{tpu_custom_call.1} parent=1 // pred_region
      _
    $region17: #{tpu_custom_call.1} parent=1 // pred_fallthru
      _
    // Predicated region
    $region18: #{tpu_custom_call.1} parent=1 // pred_check
      _
    $region19: #{tpu_custom_call.1} parent=1 // pred_check_branch
      %57 = sbr.rel (0) target = $region21
    $region20: #{tpu_custom_call.1} parent=1 // pred_region
      %s59 = ssub.s32 16, 16
      %60 = vsyncadd [#allocation6], %s59
      %s62 = sshll.u32 [#allocation5], 4
      %s63 = int_to_ptr.vmem [resolvable:$true] %s62
      %65 = dma.hbm_to_vmem [thread:$0]  %s4, 16, %s63, [#allocation6]
    $region21: #{tpu_custom_call.1} parent=1 // pred_fallthru
      _
    // Predicated region
    $region22: #{tpu_custom_call.1} parent=1 // pred_check
      _
    $region23: #{tpu_custom_call.1} parent=1 // pred_check_branch
      %67 = sbr.rel (0) target = $region25
    $region24: #{tpu_custom_call.1} parent=1 // pred_region
      %s69 = ssub.s32 256, 256
      %70 = vsyncadd [#allocation6], %s69
      %s71 = sshll.u32 [#allocation7], 4
      %s72 = int_to_ptr.vmem [resolvable:$true] %s71
      %77 = dma.hbm_to_vmem [thread:$0]  %s5, 256, %s72, [#allocation6], 64, 64, 4
    $region25: #{tpu_custom_call.1} parent=1 // pred_fallthru
      _
    // Predicated region
    $region26: #{tpu_custom_call.1} parent=1 // pred_check
      _
    $region27: #{tpu_custom_call.1} parent=1 // pred_check_branch
      %79 = sbr.rel (0) target = $region29
    $region28: #{tpu_custom_call.1} parent=1 // pred_region
      %s81 = ssub.s32 16, 16
      %82 = vsyncadd [#allocation9], %s81
      %s84 = sshll.u32 [#allocation8], 4
      %s85 = int_to_ptr.vmem [resolvable:$true] %s84
      %87 = dma.hbm_to_vmem [thread:$0]  %s6, 16, %s85, [#allocation9]
    $region29: #{tpu_custom_call.1} parent=1 // pred_fallthru
      _
    // Predicated region
    $region30: #{tpu_custom_call.1} parent=1 // pred_check
      _
    $region31: #{tpu_custom_call.1} parent=1 // pred_check_branch
      %89 = sbr.rel (0) target = $region33
    $region32: #{tpu_custom_call.1} parent=1 // pred_region
      %s91 = ssub.s32 256, 256
      %92 = vsyncadd [#allocation9], %s91
      %s93 = sshll.u32 [#allocation10], 4
      %s94 = int_to_ptr.vmem [resolvable:$true] %s93
      %99 = dma.hbm_to_vmem [thread:$0]  %s7, 256, %s94, [#allocation9], 64, 64, 4
    $region33: #{tpu_custom_call.1} parent=1 // pred_fallthru
      _
    // Predicated region
    $region34: #{tpu_custom_call.1} parent=1 // pred_check
      _
    $region35: #{tpu_custom_call.1} parent=1 // pred_check_branch
      %101 = sbr.rel (0) target = $region37
    $region36: #{tpu_custom_call.1} parent=1 // pred_region
      %s103 = ssub.s32 16, 16
      %104 = vsyncadd [#allocation12], %s103
      %s106 = sshll.u32 [#allocation11], 4
      %s107 = int_to_ptr.vmem [resolvable:$true] %s106
      %109 = dma.hbm_to_vmem [thread:$0]  %s8, 16, %s107, [#allocation12]
    $region37: #{tpu_custom_call.1} parent=1 // pred_fallthru
      _
    // Predicated region
    $region38: #{tpu_custom_call.1} parent=1 // pred_check
      _
    $region39: #{tpu_custom_call.1} parent=1 // pred_check_branch
      %111 = sbr.rel (0) target = $region41
    $region40: #{tpu_custom_call.1} parent=1 // pred_region
      _
    $region41: #{tpu_custom_call.1} parent=1 // pred_fallthru
      _
    // Predicated region
    $region42: #{tpu_custom_call.1} parent=1 // pred_check
      _
    $region43: #{tpu_custom_call.1} parent=1 // pred_check_branch
      %113 = sbr.rel (0) target = $region45
    $region44: #{tpu_custom_call.1} parent=1 // pred_region
      _
    $region45: #{tpu_custom_call.1} parent=1 // pred_fallthru
      _
    // Predicated region
    $region46: #{tpu_custom_call.1} parent=1 // pred_check
      _
    $region47: #{tpu_custom_call.1} parent=1 // pred_check_branch
      %115 = sbr.rel (0) target = $region49
    $region48: #{tpu_custom_call.1} parent=1 // pred_region
      %s117 = ssub.s32 256, 256
      %118 = vsyncadd [#allocation12], %s117
      %s119 = sshll.u32 [#allocation13], 4
      %s120 = int_to_ptr.vmem [resolvable:$true] %s119
      %125 = dma.hbm_to_vmem [thread:$0]  %s11, 256, %s120, [#allocation12], 64, 64, 4
    $region49: #{tpu_custom_call.1} parent=1 // pred_fallthru
      _
    // Predicated region
    $region50: #{tpu_custom_call.1} parent=1 // pred_check
      _
    $region51: #{tpu_custom_call.1} parent=1 // pred_check_branch
      %127 = sbr.rel (0) target = $region53
    $region52: #{tpu_custom_call.1} parent=1 // pred_region
      _
    $region53: #{tpu_custom_call.1} parent=1 // pred_fallthru
      _
    // Predicated region
    $region54: #{tpu_custom_call.1} parent=1 // pred_check
      _
    $region55: #{tpu_custom_call.1} parent=1 // pred_check_branch
      %129 = sbr.rel (0) target = $region57
    $region56: #{tpu_custom_call.1} parent=1 // pred_region
      %s131 = ssub.s32 256, 256
      %132 = vsyncadd [#allocation15], %s131
      %s133 = sshll.u32 [#allocation14], 4
      %s134 = int_to_ptr.vmem [resolvable:$true] %s133
      %139 = dma.hbm_to_vmem [thread:$0]  %s13, 256, %s134, [#allocation15], 64, 64, 4
    $region57: #{tpu_custom_call.1} parent=1 // pred_fallthru
      _
    // Predicated region
    $region58: #{tpu_custom_call.1} parent=1 // pred_check
      _
    $region59: #{tpu_custom_call.1} parent=1 // pred_check_branch
      %141 = sbr.rel (0) target = $region61
    $region60: #{tpu_custom_call.1} parent=1 // pred_region
      _
    $region61: #{tpu_custom_call.1} parent=1 // pred_fallthru
      _
    // Predicated region
    $region62: #{tpu_custom_call.1} parent=1 // pred_check
      _
    $region63: #{tpu_custom_call.1} parent=1 // pred_check_branch
      %143 = sbr.rel (0) target = $region65
    $region64: #{tpu_custom_call.1} parent=1 // pred_region
      _
    $region65: #{tpu_custom_call.1} parent=1 // pred_fallthru
      _
    // Predicated region
    $region66: #{tpu_custom_call.1} parent=1 // pred_check
      _
    $region67: #{tpu_custom_call.1} parent=1 // pred_check_branch
      %145 = sbr.rel (0) target = $region69
    $region68: #{tpu_custom_call.1} parent=1 // pred_region
      _
    $region69: #{tpu_custom_call.1} parent=1 // pred_fallthru
      _
    // Predicated region
    $region70: #{tpu_custom_call.1} parent=1 // pred_check
      _
    $region71: #{tpu_custom_call.1} parent=1 // pred_check_branch
      %147 = sbr.rel (0) target = $region73
    $region72: #{tpu_custom_call.1} parent=1 // pred_region
      _
    $region73: #{tpu_custom_call.1} parent=1 // pred_fallthru
      _
    // Predicated region
    $region74: #{tpu_custom_call.1} parent=1 // pred_check
      _
    $region75: #{tpu_custom_call.1} parent=1 // pred_check_branch
      %149 = sbr.rel (0) target = $region77
    $region76: #{tpu_custom_call.1} parent=1 // pred_region
      _
    $region77: #{tpu_custom_call.1} parent=1 // pred_fallthru
      _
    // Predicated region
    $region78: #{tpu_custom_call.1} parent=1 // pred_check
      _
    $region79: #{tpu_custom_call.1} parent=1 // pred_check_branch
      %151 = sbr.rel (0) target = $region81
    $region80: #{tpu_custom_call.1} parent=1 // pred_region
      _
    $region81: #{tpu_custom_call.1} parent=1 // pred_fallthru
      _
    // Predicated region
    $region82: #{tpu_custom_call.1} parent=1 // pred_check
      _
    $region83: #{tpu_custom_call.1} parent=1 // pred_check_branch
      %153 = sbr.rel (0) target = $region85
    $region84: #{tpu_custom_call.1} parent=1 // pred_region
      _
    $region85: #{tpu_custom_call.1} parent=1 // pred_fallthru
      _
    // Predicated region
    $region86: #{tpu_custom_call.1} parent=1 // pred_check
      _
    $region87: #{tpu_custom_call.1} parent=1 // pred_check_branch
      %155 = sbr.rel (0) target = $region89
    $region88: #{tpu_custom_call.1} parent=1 // pred_region
      _
    $region89: #{tpu_custom_call.1} parent=1 // pred_fallthru
      _
    // Predicated region
    $region90: #{tpu_custom_call.1} parent=1 // pred_check
      _
    $region91: #{tpu_custom_call.1} parent=1 // pred_check_branch
      %157 = sbr.rel (0) target = $region93
    $region92: #{tpu_custom_call.1} parent=1 // pred_region
      _
    $region93: #{tpu_custom_call.1} parent=1 // pred_fallthru
      _
    // Predicated region
    $region94: #{tpu_custom_call.1} parent=1 // pred_check
      _
    $region95: #{tpu_custom_call.1} parent=1 // pred_check_branch
      %159 = sbr.rel (0) target = $region97
    $region96: #{tpu_custom_call.1} parent=1 // pred_region
      %160 = dma.done [#allocation3], 32
    $region97: #{tpu_custom_call.1} parent=1 // pred_fallthru
      _
    // Predicated region
    $region98: #{tpu_custom_call.1} parent=1 // pred_check
      _
    $region99: #{tpu_custom_call.1} parent=1 // pred_check_branch
      %162 = sbr.rel (0) target = $region101
    $region100: #{tpu_custom_call.1} parent=1 // pred_region
      %163 = dma.done [#allocation6], 16
    $region101: #{tpu_custom_call.1} parent=1 // pred_fallthru
      _
    // Predicated region
    $region102: #{tpu_custom_call.1} parent=1 // pred_check
      _
    $region103: #{tpu_custom_call.1} parent=1 // pred_check_branch
      %165 = sbr.rel (0) target = $region105
    $region104: #{tpu_custom_call.1} parent=1 // pred_region
      %166 = dma.done [#allocation6], 256
    $region105: #{tpu_custom_call.1} parent=1 // pred_fallthru
      _
    // Predicated region
    $region106: #{tpu_custom_call.1} parent=1 // pred_check
      _
    $region107: #{tpu_custom_call.1} parent=1 // pred_check_branch
      %168 = sbr.rel (0) target = $region109
    $region108: #{tpu_custom_call.1} parent=1 // pred_region
      %169 = dma.done [#allocation9], 16
    $region109: #{tpu_custom_call.1} parent=1 // pred_fallthru
      _
    // Predicated region
    $region110: #{tpu_custom_call.1} parent=1 // pred_check
      _
    $region111: #{tpu_custom_call.1} parent=1 // pred_check_branch
      %171 = sbr.rel (0) target = $region113
    $region112: #{tpu_custom_call.1} parent=1 // pred_region
      %172 = dma.done [#allocation9], 256
    $region113: #{tpu_custom_call.1} parent=1 // pred_fallthru
      _
    // Predicated region
    $region114: #{tpu_custom_call.1} parent=1 // pred_check
      _
    $region115: #{tpu_custom_call.1} parent=1 // pred_check_branch
      %174 = sbr.rel (0) target = $region117
    $region116: #{tpu_custom_call.1} parent=1 // pred_region
      %175 = dma.done [#allocation12], 16
    $region117: #{tpu_custom_call.1} parent=1 // pred_fallthru
      _
    // Predicated region
    $region118: #{tpu_custom_call.1} parent=1 // pred_check
      _
    $region119: #{tpu_custom_call.1} parent=1 // pred_check_branch
      %177 = sbr.rel (0) target = $region121
    $region120: #{tpu_custom_call.1} parent=1 // pred_region
      %178 = dma.done [#allocation12], 256
    $region121: #{tpu_custom_call.1} parent=1 // pred_fallthru
      _
    // Predicated region
    $region122: #{tpu_custom_call.1} parent=1 // pred_check
      _
    $region123: #{tpu_custom_call.1} parent=1 // pred_check_branch
      %180 = sbr.rel (0) target = $region125
    $region124: #{tpu_custom_call.1} parent=1 // pred_region
      %181 = dma.done [#allocation15], 256
    $region125: #{tpu_custom_call.1} parent=1 // pred_fallthru
      _
    %v183 = vld [vmem:[%s0] sm:$0xff]
    %v184 = vld [vmem:[%s0 + $0x8] sm:$0xff]
    %v185 = vld [vmem:[%s1] sm:$0xff]
    %v186 = vld [vmem:[%s1 + $0x8] sm:$0xff]
    %v187 = vpack.c.bf16 %v184, %v183
    %v188 = vld [vmem:[%s3] sm:$0xf]
    %v189 = vld [vmem:[%s3 + $0x4] sm:$0xf]
    %v190 = vld [vmem:[%s3 + $0x8] sm:$0xf]
    %v191 = vld [vmem:[%s3 + $0xc] sm:$0xf]
    %v192 = vld [vmem:[#allocation5] sm:$0x1]
    %v194 = vlaneseq
    %v195 = vshrl.u32 %v194, 7
    %v196 = vsub.s32 0, %v195
    %v197 = vrot.slane %v192, %v196
    %v203 = vunpack.c.l.b16 %v188
    %v204 = vunpack.c.l.b16 %v189
    %v205 = vunpack.c.l.b16 %v190
    %v206 = vunpack.c.l.b16 %v191
    %v207 = vpack.c.b16 %v204, %v203
    %v208 = vpack.c.b16 %v206, %v205
    %vm211 = vcmask 261120
    %v213 = vsel %vm211, %v187, 0
    %215 = vmatprep.subr.bf16.mxu0 0
    %216 = vmatpush1.bf16.msra.mxu0 0
    %217 = vmatprep.subr.bf16.mxu0 0
    %218 = vmatpush1.bf16.msra.mxu0 0
    %219 = vmatprep.subr.bf16.mxu0 0
    %220 = vmatpush1.bf16.msra.mxu0 0
    %221 = vmatprep.subr.bf16.mxu0 0
    %222 = vmatpush1.bf16.msra.mxu0 0
    %223 = vmatprep.subr.bf16.mxu0 0
    %224 = vmatpush1.bf16.msra.mxu0 0
    %225 = vmatprep.subr.bf16.mxu0 0
    %226 = vmatpush1.bf16.msra.mxu0 0
    %227 = vmatprep.subr.bf16.mxu0 0
    %228 = vmatpush1.bf16.msra.mxu0 %v208
    %229 = vmatprep.subr.bf16.mxu0 0
    %230 = vmatpush1.bf16.msra.mxu0 %v207
    %231 = vmatprep.subr.bf16.mxu0 0
    %232 = vmatpush2.bf16.msra.mxu0 0
    %233 = vmatprep.subr.bf16.mxu0 0
    %234 = vmatpush2.bf16.msra.mxu0 0
    %235 = vmatprep.subr.bf16.mxu0 0
    %236 = vmatpush2.bf16.msra.mxu0 0
    %237 = vmatprep.subr.bf16.mxu0 0
    %238 = vmatpush2.bf16.msra.mxu0 0
    %239 = vmatprep.subr.bf16.mxu0 0
    %240 = vmatpush2.bf16.msra.mxu0 0
    %241 = vmatprep.subr.bf16.mxu0 0
    %242 = vmatpush2.bf16.msra.mxu0 0
    %243 = vmatprep.subr.bf16.mxu0 0
    %244 = vmatpush2.bf16.msra.mxu0 0
    %245 = vmatprep.subr.bf16.mxu0 0
    %246 = vmatpush2.bf16.msra.mxu0 0
    %247 = vmatprep.mubr.bf16.mxu0 0
    %248 = vmatmul.mubr.bf16.gmra.mxu0 %v213
    %v249 = vpop.f32.mrf.mxu0
    %v250 = vadd.f32 %v197, %v249
    %v251 = vpop.f32.mrf.mxu0
    %v252 = vpop.f32.mrf.mxu0
    %v253 = vadd.f32 %v197, %v252
    %v254 = vpop.f32.mrf.mxu0
    %255 = vdwg.mxu0
    %v256 = vmul.f32 %v250, 0.35355338
    %v257 = vmul.f32 %v253, 0.35355338
    %v258 = vpack.c.bf16 %v256, %v256
    %v259 = vpack.c.bf16 %v257, %v257
    %v260 = vpack.c.bf16 %v250, %v250
    %v261 = vpack.c.bf16 %v253, %v253
    %263 = vrot.lane.b32.xlu0 %v260, 96
    %v264 = vpop.permute.xlu0 %263
    %vm265 = vcmask 64512
    %v267 = vsel %vm265, %v258, 0
    %v270 = vsel %vm265, %v264, 0
    %272 = vmatprep.subr.bf16.mxu0 0
    %273 = vmatpush1.bf16.xpose.msra.mxu0 0
    %274 = vmatprep.subr.bf16.mxu0 0
    %275 = vmatpush1.bf16.xpose.msra.mxu0 0
    %276 = vmatprep.subr.bf16.mxu0 0
    %277 = vmatpush1.bf16.xpose.msra.mxu0 0
    %278 = vmatprep.subr.bf16.mxu0 0
    %279 = vmatpush1.bf16.xpose.msra.mxu0 0
    %280 = vmatprep.subr.bf16.mxu0 0
    %281 = vmatpush1.bf16.xpose.msra.mxu0 0
    %282 = vmatprep.subr.bf16.mxu0 0
    %283 = vmatpush1.bf16.xpose.msra.mxu0 0
    %284 = vmatprep.subr.bf16.mxu0 0
    %285 = vmatpush1.bf16.xpose.msra.mxu0 0
    %286 = vmatprep.subr.bf16.mxu0 0
    %287 = vmatpush1.bf16.xpose.msra.mxu0 %v270
    %288 = vmatprep.subr.bf16.mxu0 0
    %289 = vmatpush2.bf16.xpose.msra.mxu0 0
    %290 = vmatprep.subr.bf16.mxu0 0
    %291 = vmatpush2.bf16.xpose.msra.mxu0 0
    %292 = vmatprep.subr.bf16.mxu0 0
    %293 = vmatpush2.bf16.xpose.msra.mxu0 0
    %294 = vmatprep.subr.bf16.mxu0 0
    %295 = vmatpush2.bf16.xpose.msra.mxu0 0
    %296 = vmatprep.subr.bf16.mxu0 0
    %297 = vmatpush2.bf16.xpose.msra.mxu0 0
    %298 = vmatprep.subr.bf16.mxu0 0
    %299 = vmatpush2.bf16.xpose.msra.mxu0 0
    %300 = vmatprep.subr.bf16.mxu0 0
    %301 = vmatpush2.bf16.xpose.msra.mxu0 0
    %302 = vmatprep.subr.bf16.mxu0 0
    %303 = vmatpush2.bf16.xpose.msra.mxu0 0
    %304 = vmatprep.mubr.bf16.mxu0 0
    %305 = vmatmul.mubr.bf16.gmra.mxu0 %v267
    %v306 = vpop.f32.mrf.mxu0
    %v307 = vadd.f32 0.0, %v306
    %v308 = vpop.f32.mrf.mxu0
    %v309 = vpop.f32.mrf.mxu0
    %v310 = vpop.f32.mrf.mxu0
    %311 = vdwg.mxu0
    %313 = vrot.lane.b32.xlu0 %v261, 96
    %v314 = vpop.permute.xlu0 %313
    %v316 = vsel %vm265, %v259, 0
    %v319 = vsel %vm265, %v314, 0
    %321 = vmatprep.subr.bf16.mxu0 0
    %322 = vmatpush1.bf16.xpose.msra.mxu0 0
    %323 = vmatprep.subr.bf16.mxu0 0
    %324 = vmatpush1.bf16.xpose.msra.mxu0 0
    %325 = vmatprep.subr.bf16.mxu0 0
    %326 = vmatpush1.bf16.xpose.msra.mxu0 0
    %327 = vmatprep.subr.bf16.mxu0 0
    %328 = vmatpush1.bf16.xpose.msra.mxu0 0
    %329 = vmatprep.subr.bf16.mxu0 0
    %330 = vmatpush1.bf16.xpose.msra.mxu0 0
    %331 = vmatprep.subr.bf16.mxu0 0
    %332 = vmatpush1.bf16.xpose.msra.mxu0 0
    %333 = vmatprep.subr.bf16.mxu0 0
    %334 = vmatpush1.bf16.xpose.msra.mxu0 0
    %335 = vmatprep.subr.bf16.mxu0 0
    %336 = vmatpush1.bf16.xpose.msra.mxu0 %v319
    %337 = vmatprep.subr.bf16.mxu0 0
    %338 = vmatpush2.bf16.xpose.msra.mxu0 0
    %339 = vmatprep.subr.bf16.mxu0 0
    %340 = vmatpush2.bf16.xpose.msra.mxu0 0
    %341 = vmatprep.subr.bf16.mxu0 0
    %342 = vmatpush2.bf16.xpose.msra.mxu0 0
    %343 = vmatprep.subr.bf16.mxu0 0
    %344 = vmatpush2.bf16.xpose.msra.mxu0 0
    %345 = vmatprep.subr.bf16.mxu0 0
    %346 = vmatpush2.bf16.xpose.msra.mxu0 0
    %347 = vmatprep.subr.bf16.mxu0 0
    %348 = vmatpush2.bf16.xpose.msra.mxu0 0
    %349 = vmatprep.subr.bf16.mxu0 0
    %350 = vmatpush2.bf16.xpose.msra.mxu0 0
    %351 = vmatprep.subr.bf16.mxu0 0
    %352 = vmatpush2.bf16.xpose.msra.mxu0 0
    %353 = vmatprep.mubr.bf16.mxu0 0
    %354 = vmatmul.mubr.bf16.gmra.mxu0 %v316
    %v355 = vpop.f32.mrf.mxu0
    %v356 = vadd.f32 0.0, %v355
    %v357 = vpop.f32.mrf.mxu0
    %v358 = vpop.f32.mrf.mxu0
    %v359 = vpop.f32.mrf.mxu0
    %360 = vdwg.mxu0
    %v361 = vsel %vm265, %v307, -inf
    %362 = vmax.xlane.f32.xlu0 %v361
    %v363 = vpop.xlane.xlu0 %362
    %v364 = vsel %vm265, %v356, -inf
    %365 = vmax.xlane.f32.xlu0 %v364
    %v366 = vpop.xlane.xlu0 %365
    %v367 = vsub.f32 %v307, %v363
    %v368 = vsub.f32 %v356, %v366
    %v369 = vmul.f32 %v367, 1.442695
    %v370 = vpow.pop %v369
    %v371 = vmul.f32 %v368, 1.442695
    %v372 = vpow.pop %v371
    %v373 = vsel %vm265, %v370, 0.0
    %374 = vadd.xlane.f32.xlu0 %v373
    %v375 = vpop.xlane.xlu0 %374
    %v376 = vsel %vm265, %v372, 0.0
    %377 = vadd.xlane.f32.xlu0 %v376
    %v378 = vpop.xlane.xlu0 %377
    %v379 = vrcp.pop %v375
    %v380 = vrcp.pop %v378
    %v381 = vmul.f32 %v370, %v379
    %v382 = vmul.f32 %v372, %v380
    %383 = vst.msk [vmem:[#allocation17] sm:$0xff] %vm265, %v381
    %384 = vst.msk [vmem:[#allocation17 + $0x8] sm:$0xff] %vm265, %v382
    %v385 = vpack.c.bf16 %v381, %v381
    %v386 = vpack.c.bf16 %v382, %v382
    %387 = vrot.lane.b32.xlu0 %v260, 64
    %v388 = vpop.permute.xlu0 %387
    %v390 = vsel %vm265, %v385, 0
    %vm392 = vcmask 1043456
    %v394 = vsel %vm392, %v388, 0
    %396 = vmatprep.subr.bf16.mxu0 0
    %397 = vmatpush1.bf16.msra.mxu0 0
    %398 = vmatprep.subr.bf16.mxu0 0
    %399 = vmatpush1.bf16.msra.mxu0 0
    %400 = vmatprep.subr.bf16.mxu0 0
    %401 = vmatpush1.bf16.msra.mxu0 0
    %402 = vmatprep.subr.bf16.mxu0 0
    %403 = vmatpush1.bf16.msra.mxu0 0
    %404 = vmatprep.subr.bf16.mxu0 0
    %405 = vmatpush1.bf16.msra.mxu0 0
    %406 = vmatprep.subr.bf16.mxu0 0
    %407 = vmatpush1.bf16.msra.mxu0 0
    %408 = vmatprep.subr.bf16.mxu0 0
    %409 = vmatpush1.bf16.msra.mxu0 0
    %410 = vmatprep.subr.bf16.mxu0 0
    %411 = vmatpush1.bf16.msra.mxu0 %v394
    %412 = vmatprep.subr.bf16.mxu0 0
    %413 = vmatpush2.bf16.msra.mxu0 0
    %414 = vmatprep.subr.bf16.mxu0 0
    %415 = vmatpush2.bf16.msra.mxu0 0
    %416 = vmatprep.subr.bf16.mxu0 0
    %417 = vmatpush2.bf16.msra.mxu0 0
    %418 = vmatprep.subr.bf16.mxu0 0
    %419 = vmatpush2.bf16.msra.mxu0 0
    %420 = vmatprep.subr.bf16.mxu0 0
    %421 = vmatpush2.bf16.msra.mxu0 0
    %422 = vmatprep.subr.bf16.mxu0 0
    %423 = vmatpush2.bf16.msra.mxu0 0
    %424 = vmatprep.subr.bf16.mxu0 0
    %425 = vmatpush2.bf16.msra.mxu0 0
    %426 = vmatprep.subr.bf16.mxu0 0
    %427 = vmatpush2.bf16.msra.mxu0 0
    %428 = vmatprep.mubr.bf16.mxu0 0
    %429 = vmatmul.mubr.bf16.gmra.mxu0 %v390
    %v430 = vpop.f32.mrf.mxu0
    %v431 = vadd.f32 0.0, %v430
    %v432 = vpop.f32.mrf.mxu0
    %v433 = vpop.f32.mrf.mxu0
    %v434 = vpop.f32.mrf.mxu0
    %435 = vdwg.mxu0
    %436 = vrot.lane.b32.xlu0 %v261, 64
    %v437 = vpop.permute.xlu0 %436
    %v439 = vsel %vm265, %v386, 0
    %v442 = vsel %vm392, %v437, 0
    %444 = vmatprep.subr.bf16.mxu0 0
    %445 = vmatpush1.bf16.msra.mxu0 0
    %446 = vmatprep.subr.bf16.mxu0 0
    %447 = vmatpush1.bf16.msra.mxu0 0
    %448 = vmatprep.subr.bf16.mxu0 0
    %449 = vmatpush1.bf16.msra.mxu0 0
    %450 = vmatprep.subr.bf16.mxu0 0
    %451 = vmatpush1.bf16.msra.mxu0 0
    %452 = vmatprep.subr.bf16.mxu0 0
    %453 = vmatpush1.bf16.msra.mxu0 0
    %454 = vmatprep.subr.bf16.mxu0 0
    %455 = vmatpush1.bf16.msra.mxu0 0
    %456 = vmatprep.subr.bf16.mxu0 0
    %457 = vmatpush1.bf16.msra.mxu0 0
    %458 = vmatprep.subr.bf16.mxu0 0
    %459 = vmatpush1.bf16.msra.mxu0 %v442
    %460 = vmatprep.subr.bf16.mxu0 0
    %461 = vmatpush2.bf16.msra.mxu0 0
    %462 = vmatprep.subr.bf16.mxu0 0
    %463 = vmatpush2.bf16.msra.mxu0 0
    %464 = vmatprep.subr.bf16.mxu0 0
    %465 = vmatpush2.bf16.msra.mxu0 0
    %466 = vmatprep.subr.bf16.mxu0 0
    %467 = vmatpush2.bf16.msra.mxu0 0
    %468 = vmatprep.subr.bf16.mxu0 0
    %469 = vmatpush2.bf16.msra.mxu0 0
    %470 = vmatprep.subr.bf16.mxu0 0
    %471 = vmatpush2.bf16.msra.mxu0 0
    %472 = vmatprep.subr.bf16.mxu0 0
    %473 = vmatpush2.bf16.msra.mxu0 0
    %474 = vmatprep.subr.bf16.mxu0 0
    %475 = vmatpush2.bf16.msra.mxu0 0
    %476 = vmatprep.mubr.bf16.mxu0 0
    %477 = vmatmul.mubr.bf16.gmra.mxu0 %v439
    %v478 = vpop.f32.mrf.mxu0
    %v479 = vadd.f32 0.0, %v478
    %v480 = vpop.f32.mrf.mxu0
    %v481 = vpop.f32.mrf.mxu0
    %v482 = vpop.f32.mrf.mxu0
    %483 = vdwg.mxu0
    %485 = vrot.lane.b32.xlu0 %v258, 120
    %v486 = vpop.permute.xlu0 %485
    %487 = vrot.lane.b32.xlu0 %v260, 88
    %v488 = vpop.permute.xlu0 %487
    %v490 = vsel %vm265, %v486, 0
    %v493 = vsel %vm265, %v488, 0
    %495 = vmatprep.subr.bf16.mxu0 0
    %496 = vmatpush1.bf16.xpose.msra.mxu0 0
    %497 = vmatprep.subr.bf16.mxu0 0
    %498 = vmatpush1.bf16.xpose.msra.mxu0 0
    %499 = vmatprep.subr.bf16.mxu0 0
    %500 = vmatpush1.bf16.xpose.msra.mxu0 0
    %501 = vmatprep.subr.bf16.mxu0 0
    %502 = vmatpush1.bf16.xpose.msra.mxu0 0
    %503 = vmatprep.subr.bf16.mxu0 0
    %504 = vmatpush1.bf16.xpose.msra.mxu0 0
    %505 = vmatprep.subr.bf16.mxu0 0
    %506 = vmatpush1.bf16.xpose.msra.mxu0 0
    %507 = vmatprep.subr.bf16.mxu0 0
    %508 = vmatpush1.bf16.xpose.msra.mxu0 0
    %509 = vmatprep.subr.bf16.mxu0 0
    %510 = vmatpush1.bf16.xpose.msra.mxu0 %v493
    %511 = vmatprep.subr.bf16.mxu0 0
    %512 = vmatpush2.bf16.xpose.msra.mxu0 0
    %513 = vmatprep.subr.bf16.mxu0 0
    %514 = vmatpush2.bf16.xpose.msra.mxu0 0
    %515 = vmatprep.subr.bf16.mxu0 0
    %516 = vmatpush2.bf16.xpose.msra.mxu0 0
    %517 = vmatprep.subr.bf16.mxu0 0
    %518 = vmatpush2.bf16.xpose.msra.mxu0 0
    %519 = vmatprep.subr.bf16.mxu0 0
    %520 = vmatpush2.bf16.xpose.msra.mxu0 0
    %521 = vmatprep.subr.bf16.mxu0 0
    %522 = vmatpush2.bf16.xpose.msra.mxu0 0
    %523 = vmatprep.subr.bf16.mxu0 0
    %524 = vmatpush2.bf16.xpose.msra.mxu0 0
    %525 = vmatprep.subr.bf16.mxu0 0
    %526 = vmatpush2.bf16.xpose.msra.mxu0 0
    %527 = vmatprep.mubr.bf16.mxu0 0
    %528 = vmatmul.mubr.bf16.gmra.mxu0 %v490
    %v529 = vpop.f32.mrf.mxu0
    %v530 = vadd.f32 0.0, %v529
    %v531 = vpop.f32.mrf.mxu0
    %v532 = vpop.f32.mrf.mxu0
    %v533 = vpop.f32.mrf.mxu0
    %534 = vdwg.mxu0
    %536 = vrot.lane.b32.xlu0 %v259, 120
    %v537 = vpop.permute.xlu0 %536
    %538 = vrot.lane.b32.xlu0 %v261, 88
    %v539 = vpop.permute.xlu0 %538
    %v541 = vsel %vm265, %v537, 0
    %v544 = vsel %vm265, %v539, 0
    %546 = vmatprep.subr.bf16.mxu0 0
    %547 = vmatpush1.bf16.xpose.msra.mxu0 0
    %548 = vmatprep.subr.bf16.mxu0 0
    %549 = vmatpush1.bf16.xpose.msra.mxu0 0
    %550 = vmatprep.subr.bf16.mxu0 0
    %551 = vmatpush1.bf16.xpose.msra.mxu0 0
    %552 = vmatprep.subr.bf16.mxu0 0
    %553 = vmatpush1.bf16.xpose.msra.mxu0 0
    %554 = vmatprep.subr.bf16.mxu0 0
    %555 = vmatpush1.bf16.xpose.msra.mxu0 0
    %556 = vmatprep.subr.bf16.mxu0 0
    %557 = vmatpush1.bf16.xpose.msra.mxu0 0
    %558 = vmatprep.subr.bf16.mxu0 0
    %559 = vmatpush1.bf16.xpose.msra.mxu0 0
    %560 = vmatprep.subr.bf16.mxu0 0
    %561 = vmatpush1.bf16.xpose.msra.mxu0 %v544
    %562 = vmatprep.subr.bf16.mxu0 0
    %563 = vmatpush2.bf16.xpose.msra.mxu0 0
    %564 = vmatprep.subr.bf16.mxu0 0
    %565 = vmatpush2.bf16.xpose.msra.mxu0 0
    %566 = vmatprep.subr.bf16.mxu0 0
    %567 = vmatpush2.bf16.xpose.msra.mxu0 0
    %568 = vmatprep.subr.bf16.mxu0 0
    %569 = vmatpush2.bf16.xpose.msra.mxu0 0
    %570 = vmatprep.subr.bf16.mxu0 0
    %571 = vmatpush2.bf16.xpose.msra.mxu0 0
    %572 = vmatprep.subr.bf16.mxu0 0
    %573 = vmatpush2.bf16.xpose.msra.mxu0 0
    %574 = vmatprep.subr.bf16.mxu0 0
    %575 = vmatpush2.bf16.xpose.msra.mxu0 0
    %576 = vmatprep.subr.bf16.mxu0 0
    %577 = vmatpush2.bf16.xpose.msra.mxu0 0
    %578 = vmatprep.mubr.bf16.mxu0 0
    %579 = vmatmul.mubr.bf16.gmra.mxu0 %v541
    %v580 = vpop.f32.mrf.mxu0
    %v581 = vadd.f32 0.0, %v580
    %v582 = vpop.f32.mrf.mxu0
    %v583 = vpop.f32.mrf.mxu0
    %v584 = vpop.f32.mrf.mxu0
    %585 = vdwg.mxu0
    %v586 = vsel %vm265, %v530, -inf
    %587 = vmax.xlane.f32.xlu0 %v586
    %v588 = vpop.xlane.xlu0 %587
    %v589 = vsel %vm265, %v581, -inf
    %590 = vmax.xlane.f32.xlu0 %v589
    %v591 = vpop.xlane.xlu0 %590
    %v592 = vsub.f32 %v530, %v588
    %v593 = vsub.f32 %v581, %v591
    %v594 = vmul.f32 %v592, 1.442695
    %v595 = vpow.pop %v594
    %v596 = vmul.f32 %v593, 1.442695
    %v597 = vpow.pop %v596
    %v598 = vsel %vm265, %v595, 0.0
    %599 = vadd.xlane.f32.xlu0 %v598
    %v600 = vpop.xlane.xlu0 %599
    %v601 = vsel %vm265, %v597, 0.0
    %602 = vadd.xlane.f32.xlu0 %v601
    %v603 = vpop.xlane.xlu0 %602
    %v604 = vrcp.pop %v600
    %v605 = vrcp.pop %v603
    %v606 = vmul.f32 %v595, %v604
    %v607 = vmul.f32 %v597, %v605
    %s608 = scalar_lea.vmem [#allocation17], 16
    %609 = vst.msk [vmem:[%s608] sm:$0xff] %vm265, %v606
    %610 = vst.msk [vmem:[%s608 + $0x8] sm:$0xff] %vm265, %v607
    %v611 = vpack.c.bf16 %v606, %v606
    %v612 = vpack.c.bf16 %v607, %v607
    %613 = vrot.lane.b32.xlu0 %v260, 56
    %v614 = vpop.permute.xlu0 %613
    %v616 = vsel %vm265, %v611, 0
    %v619 = vsel %vm392, %v614, 0
    %621 = vmatprep.subr.bf16.mxu0 0
    %622 = vmatpush1.bf16.msra.mxu0 0
    %623 = vmatprep.subr.bf16.mxu0 0
    %624 = vmatpush1.bf16.msra.mxu0 0
    %625 = vmatprep.subr.bf16.mxu0 0
    %626 = vmatpush1.bf16.msra.mxu0 0
    %627 = vmatprep.subr.bf16.mxu0 0
    %628 = vmatpush1.bf16.msra.mxu0 0
    %629 = vmatprep.subr.bf16.mxu0 0
    %630 = vmatpush1.bf16.msra.mxu0 0
    %631 = vmatprep.subr.bf16.mxu0 0
    %632 = vmatpush1.bf16.msra.mxu0 0
    %633 = vmatprep.subr.bf16.mxu0 0
    %634 = vmatpush1.bf16.msra.mxu0 0
    %635 = vmatprep.subr.bf16.mxu0 0
    %636 = vmatpush1.bf16.msra.mxu0 %v619
    %637 = vmatprep.subr.bf16.mxu0 0
    %638 = vmatpush2.bf16.msra.mxu0 0
    %639 = vmatprep.subr.bf16.mxu0 0
    %640 = vmatpush2.bf16.msra.mxu0 0
    %641 = vmatprep.subr.bf16.mxu0 0
    %642 = vmatpush2.bf16.msra.mxu0 0
    %643 = vmatprep.subr.bf16.mxu0 0
    %644 = vmatpush2.bf16.msra.mxu0 0
    %645 = vmatprep.subr.bf16.mxu0 0
    %646 = vmatpush2.bf16.msra.mxu0 0
    %647 = vmatprep.subr.bf16.mxu0 0
    %648 = vmatpush2.bf16.msra.mxu0 0
    %649 = vmatprep.subr.bf16.mxu0 0
    %650 = vmatpush2.bf16.msra.mxu0 0
    %651 = vmatprep.subr.bf16.mxu0 0
    %652 = vmatpush2.bf16.msra.mxu0 0
    %653 = vmatprep.mubr.bf16.mxu0 0
    %654 = vmatmul.mubr.bf16.gmra.mxu0 %v616
    %v655 = vpop.f32.mrf.mxu0
    %v656 = vadd.f32 0.0, %v655
    %v657 = vpop.f32.mrf.mxu0
    %v658 = vpop.f32.mrf.mxu0
    %v659 = vpop.f32.mrf.mxu0
    %660 = vdwg.mxu0
    %661 = vrot.lane.b32.xlu0 %v261, 56
    %v662 = vpop.permute.xlu0 %661
    %v664 = vsel %vm265, %v612, 0
    %v667 = vsel %vm392, %v662, 0
    %669 = vmatprep.subr.bf16.mxu0 0
    %670 = vmatpush1.bf16.msra.mxu0 0
    %671 = vmatprep.subr.bf16.mxu0 0
    %672 = vmatpush1.bf16.msra.mxu0 0
    %673 = vmatprep.subr.bf16.mxu0 0
    %674 = vmatpush1.bf16.msra.mxu0 0
    %675 = vmatprep.subr.bf16.mxu0 0
    %676 = vmatpush1.bf16.msra.mxu0 0
    %677 = vmatprep.subr.bf16.mxu0 0
    %678 = vmatpush1.bf16.msra.mxu0 0
    %679 = vmatprep.subr.bf16.mxu0 0
    %680 = vmatpush1.bf16.msra.mxu0 0
    %681 = vmatprep.subr.bf16.mxu0 0
    %682 = vmatpush1.bf16.msra.mxu0 0
    %683 = vmatprep.subr.bf16.mxu0 0
    %684 = vmatpush1.bf16.msra.mxu0 %v667
    %685 = vmatprep.subr.bf16.mxu0 0
    %686 = vmatpush2.bf16.msra.mxu0 0
    %687 = vmatprep.subr.bf16.mxu0 0
    %688 = vmatpush2.bf16.msra.mxu0 0
    %689 = vmatprep.subr.bf16.mxu0 0
    %690 = vmatpush2.bf16.msra.mxu0 0
    %691 = vmatprep.subr.bf16.mxu0 0
    %692 = vmatpush2.bf16.msra.mxu0 0
    %693 = vmatprep.subr.bf16.mxu0 0
    %694 = vmatpush2.bf16.msra.mxu0 0
    %695 = vmatprep.subr.bf16.mxu0 0
    %696 = vmatpush2.bf16.msra.mxu0 0
    %697 = vmatprep.subr.bf16.mxu0 0
    %698 = vmatpush2.bf16.msra.mxu0 0
    %699 = vmatprep.subr.bf16.mxu0 0
    %700 = vmatpush2.bf16.msra.mxu0 0
    %701 = vmatprep.mubr.bf16.mxu0 0
    %702 = vmatmul.mubr.bf16.gmra.mxu0 %v664
    %v703 = vpop.f32.mrf.mxu0
    %v704 = vadd.f32 0.0, %v703
    %v705 = vpop.f32.mrf.mxu0
    %v706 = vpop.f32.mrf.mxu0
    %v707 = vpop.f32.mrf.mxu0
    %708 = vdwg.mxu0
    %709 = vrot.lane.b32.xlu0 %v258, 112
    %v710 = vpop.permute.xlu0 %709
    %711 = vrot.lane.b32.xlu0 %v260, 80
    %v712 = vpop.permute.xlu0 %711
    %v714 = vsel %vm265, %v710, 0
    %v717 = vsel %vm265, %v712, 0
    %719 = vmatprep.subr.bf16.mxu0 0
    %720 = vmatpush1.bf16.xpose.msra.mxu0 0
    %721 = vmatprep.subr.bf16.mxu0 0
    %722 = vmatpush1.bf16.xpose.msra.mxu0 0
    %723 = vmatprep.subr.bf16.mxu0 0
    %724 = vmatpush1.bf16.xpose.msra.mxu0 0
    %725 = vmatprep.subr.bf16.mxu0 0
    %726 = vmatpush1.bf16.xpose.msra.mxu0 0
    %727 = vmatprep.subr.bf16.mxu0 0
    %728 = vmatpush1.bf16.xpose.msra.mxu0 0
    %729 = vmatprep.subr.bf16.mxu0 0
    %730 = vmatpush1.bf16.xpose.msra.mxu0 0
    %731 = vmatprep.subr.bf16.mxu0 0
    %732 = vmatpush1.bf16.xpose.msra.mxu0 0
    %733 = vmatprep.subr.bf16.mxu0 0
    %734 = vmatpush1.bf16.xpose.msra.mxu0 %v717
    %735 = vmatprep.subr.bf16.mxu0 0
    %736 = vmatpush2.bf16.xpose.msra.mxu0 0
    %737 = vmatprep.subr.bf16.mxu0 0
    %738 = vmatpush2.bf16.xpose.msra.mxu0 0
    %739 = vmatprep.subr.bf16.mxu0 0
    %740 = vmatpush2.bf16.xpose.msra.mxu0 0
    %741 = vmatprep.subr.bf16.mxu0 0
    %742 = vmatpush2.bf16.xpose.msra.mxu0 0
    %743 = vmatprep.subr.bf16.mxu0 0
    %744 = vmatpush2.bf16.xpose.msra.mxu0 0
    %745 = vmatprep.subr.bf16.mxu0 0
    %746 = vmatpush2.bf16.xpose.msra.mxu0 0
    %747 = vmatprep.subr.bf16.mxu0 0
    %748 = vmatpush2.bf16.xpose.msra.mxu0 0
    %749 = vmatprep.subr.bf16.mxu0 0
    %750 = vmatpush2.bf16.xpose.msra.mxu0 0
    %751 = vmatprep.mubr.bf16.mxu0 0
    %752 = vmatmul.mubr.bf16.gmra.mxu0 %v714
    %v753 = vpop.f32.mrf.mxu0
    %v754 = vadd.f32 0.0, %v753
    %v755 = vpop.f32.mrf.mxu0
    %v756 = vpop.f32.mrf.mxu0
    %v757 = vpop.f32.mrf.mxu0
    %758 = vdwg.mxu0
    %759 = vrot.lane.b32.xlu0 %v259, 112
    %v760 = vpop.permute.xlu0 %759
    %761 = vrot.lane.b32.xlu0 %v261, 80
    %v762 = vpop.permute.xlu0 %761
    %v764 = vsel %vm265, %v760, 0
    %v767 = vsel %vm265, %v762, 0
    %769 = vmatprep.subr.bf16.mxu0 0
    %770 = vmatpush1.bf16.xpose.msra.mxu0 0
    %771 = vmatprep.subr.bf16.mxu0 0
    %772 = vmatpush1.bf16.xpose.msra.mxu0 0
    %773 = vmatprep.subr.bf16.mxu0 0
    %774 = vmatpush1.bf16.xpose.msra.mxu0 0
    %775 = vmatprep.subr.bf16.mxu0 0
    %776 = vmatpush1.bf16.xpose.msra.mxu0 0
    %777 = vmatprep.subr.bf16.mxu0 0
    %778 = vmatpush1.bf16.xpose.msra.mxu0 0
    %779 = vmatprep.subr.bf16.mxu0 0
    %780 = vmatpush1.bf16.xpose.msra.mxu0 0
    %781 = vmatprep.subr.bf16.mxu0 0
    %782 = vmatpush1.bf16.xpose.msra.mxu0 0
    %783 = vmatprep.subr.bf16.mxu0 0
    %784 = vmatpush1.bf16.xpose.msra.mxu0 %v767
    %785 = vmatprep.subr.bf16.mxu0 0
    %786 = vmatpush2.bf16.xpose.msra.mxu0 0
    %787 = vmatprep.subr.bf16.mxu0 0
    %788 = vmatpush2.bf16.xpose.msra.mxu0 0
    %789 = vmatprep.subr.bf16.mxu0 0
    %790 = vmatpush2.bf16.xpose.msra.mxu0 0
    %791 = vmatprep.subr.bf16.mxu0 0
    %792 = vmatpush2.bf16.xpose.msra.mxu0 0
    %793 = vmatprep.subr.bf16.mxu0 0
    %794 = vmatpush2.bf16.xpose.msra.mxu0 0
    %795 = vmatprep.subr.bf16.mxu0 0
    %796 = vmatpush2.bf16.xpose.msra.mxu0 0
    %797 = vmatprep.subr.bf16.mxu0 0
    %798 = vmatpush2.bf16.xpose.msra.mxu0 0
    %799 = vmatprep.subr.bf16.mxu0 0
    %800 = vmatpush2.bf16.xpose.msra.mxu0 0
    %801 = vmatprep.mubr.bf16.mxu0 0
    %802 = vmatmul.mubr.bf16.gmra.mxu0 %v764
    %v803 = vpop.f32.mrf.mxu0
    %v804 = vadd.f32 0.0, %v803
    %v805 = vpop.f32.mrf.mxu0
    %v806 = vpop.f32.mrf.mxu0
    %v807 = vpop.f32.mrf.mxu0
    %808 = vdwg.mxu0
    %v809 = vsel %vm265, %v754, -inf
    %810 = vmax.xlane.f32.xlu0 %v809
    %v811 = vpop.xlane.xlu0 %810
    %v812 = vsel %vm265, %v804, -inf
    %813 = vmax.xlane.f32.xlu0 %v812
    %v814 = vpop.xlane.xlu0 %813
    %v815 = vsub.f32 %v754, %v811
    %v816 = vsub.f32 %v804, %v814
    %v817 = vmul.f32 %v815, 1.442695
    %v818 = vpow.pop %v817
    %v819 = vmul.f32 %v816, 1.442695
    %v820 = vpow.pop %v819
    %v821 = vsel %vm265, %v818, 0.0
    %822 = vadd.xlane.f32.xlu0 %v821
    %v823 = vpop.xlane.xlu0 %822
    %v824 = vsel %vm265, %v820, 0.0
    %825 = vadd.xlane.f32.xlu0 %v824
    %v826 = vpop.xlane.xlu0 %825
    %v827 = vrcp.pop %v823
    %v828 = vrcp.pop %v826
    %v829 = vmul.f32 %v818, %v827
    %v830 = vmul.f32 %v820, %v828
    %s831 = scalar_lea.vmem [#allocation17], 32
    %832 = vst.msk [vmem:[%s831] sm:$0xff] %vm265, %v829
    %833 = vst.msk [vmem:[%s831 + $0x8] sm:$0xff] %vm265, %v830
    %v834 = vpack.c.bf16 %v829, %v829
    %v835 = vpack.c.bf16 %v830, %v830
    %836 = vrot.lane.b32.xlu0 %v260, 48
    %v837 = vpop.permute.xlu0 %836
    %v839 = vsel %vm265, %v834, 0
    %v842 = vsel %vm392, %v837, 0
    %844 = vmatprep.subr.bf16.mxu0 0
    %845 = vmatpush1.bf16.msra.mxu0 0
    %846 = vmatprep.subr.bf16.mxu0 0
    %847 = vmatpush1.bf16.msra.mxu0 0
    %848 = vmatprep.subr.bf16.mxu0 0
    %849 = vmatpush1.bf16.msra.mxu0 0
    %850 = vmatprep.subr.bf16.mxu0 0
    %851 = vmatpush1.bf16.msra.mxu0 0
    %852 = vmatprep.subr.bf16.mxu0 0
    %853 = vmatpush1.bf16.msra.mxu0 0
    %854 = vmatprep.subr.bf16.mxu0 0
    %855 = vmatpush1.bf16.msra.mxu0 0
    %856 = vmatprep.subr.bf16.mxu0 0
    %857 = vmatpush1.bf16.msra.mxu0 0
    %858 = vmatprep.subr.bf16.mxu0 0
    %859 = vmatpush1.bf16.msra.mxu0 %v842
    %860 = vmatprep.subr.bf16.mxu0 0
    %861 = vmatpush2.bf16.msra.mxu0 0
    %862 = vmatprep.subr.bf16.mxu0 0
    %863 = vmatpush2.bf16.msra.mxu0 0
    %864 = vmatprep.subr.bf16.mxu0 0
    %865 = vmatpush2.bf16.msra.mxu0 0
    %866 = vmatprep.subr.bf16.mxu0 0
    %867 = vmatpush2.bf16.msra.mxu0 0
    %868 = vmatprep.subr.bf16.mxu0 0
    %869 = vmatpush2.bf16.msra.mxu0 0
    %870 = vmatprep.subr.bf16.mxu0 0
    %871 = vmatpush2.bf16.msra.mxu0 0
    %872 = vmatprep.subr.bf16.mxu0 0
    %873 = vmatpush2.bf16.msra.mxu0 0
    %874 = vmatprep.subr.bf16.mxu0 0
    %875 = vmatpush2.bf16.msra.mxu0 0
    %876 = vmatprep.mubr.bf16.mxu0 0
    %877 = vmatmul.mubr.bf16.gmra.mxu0 %v839
    %v878 = vpop.f32.mrf.mxu0
    %v879 = vadd.f32 0.0, %v878
    %v880 = vpop.f32.mrf.mxu0
    %v881 = vpop.f32.mrf.mxu0
    %v882 = vpop.f32.mrf.mxu0
    %883 = vdwg.mxu0
    %884 = vrot.lane.b32.xlu0 %v261, 48
    %v885 = vpop.permute.xlu0 %884
    %v887 = vsel %vm265, %v835, 0
    %v890 = vsel %vm392, %v885, 0
    %892 = vmatprep.subr.bf16.mxu0 0
    %893 = vmatpush1.bf16.msra.mxu0 0
    %894 = vmatprep.subr.bf16.mxu0 0
    %895 = vmatpush1.bf16.msra.mxu0 0
    %896 = vmatprep.subr.bf16.mxu0 0
    %897 = vmatpush1.bf16.msra.mxu0 0
    %898 = vmatprep.subr.bf16.mxu0 0
    %899 = vmatpush1.bf16.msra.mxu0 0
    %900 = vmatprep.subr.bf16.mxu0 0
    %901 = vmatpush1.bf16.msra.mxu0 0
    %902 = vmatprep.subr.bf16.mxu0 0
    %903 = vmatpush1.bf16.msra.mxu0 0
    %904 = vmatprep.subr.bf16.mxu0 0
    %905 = vmatpush1.bf16.msra.mxu0 0
    %906 = vmatprep.subr.bf16.mxu0 0
    %907 = vmatpush1.bf16.msra.mxu0 %v890
    %908 = vmatprep.subr.bf16.mxu0 0
    %909 = vmatpush2.bf16.msra.mxu0 0
    %910 = vmatprep.subr.bf16.mxu0 0
    %911 = vmatpush2.bf16.msra.mxu0 0
    %912 = vmatprep.subr.bf16.mxu0 0
    %913 = vmatpush2.bf16.msra.mxu0 0
    %914 = vmatprep.subr.bf16.mxu0 0
    %915 = vmatpush2.bf16.msra.mxu0 0
    %916 = vmatprep.subr.bf16.mxu0 0
    %917 = vmatpush2.bf16.msra.mxu0 0
    %918 = vmatprep.subr.bf16.mxu0 0
    %919 = vmatpush2.bf16.msra.mxu0 0
    %920 = vmatprep.subr.bf16.mxu0 0
    %921 = vmatpush2.bf16.msra.mxu0 0
    %922 = vmatprep.subr.bf16.mxu0 0
    %923 = vmatpush2.bf16.msra.mxu0 0
    %924 = vmatprep.mubr.bf16.mxu0 0
    %925 = vmatmul.mubr.bf16.gmra.mxu0 %v887
    %v926 = vpop.f32.mrf.mxu0
    %v927 = vadd.f32 0.0, %v926
    %v928 = vpop.f32.mrf.mxu0
    %v929 = vpop.f32.mrf.mxu0
    %v930 = vpop.f32.mrf.mxu0
    %931 = vdwg.mxu0
    %932 = vrot.lane.b32.xlu0 %v258, 104
    %v933 = vpop.permute.xlu0 %932
    %934 = vrot.lane.b32.xlu0 %v260, 72
    %v935 = vpop.permute.xlu0 %934
    %v937 = vsel %vm265, %v933, 0
    %v940 = vsel %vm265, %v935, 0
    %942 = vmatprep.subr.bf16.mxu0 0
    %943 = vmatpush1.bf16.xpose.msra.mxu0 0
    %944 = vmatprep.subr.bf16.mxu0 0
    %945 = vmatpush1.bf16.xpose.msra.mxu0 0
    %946 = vmatprep.subr.bf16.mxu0 0
    %947 = vmatpush1.bf16.xpose.msra.mxu0 0
    %948 = vmatprep.subr.bf16.mxu0 0
    %949 = vmatpush1.bf16.xpose.msra.mxu0 0
    %950 = vmatprep.subr.bf16.mxu0 0
    %951 = vmatpush1.bf16.xpose.msra.mxu0 0
    %952 = vmatprep.subr.bf16.mxu0 0
    %953 = vmatpush1.bf16.xpose.msra.mxu0 0
    %954 = vmatprep.subr.bf16.mxu0 0
    %955 = vmatpush1.bf16.xpose.msra.mxu0 0
    %956 = vmatprep.subr.bf16.mxu0 0
    %957 = vmatpush1.bf16.xpose.msra.mxu0 %v940
    %958 = vmatprep.subr.bf16.mxu0 0
    %959 = vmatpush2.bf16.xpose.msra.mxu0 0
    %960 = vmatprep.subr.bf16.mxu0 0
    %961 = vmatpush2.bf16.xpose.msra.mxu0 0
    %962 = vmatprep.subr.bf16.mxu0 0
    %963 = vmatpush2.bf16.xpose.msra.mxu0 0
    %964 = vmatprep.subr.bf16.mxu0 0
    %965 = vmatpush2.bf16.xpose.msra.mxu0 0
    %966 = vmatprep.subr.bf16.mxu0 0
    %967 = vmatpush2.bf16.xpose.msra.mxu0 0
    %968 = vmatprep.subr.bf16.mxu0 0
    %969 = vmatpush2.bf16.xpose.msra.mxu0 0
    %970 = vmatprep.subr.bf16.mxu0 0
    %971 = vmatpush2.bf16.xpose.msra.mxu0 0
    %972 = vmatprep.subr.bf16.mxu0 0
    %973 = vmatpush2.bf16.xpose.msra.mxu0 0
    %974 = vmatprep.mubr.bf16.mxu0 0
    %975 = vmatmul.mubr.bf16.gmra.mxu0 %v937
    %v976 = vpop.f32.mrf.mxu0
    %v977 = vadd.f32 0.0, %v976
    %v978 = vpop.f32.mrf.mxu0
    %v979 = vpop.f32.mrf.mxu0
    %v980 = vpop.f32.mrf.mxu0
    %981 = vdwg.mxu0
    %982 = vrot.lane.b32.xlu0 %v259, 104
    %v983 = vpop.permute.xlu0 %982
    %984 = vrot.lane.b32.xlu0 %v261, 72
    %v985 = vpop.permute.xlu0 %984
    %v987 = vsel %vm265, %v983, 0
    %v990 = vsel %vm265, %v985, 0
    %992 = vmatprep.subr.bf16.mxu0 0
    %993 = vmatpush1.bf16.xpose.msra.mxu0 0
    %994 = vmatprep.subr.bf16.mxu0 0
    %995 = vmatpush1.bf16.xpose.msra.mxu0 0
    %996 = vmatprep.subr.bf16.mxu0 0
    %997 = vmatpush1.bf16.xpose.msra.mxu0 0
    %998 = vmatprep.subr.bf16.mxu0 0
    %999 = vmatpush1.bf16.xpose.msra.mxu0 0
    %1000 = vmatprep.subr.bf16.mxu0 0
    %1001 = vmatpush1.bf16.xpose.msra.mxu0 0
    %1002 = vmatprep.subr.bf16.mxu0 0
    %1003 = vmatpush1.bf16.xpose.msra.mxu0 0
    %1004 = vmatprep.subr.bf16.mxu0 0
    %1005 = vmatpush1.bf16.xpose.msra.mxu0 0
    %1006 = vmatprep.subr.bf16.mxu0 0
    %1007 = vmatpush1.bf16.xpose.msra.mxu0 %v990
    %1008 = vmatprep.subr.bf16.mxu0 0
    %1009 = vmatpush2.bf16.xpose.msra.mxu0 0
    %1010 = vmatprep.subr.bf16.mxu0 0
    %1011 = vmatpush2.bf16.xpose.msra.mxu0 0
    %1012 = vmatprep.subr.bf16.mxu0 0
    %1013 = vmatpush2.bf16.xpose.msra.mxu0 0
    %1014 = vmatprep.subr.bf16.mxu0 0
    %1015 = vmatpush2.bf16.xpose.msra.mxu0 0
    %1016 = vmatprep.subr.bf16.mxu0 0
    %1017 = vmatpush2.bf16.xpose.msra.mxu0 0
    %1018 = vmatprep.subr.bf16.mxu0 0
    %1019 = vmatpush2.bf16.xpose.msra.mxu0 0
    %1020 = vmatprep.subr.bf16.mxu0 0
    %1021 = vmatpush2.bf16.xpose.msra.mxu0 0
    %1022 = vmatprep.subr.bf16.mxu0 0
    %1023 = vmatpush2.bf16.xpose.msra.mxu0 0
    %1024 = vmatprep.mubr.bf16.mxu0 0
    %1025 = vmatmul.mubr.bf16.gmra.mxu0 %v987
    %v1026 = vpop.f32.mrf.mxu0
    %v1027 = vadd.f32 0.0, %v1026
    %v1028 = vpop.f32.mrf.mxu0
    %v1029 = vpop.f32.mrf.mxu0
    %v1030 = vpop.f32.mrf.mxu0
    %1031 = vdwg.mxu0
    %v1032 = vsel %vm265, %v977, -inf
    %1033 = vmax.xlane.f32.xlu0 %v1032
    %v1034 = vpop.xlane.xlu0 %1033
    %v1035 = vsel %vm265, %v1027, -inf
    %1036 = vmax.xlane.f32.xlu0 %v1035
    %v1037 = vpop.xlane.xlu0 %1036
    %v1038 = vsub.f32 %v977, %v1034
    %v1039 = vsub.f32 %v1027, %v1037
    %v1040 = vmul.f32 %v1038, 1.442695
    %v1041 = vpow.pop %v1040
    %v1042 = vmul.f32 %v1039, 1.442695
    %v1043 = vpow.pop %v1042
    %v1044 = vsel %vm265, %v1041, 0.0
    %1045 = vadd.xlane.f32.xlu0 %v1044
    %v1046 = vpop.xlane.xlu0 %1045
    %v1047 = vsel %vm265, %v1043, 0.0
    %1048 = vadd.xlane.f32.xlu0 %v1047
    %v1049 = vpop.xlane.xlu0 %1048
    %v1050 = vrcp.pop %v1046
    %v1051 = vrcp.pop %v1049
    %v1052 = vmul.f32 %v1041, %v1050
    %v1053 = vmul.f32 %v1043, %v1051
    %s1054 = scalar_lea.vmem [#allocation17], 48
    %1055 = vst.msk [vmem:[%s1054] sm:$0xff] %vm265, %v1052
    %1056 = vst.msk [vmem:[%s1054 + $0x8] sm:$0xff] %vm265, %v1053
    %v1057 = vpack.c.bf16 %v1052, %v1052
    %v1058 = vpack.c.bf16 %v1053, %v1053
    %1059 = vrot.lane.b32.xlu0 %v260, 40
    %v1060 = vpop.permute.xlu0 %1059
    %v1062 = vsel %vm265, %v1057, 0
    %v1065 = vsel %vm392, %v1060, 0
    %1067 = vmatprep.subr.bf16.mxu0 0
    %1068 = vmatpush1.bf16.msra.mxu0 0
    %1069 = vmatprep.subr.bf16.mxu0 0
    %1070 = vmatpush1.bf16.msra.mxu0 0
    %1071 = vmatprep.subr.bf16.mxu0 0
    %1072 = vmatpush1.bf16.msra.mxu0 0
    %1073 = vmatprep.subr.bf16.mxu0 0
    %1074 = vmatpush1.bf16.msra.mxu0 0
    %1075 = vmatprep.subr.bf16.mxu0 0
    %1076 = vmatpush1.bf16.msra.mxu0 0
    %1077 = vmatprep.subr.bf16.mxu0 0
    %1078 = vmatpush1.bf16.msra.mxu0 0
    %1079 = vmatprep.subr.bf16.mxu0 0
    %1080 = vmatpush1.bf16.msra.mxu0 0
    %1081 = vmatprep.subr.bf16.mxu0 0
    %1082 = vmatpush1.bf16.msra.mxu0 %v1065
    %1083 = vmatprep.subr.bf16.mxu0 0
    %1084 = vmatpush2.bf16.msra.mxu0 0
    %1085 = vmatprep.subr.bf16.mxu0 0
    %1086 = vmatpush2.bf16.msra.mxu0 0
    %1087 = vmatprep.subr.bf16.mxu0 0
    %1088 = vmatpush2.bf16.msra.mxu0 0
    %1089 = vmatprep.subr.bf16.mxu0 0
    %1090 = vmatpush2.bf16.msra.mxu0 0
    %1091 = vmatprep.subr.bf16.mxu0 0
    %1092 = vmatpush2.bf16.msra.mxu0 0
    %1093 = vmatprep.subr.bf16.mxu0 0
    %1094 = vmatpush2.bf16.msra.mxu0 0
    %1095 = vmatprep.subr.bf16.mxu0 0
    %1096 = vmatpush2.bf16.msra.mxu0 0
    %1097 = vmatprep.subr.bf16.mxu0 0
    %1098 = vmatpush2.bf16.msra.mxu0 0
    %1099 = vmatprep.mubr.bf16.mxu0 0
    %1100 = vmatmul.mubr.bf16.gmra.mxu0 %v1062
    %v1101 = vpop.f32.mrf.mxu0
    %v1102 = vadd.f32 0.0, %v1101
    %v1103 = vpop.f32.mrf.mxu0
    %v1104 = vpop.f32.mrf.mxu0
    %v1105 = vpop.f32.mrf.mxu0
    %1106 = vdwg.mxu0
    %1107 = vrot.lane.b32.xlu0 %v261, 40
    %v1108 = vpop.permute.xlu0 %1107
    %v1110 = vsel %vm265, %v1058, 0
    %v1113 = vsel %vm392, %v1108, 0
    %1115 = vmatprep.subr.bf16.mxu0 0
    %1116 = vmatpush1.bf16.msra.mxu0 0
    %1117 = vmatprep.subr.bf16.mxu0 0
    %1118 = vmatpush1.bf16.msra.mxu0 0
    %1119 = vmatprep.subr.bf16.mxu0 0
    %1120 = vmatpush1.bf16.msra.mxu0 0
    %1121 = vmatprep.subr.bf16.mxu0 0
    %1122 = vmatpush1.bf16.msra.mxu0 0
    %1123 = vmatprep.subr.bf16.mxu0 0
    %1124 = vmatpush1.bf16.msra.mxu0 0
    %1125 = vmatprep.subr.bf16.mxu0 0
    %1126 = vmatpush1.bf16.msra.mxu0 0
    %1127 = vmatprep.subr.bf16.mxu0 0
    %1128 = vmatpush1.bf16.msra.mxu0 0
    %1129 = vmatprep.subr.bf16.mxu0 0
    %1130 = vmatpush1.bf16.msra.mxu0 %v1113
    %1131 = vmatprep.subr.bf16.mxu0 0
    %1132 = vmatpush2.bf16.msra.mxu0 0
    %1133 = vmatprep.subr.bf16.mxu0 0
    %1134 = vmatpush2.bf16.msra.mxu0 0
    %1135 = vmatprep.subr.bf16.mxu0 0
    %1136 = vmatpush2.bf16.msra.mxu0 0
    %1137 = vmatprep.subr.bf16.mxu0 0
    %1138 = vmatpush2.bf16.msra.mxu0 0
    %1139 = vmatprep.subr.bf16.mxu0 0
    %1140 = vmatpush2.bf16.msra.mxu0 0
    %1141 = vmatprep.subr.bf16.mxu0 0
    %1142 = vmatpush2.bf16.msra.mxu0 0
    %1143 = vmatprep.subr.bf16.mxu0 0
    %1144 = vmatpush2.bf16.msra.mxu0 0
    %1145 = vmatprep.subr.bf16.mxu0 0
    %1146 = vmatpush2.bf16.msra.mxu0 0
    %1147 = vmatprep.mubr.bf16.mxu0 0
    %1148 = vmatmul.mubr.bf16.gmra.mxu0 %v1110
    %v1149 = vpop.f32.mrf.mxu0
    %v1150 = vadd.f32 0.0, %v1149
    %v1151 = vpop.f32.mrf.mxu0
    %v1152 = vpop.f32.mrf.mxu0
    %v1153 = vpop.f32.mrf.mxu0
    %1154 = vdwg.mxu0
    %1157 = vrot.lane.b32.xlu0 %v656, 8
    %v1158 = vpop.permute.xlu0 %1157
    %1159 = vrot.lane.b32.xlu0 %v704, 8
    %v1160 = vpop.permute.xlu0 %1159
    %1165 = vrot.lane.b32.xlu0 %v879, 16
    %v1166 = vpop.permute.xlu0 %1165
    %1167 = vrot.lane.b32.xlu0 %v927, 16
    %v1168 = vpop.permute.xlu0 %1167
    %1173 = vrot.lane.b32.xlu0 %v1102, 24
    %v1174 = vpop.permute.xlu0 %1173
    %1175 = vrot.lane.b32.xlu0 %v1150, 24
    %v1176 = vpop.permute.xlu0 %1175
    %v1179 = vsel %vm265, %v431, %v1158
    %v1180 = vsel %vm265, %v479, %v1160
    %vm1181 = vcmask 130048
    %v1182 = vsel %vm1181, %v1179, %v1166
    %v1183 = vsel %vm1181, %v1180, %v1168
    %vm1184 = vcmask 195584
    %v1185 = vsel %vm1184, %v1182, %v1174
    %v1186 = vsel %vm1184, %v1183, %v1176
    %v1187 = vpack.c.bf16 %v1186, %v1185
    %v1188 = vld [vmem:[#allocation7] sm:$0xf]
    %v1189 = vld [vmem:[#allocation7 + $0x4] sm:$0xf]
    %v1190 = vld [vmem:[#allocation7 + $0x8] sm:$0xf]
    %v1191 = vld [vmem:[#allocation7 + $0xc] sm:$0xf]
    %v1192 = vld [vmem:[#allocation8] sm:$0x1]
    %v1194 = vlaneseq
    %v1195 = vshrl.u32 %v1194, 7
    %v1196 = vsub.s32 0, %v1195
    %v1197 = vrot.slane %v1192, %v1196
    %v1203 = vunpack.c.l.b16 %v1188
    %v1204 = vunpack.c.l.b16 %v1189
    %v1205 = vunpack.c.l.b16 %v1190
    %v1206 = vunpack.c.l.b16 %v1191
    %v1207 = vpack.c.b16 %v1204, %v1203
    %v1208 = vpack.c.b16 %v1206, %v1205
    %v1212 = vsel %vm211, %v1187, 0
    %1214 = vmatprep.subr.bf16.mxu0 0
    %1215 = vmatpush1.bf16.msra.mxu0 0
    %1216 = vmatprep.subr.bf16.mxu0 0
    %1217 = vmatpush1.bf16.msra.mxu0 0
    %1218 = vmatprep.subr.bf16.mxu0 0
    %1219 = vmatpush1.bf16.msra.mxu0 0
    %1220 = vmatprep.subr.bf16.mxu0 0
    %1221 = vmatpush1.bf16.msra.mxu0 0
    %1222 = vmatprep.subr.bf16.mxu0 0
    %1223 = vmatpush1.bf16.msra.mxu0 0
    %1224 = vmatprep.subr.bf16.mxu0 0
    %1225 = vmatpush1.bf16.msra.mxu0 0
    %1226 = vmatprep.subr.bf16.mxu0 0
    %1227 = vmatpush1.bf16.msra.mxu0 %v1208
    %1228 = vmatprep.subr.bf16.mxu0 0
    %1229 = vmatpush1.bf16.msra.mxu0 %v1207
    %1230 = vmatprep.subr.bf16.mxu0 0
    %1231 = vmatpush2.bf16.msra.mxu0 0
    %1232 = vmatprep.subr.bf16.mxu0 0
    %1233 = vmatpush2.bf16.msra.mxu0 0
    %1234 = vmatprep.subr.bf16.mxu0 0
    %1235 = vmatpush2.bf16.msra.mxu0 0
    %1236 = vmatprep.subr.bf16.mxu0 0
    %1237 = vmatpush2.bf16.msra.mxu0 0
    %1238 = vmatprep.subr.bf16.mxu0 0
    %1239 = vmatpush2.bf16.msra.mxu0 0
    %1240 = vmatprep.subr.bf16.mxu0 0
    %1241 = vmatpush2.bf16.msra.mxu0 0
    %1242 = vmatprep.subr.bf16.mxu0 0
    %1243 = vmatpush2.bf16.msra.mxu0 0
    %1244 = vmatprep.subr.bf16.mxu0 0
    %1245 = vmatpush2.bf16.msra.mxu0 0
    %1246 = vmatprep.mubr.bf16.mxu0 0
    %1247 = vmatmul.mubr.bf16.gmra.mxu0 %v1212
    %v1248 = vpop.f32.mrf.mxu0
    %v1249 = vadd.f32 %v1197, %v1248
    %v1250 = vpop.f32.mrf.mxu0
    %v1251 = vpop.f32.mrf.mxu0
    %v1252 = vadd.f32 %v1197, %v1251
    %v1253 = vpop.f32.mrf.mxu0
    %1254 = vdwg.mxu0
    %v1255 = vadd.f32 %v1249, %v183
    %v1256 = vadd.f32 %v1252, %v184
    %v1257 = vsel %vm211, %v1255, 0.0
    %1258 = vadd.xlane.f32.xlu0 %v1257
    %v1259 = vpop.xlane.xlu0 %1258
    %v1260 = vsel %vm211, %v1256, 0.0
    %1261 = vadd.xlane.f32.xlu0 %v1260
    %v1262 = vpop.xlane.xlu0 %1261
    %v1263 = vrcp.pop 32.0
    %v1264 = vmul.f32 %v1259, %v1263
    %v1265 = vmul.f32 %v1262, %v1263
    %v1266 = vsub.f32 %v1255, %v1264
    %v1267 = vsub.f32 %v1256, %v1265
    %v1268 = vmul.f32 %v1266, %v1266
    %v1269 = vmul.f32 %v1267, %v1267
    %v1270 = vsel %vm211, %v1268, 0.0
    %1271 = vadd.xlane.f32.xlu0 %v1270
    %v1272 = vpop.xlane.xlu0 %1271
    %v1273 = vsel %vm211, %v1269, 0.0
    %1274 = vadd.xlane.f32.xlu0 %v1273
    %v1275 = vpop.xlane.xlu0 %1274
    %v1276 = vmul.f32 %v1272, %v1263
    %v1277 = vmul.f32 %v1275, %v1263
    %v1278 = vadd.f32 %v1276, 1e-06
    %v1279 = vadd.f32 %v1277, 1e-06
    %v1280 = vrsqrt.pop %v1278
    %v1281 = vrsqrt.pop %v1279
    %v1282 = vmul.f32 %v1266, %v1280
    %v1283 = vmul.f32 %v1267, %v1281
    %v1284 = vld [vmem:[%s17] sm:$0x1]
    %v1286 = vlaneseq
    %v1287 = vshrl.u32 %v1286, 7
    %v1288 = vsub.s32 0, %v1287
    %v1289 = vrot.slane %v1284, %v1288
    %v1291 = vmul.f32 %v1282, %v1289
    %v1292 = vmul.f32 %v1283, %v1289
    %v1293 = vld [vmem:[%s18] sm:$0x1]
    %v1295 = vlaneseq
    %v1296 = vshrl.u32 %v1295, 7
    %v1297 = vsub.s32 0, %v1296
    %v1298 = vrot.slane %v1293, %v1297
    %v1300 = vadd.f32 %v1291, %v1298
    %v1301 = vadd.f32 %v1292, %v1298
    %v1302 = vpack.c.bf16 %v1301, %v1300
    %v1303 = vld [vmem:[#allocation10] sm:$0xf]
    %v1304 = vld [vmem:[#allocation10 + $0x4] sm:$0xf]
    %v1305 = vld [vmem:[#allocation10 + $0x8] sm:$0xf]
    %v1306 = vld [vmem:[#allocation10 + $0xc] sm:$0xf]
    %v1307 = vld [vmem:[#allocation11] sm:$0x1]
    %v1309 = vlaneseq
    %v1310 = vshrl.u32 %v1309, 7
    %v1311 = vsub.s32 0, %v1310
    %v1312 = vrot.slane %v1307, %v1311
    %v1318 = vunpack.c.l.b16 %v1303
    %v1319 = vunpack.c.l.b16 %v1304
    %v1320 = vunpack.c.l.b16 %v1305
    %v1321 = vunpack.c.l.b16 %v1306
    %v1322 = vpack.c.b16 %v1319, %v1318
    %v1323 = vpack.c.b16 %v1321, %v1320
    %v1327 = vsel %vm211, %v1302, 0
    %1329 = vmatprep.subr.bf16.mxu0 0
    %1330 = vmatpush1.bf16.msra.mxu0 0
    %1331 = vmatprep.subr.bf16.mxu0 0
    %1332 = vmatpush1.bf16.msra.mxu0 0
    %1333 = vmatprep.subr.bf16.mxu0 0
    %1334 = vmatpush1.bf16.msra.mxu0 0
    %1335 = vmatprep.subr.bf16.mxu0 0
    %1336 = vmatpush1.bf16.msra.mxu0 0
    %1337 = vmatprep.subr.bf16.mxu0 0
    %1338 = vmatpush1.bf16.msra.mxu0 0
    %1339 = vmatprep.subr.bf16.mxu0 0
    %1340 = vmatpush1.bf16.msra.mxu0 0
    %1341 = vmatprep.subr.bf16.mxu0 0
    %1342 = vmatpush1.bf16.msra.mxu0 %v1323
    %1343 = vmatprep.subr.bf16.mxu0 0
    %1344 = vmatpush1.bf16.msra.mxu0 %v1322
    %1345 = vmatprep.subr.bf16.mxu0 0
    %1346 = vmatpush2.bf16.msra.mxu0 0
    %1347 = vmatprep.subr.bf16.mxu0 0
    %1348 = vmatpush2.bf16.msra.mxu0 0
    %1349 = vmatprep.subr.bf16.mxu0 0
    %1350 = vmatpush2.bf16.msra.mxu0 0
    %1351 = vmatprep.subr.bf16.mxu0 0
    %1352 = vmatpush2.bf16.msra.mxu0 0
    %1353 = vmatprep.subr.bf16.mxu0 0
    %1354 = vmatpush2.bf16.msra.mxu0 0
    %1355 = vmatprep.subr.bf16.mxu0 0
    %1356 = vmatpush2.bf16.msra.mxu0 0
    %1357 = vmatprep.subr.bf16.mxu0 0
    %1358 = vmatpush2.bf16.msra.mxu0 0
    %1359 = vmatprep.subr.bf16.mxu0 0
    %1360 = vmatpush2.bf16.msra.mxu0 0
    %1361 = vmatprep.mubr.bf16.mxu0 0
    %1362 = vmatmul.mubr.bf16.gmra.mxu0 %v1327
    %v1363 = vpop.f32.mrf.mxu0
    %v1364 = vadd.f32 %v1312, %v1363
    %v1365 = vpop.f32.mrf.mxu0
    %v1366 = vpop.f32.mrf.mxu0
    %v1367 = vadd.f32 %v1312, %v1366
    %v1368 = vpop.f32.mrf.mxu0
    %1369 = vdwg.mxu0
    %v1370 = vmul.f32 %v1364, 0.35355338
    %v1371 = vmul.f32 %v1367, 0.35355338
    %v1372 = vpack.c.bf16 %v186, %v185
    %v1373 = vld [vmem:[%s9] sm:$0xf]
    %v1374 = vld [vmem:[%s9 + $0x4] sm:$0xf]
    %v1375 = vld [vmem:[%s9 + $0x8] sm:$0xf]
    %v1376 = vld [vmem:[%s9 + $0xc] sm:$0xf]
    %v1377 = vld [vmem:[%s10] sm:$0x1]
    %v1379 = vlaneseq
    %v1380 = vshrl.u32 %v1379, 7
    %v1381 = vsub.s32 0, %v1380
    %v1382 = vrot.slane %v1377, %v1381
    %v1388 = vunpack.c.l.b16 %v1373
    %v1389 = vunpack.c.l.b16 %v1374
    %v1390 = vunpack.c.l.b16 %v1375
    %v1391 = vunpack.c.l.b16 %v1376
    %v1392 = vpack.c.b16 %v1389, %v1388
    %v1393 = vpack.c.b16 %v1391, %v1390
    %v1397 = vsel %vm211, %v1372, 0
    %1399 = vmatprep.subr.bf16.mxu0 0
    %1400 = vmatpush1.bf16.msra.mxu0 0
    %1401 = vmatprep.subr.bf16.mxu0 0
    %1402 = vmatpush1.bf16.msra.mxu0 0
    %1403 = vmatprep.subr.bf16.mxu0 0
    %1404 = vmatpush1.bf16.msra.mxu0 0
    %1405 = vmatprep.subr.bf16.mxu0 0
    %1406 = vmatpush1.bf16.msra.mxu0 0
    %1407 = vmatprep.subr.bf16.mxu0 0
    %1408 = vmatpush1.bf16.msra.mxu0 0
    %1409 = vmatprep.subr.bf16.mxu0 0
    %1410 = vmatpush1.bf16.msra.mxu0 0
    %1411 = vmatprep.subr.bf16.mxu0 0
    %1412 = vmatpush1.bf16.msra.mxu0 %v1393
    %1413 = vmatprep.subr.bf16.mxu0 0
    %1414 = vmatpush1.bf16.msra.mxu0 %v1392
    %1415 = vmatprep.subr.bf16.mxu0 0
    %1416 = vmatpush2.bf16.msra.mxu0 0
    %1417 = vmatprep.subr.bf16.mxu0 0
    %1418 = vmatpush2.bf16.msra.mxu0 0
    %1419 = vmatprep.subr.bf16.mxu0 0
    %1420 = vmatpush2.bf16.msra.mxu0 0
    %1421 = vmatprep.subr.bf16.mxu0 0
    %1422 = vmatpush2.bf16.msra.mxu0 0
    %1423 = vmatprep.subr.bf16.mxu0 0
    %1424 = vmatpush2.bf16.msra.mxu0 0
    %1425 = vmatprep.subr.bf16.mxu0 0
    %1426 = vmatpush2.bf16.msra.mxu0 0
    %1427 = vmatprep.subr.bf16.mxu0 0
    %1428 = vmatpush2.bf16.msra.mxu0 0
    %1429 = vmatprep.subr.bf16.mxu0 0
    %1430 = vmatpush2.bf16.msra.mxu0 0
    %1431 = vmatprep.mubr.bf16.mxu0 0
    %1432 = vmatmul.mubr.bf16.gmra.mxu0 %v1397
    %v1433 = vpop.f32.mrf.mxu0
    %v1434 = vadd.f32 %v1382, %v1433
    %v1435 = vpop.f32.mrf.mxu0
    %v1436 = vpop.f32.mrf.mxu0
    %v1437 = vadd.f32 %v1382, %v1436
    %v1438 = vpop.f32.mrf.mxu0
    %1439 = vdwg.mxu0
    %v1440 = vld [vmem:[#allocation2] sm:$0x1]
    %v1441 = vld [vmem:[#allocation2 + $0x1] sm:$0x1]
    %v1442 = vpack.c.bf16 %v1370, %v1370
    %v1443 = vpack.c.bf16 %v1371, %v1371
    %v1444 = vpack.c.bf16 %v1434, %v1434
    %v1445 = vpack.c.bf16 %v1437, %v1437
    %v1446 = vmul.f32 %v1440, -1e+10
    %v1447 = vmul.f32 %v1441, -1e+10
    %v1450 = vlaneseq
    %v1451 = vshrl.u32 %v1450, 7
    %v1452 = vsub.s32 0, %v1451
    %v1453 = vrot.slane %v1446, %v1452
    %v1454 = vlaneseq
    %v1455 = vshrl.u32 %v1454, 7
    %v1456 = vsub.s32 0, %v1455
    %v1457 = vrot.slane %v1447, %v1456
    %v1461 = vsel %vm265, %v1442, 0
    %v1464 = vsel %vm265, %v1444, 0
    %1466 = vmatprep.subr.bf16.mxu0 0
    %1467 = vmatpush1.bf16.xpose.msra.mxu0 0
    %1468 = vmatprep.subr.bf16.mxu0 0
    %1469 = vmatpush1.bf16.xpose.msra.mxu0 0
    %1470 = vmatprep.subr.bf16.mxu0 0
    %1471 = vmatpush1.bf16.xpose.msra.mxu0 0
    %1472 = vmatprep.subr.bf16.mxu0 0
    %1473 = vmatpush1.bf16.xpose.msra.mxu0 0
    %1474 = vmatprep.subr.bf16.mxu0 0
    %1475 = vmatpush1.bf16.xpose.msra.mxu0 0
    %1476 = vmatprep.subr.bf16.mxu0 0
    %1477 = vmatpush1.bf16.xpose.msra.mxu0 0
    %1478 = vmatprep.subr.bf16.mxu0 0
    %1479 = vmatpush1.bf16.xpose.msra.mxu0 0
    %1480 = vmatprep.subr.bf16.mxu0 0
    %1481 = vmatpush1.bf16.xpose.msra.mxu0 %v1464
    %1482 = vmatprep.subr.bf16.mxu0 0
    %1483 = vmatpush2.bf16.xpose.msra.mxu0 0
    %1484 = vmatprep.subr.bf16.mxu0 0
    %1485 = vmatpush2.bf16.xpose.msra.mxu0 0
    %1486 = vmatprep.subr.bf16.mxu0 0
    %1487 = vmatpush2.bf16.xpose.msra.mxu0 0
    %1488 = vmatprep.subr.bf16.mxu0 0
    %1489 = vmatpush2.bf16.xpose.msra.mxu0 0
    %1490 = vmatprep.subr.bf16.mxu0 0
    %1491 = vmatpush2.bf16.xpose.msra.mxu0 0
    %1492 = vmatprep.subr.bf16.mxu0 0
    %1493 = vmatpush2.bf16.xpose.msra.mxu0 0
    %1494 = vmatprep.subr.bf16.mxu0 0
    %1495 = vmatpush2.bf16.xpose.msra.mxu0 0
    %1496 = vmatprep.subr.bf16.mxu0 0
    %1497 = vmatpush2.bf16.xpose.msra.mxu0 0
    %1498 = vmatprep.mubr.bf16.mxu0 0
    %1499 = vmatmul.mubr.bf16.gmra.mxu0 %v1461
    %v1500 = vpop.f32.mrf.mxu0
    %v1501 = vadd.f32 %v1453, %v1500
    %v1502 = vpop.f32.mrf.mxu0
    %v1503 = vpop.f32.mrf.mxu0
    %v1504 = vpop.f32.mrf.mxu0
    %1505 = vdwg.mxu0
    %v1507 = vsel %vm265, %v1443, 0
    %v1510 = vsel %vm265, %v1445, 0
    %1512 = vmatprep.subr.bf16.mxu0 0
    %1513 = vmatpush1.bf16.xpose.msra.mxu0 0
    %1514 = vmatprep.subr.bf16.mxu0 0
    %1515 = vmatpush1.bf16.xpose.msra.mxu0 0
    %1516 = vmatprep.subr.bf16.mxu0 0
    %1517 = vmatpush1.bf16.xpose.msra.mxu0 0
    %1518 = vmatprep.subr.bf16.mxu0 0
    %1519 = vmatpush1.bf16.xpose.msra.mxu0 0
    %1520 = vmatprep.subr.bf16.mxu0 0
    %1521 = vmatpush1.bf16.xpose.msra.mxu0 0
    %1522 = vmatprep.subr.bf16.mxu0 0
    %1523 = vmatpush1.bf16.xpose.msra.mxu0 0
    %1524 = vmatprep.subr.bf16.mxu0 0
    %1525 = vmatpush1.bf16.xpose.msra.mxu0 0
    %1526 = vmatprep.subr.bf16.mxu0 0
    %1527 = vmatpush1.bf16.xpose.msra.mxu0 %v1510
    %1528 = vmatprep.subr.bf16.mxu0 0
    %1529 = vmatpush2.bf16.xpose.msra.mxu0 0
    %1530 = vmatprep.subr.bf16.mxu0 0
    %1531 = vmatpush2.bf16.xpose.msra.mxu0 0
    %1532 = vmatprep.subr.bf16.mxu0 0
    %1533 = vmatpush2.bf16.xpose.msra.mxu0 0
    %1534 = vmatprep.subr.bf16.mxu0 0
    %1535 = vmatpush2.bf16.xpose.msra.mxu0 0
    %1536 = vmatprep.subr.bf16.mxu0 0
    %1537 = vmatpush2.bf16.xpose.msra.mxu0 0
    %1538 = vmatprep.subr.bf16.mxu0 0
    %1539 = vmatpush2.bf16.xpose.msra.mxu0 0
    %1540 = vmatprep.subr.bf16.mxu0 0
    %1541 = vmatpush2.bf16.xpose.msra.mxu0 0
    %1542 = vmatprep.subr.bf16.mxu0 0
    %1543 = vmatpush2.bf16.xpose.msra.mxu0 0
    %1544 = vmatprep.mubr.bf16.mxu0 0
    %1545 = vmatmul.mubr.bf16.gmra.mxu0 %v1507
    %v1546 = vpop.f32.mrf.mxu0
    %v1547 = vadd.f32 %v1457, %v1546
    %v1548 = vpop.f32.mrf.mxu0
    %v1549 = vpop.f32.mrf.mxu0
    %v1550 = vpop.f32.mrf.mxu0
    %1551 = vdwg.mxu0
    %v1552 = vsel %vm265, %v1501, -inf
    %1553 = vmax.xlane.f32.xlu0 %v1552
    %v1554 = vpop.xlane.xlu0 %1553
    %v1555 = vsel %vm265, %v1547, -inf
    %1556 = vmax.xlane.f32.xlu0 %v1555
    %v1557 = vpop.xlane.xlu0 %1556
    %v1558 = vsub.f32 %v1501, %v1554
    %v1559 = vsub.f32 %v1547, %v1557
    %v1560 = vmul.f32 %v1558, 1.442695
    %v1561 = vpow.pop %v1560
    %v1562 = vmul.f32 %v1559, 1.442695
    %v1563 = vpow.pop %v1562
    %v1564 = vsel %vm265, %v1561, 0.0
    %1565 = vadd.xlane.f32.xlu0 %v1564
    %v1566 = vpop.xlane.xlu0 %1565
    %v1567 = vsel %vm265, %v1563, 0.0
    %1568 = vadd.xlane.f32.xlu0 %v1567
    %v1569 = vpop.xlane.xlu0 %1568
    %v1570 = vrcp.pop %v1566
    %v1571 = vrcp.pop %v1569
    %v1572 = vmul.f32 %v1561, %v1570
    %v1573 = vmul.f32 %v1563, %v1571
    %1574 = vst.msk [vmem:[#allocation19] sm:$0xff] %vm265, %v1572
    %1575 = vst.msk [vmem:[#allocation19 + $0x8] sm:$0xff] %vm265, %v1573
    %v1576 = vpack.c.bf16 %v1572, %v1572
    %v1577 = vpack.c.bf16 %v1573, %v1573
    %1579 = vrot.lane.b32.xlu0 %v1444, 96
    %v1580 = vpop.permute.xlu0 %1579
    %v1582 = vsel %vm265, %v1576, 0
    %v1585 = vsel %vm392, %v1580, 0
    %1587 = vmatprep.subr.bf16.mxu0 0
    %1588 = vmatpush1.bf16.msra.mxu0 0
    %1589 = vmatprep.subr.bf16.mxu0 0
    %1590 = vmatpush1.bf16.msra.mxu0 0
    %1591 = vmatprep.subr.bf16.mxu0 0
    %1592 = vmatpush1.bf16.msra.mxu0 0
    %1593 = vmatprep.subr.bf16.mxu0 0
    %1594 = vmatpush1.bf16.msra.mxu0 0
    %1595 = vmatprep.subr.bf16.mxu0 0
    %1596 = vmatpush1.bf16.msra.mxu0 0
    %1597 = vmatprep.subr.bf16.mxu0 0
    %1598 = vmatpush1.bf16.msra.mxu0 0
    %1599 = vmatprep.subr.bf16.mxu0 0
    %1600 = vmatpush1.bf16.msra.mxu0 0
    %1601 = vmatprep.subr.bf16.mxu0 0
    %1602 = vmatpush1.bf16.msra.mxu0 %v1585
    %1603 = vmatprep.subr.bf16.mxu0 0
    %1604 = vmatpush2.bf16.msra.mxu0 0
    %1605 = vmatprep.subr.bf16.mxu0 0
    %1606 = vmatpush2.bf16.msra.mxu0 0
    %1607 = vmatprep.subr.bf16.mxu0 0
    %1608 = vmatpush2.bf16.msra.mxu0 0
    %1609 = vmatprep.subr.bf16.mxu0 0
    %1610 = vmatpush2.bf16.msra.mxu0 0
    %1611 = vmatprep.subr.bf16.mxu0 0
    %1612 = vmatpush2.bf16.msra.mxu0 0
    %1613 = vmatprep.subr.bf16.mxu0 0
    %1614 = vmatpush2.bf16.msra.mxu0 0
    %1615 = vmatprep.subr.bf16.mxu0 0
    %1616 = vmatpush2.bf16.msra.mxu0 0
    %1617 = vmatprep.subr.bf16.mxu0 0
    %1618 = vmatpush2.bf16.msra.mxu0 0
    %1619 = vmatprep.mubr.bf16.mxu0 0
    %1620 = vmatmul.mubr.bf16.gmra.mxu0 %v1582
    %v1621 = vpop.f32.mrf.mxu0
    %v1622 = vadd.f32 0.0, %v1621
    %v1623 = vpop.f32.mrf.mxu0
    %v1624 = vpop.f32.mrf.mxu0
    %v1625 = vpop.f32.mrf.mxu0
    %1626 = vdwg.mxu0
    %1628 = vrot.lane.b32.xlu0 %v1445, 96
    %v1629 = vpop.permute.xlu0 %1628
    %v1631 = vsel %vm265, %v1577, 0
    %v1634 = vsel %vm392, %v1629, 0
    %1636 = vmatprep.subr.bf16.mxu0 0
    %1637 = vmatpush1.bf16.msra.mxu0 0
    %1638 = vmatprep.subr.bf16.mxu0 0
    %1639 = vmatpush1.bf16.msra.mxu0 0
    %1640 = vmatprep.subr.bf16.mxu0 0
    %1641 = vmatpush1.bf16.msra.mxu0 0
    %1642 = vmatprep.subr.bf16.mxu0 0
    %1643 = vmatpush1.bf16.msra.mxu0 0
    %1644 = vmatprep.subr.bf16.mxu0 0
    %1645 = vmatpush1.bf16.msra.mxu0 0
    %1646 = vmatprep.subr.bf16.mxu0 0
    %1647 = vmatpush1.bf16.msra.mxu0 0
    %1648 = vmatprep.subr.bf16.mxu0 0
    %1649 = vmatpush1.bf16.msra.mxu0 0
    %1650 = vmatprep.subr.bf16.mxu0 0
    %1651 = vmatpush1.bf16.msra.mxu0 %v1634
    %1652 = vmatprep.subr.bf16.mxu0 0
    %1653 = vmatpush2.bf16.msra.mxu0 0
    %1654 = vmatprep.subr.bf16.mxu0 0
    %1655 = vmatpush2.bf16.msra.mxu0 0
    %1656 = vmatprep.subr.bf16.mxu0 0
    %1657 = vmatpush2.bf16.msra.mxu0 0
    %1658 = vmatprep.subr.bf16.mxu0 0
    %1659 = vmatpush2.bf16.msra.mxu0 0
    %1660 = vmatprep.subr.bf16.mxu0 0
    %1661 = vmatpush2.bf16.msra.mxu0 0
    %1662 = vmatprep.subr.bf16.mxu0 0
    %1663 = vmatpush2.bf16.msra.mxu0 0
    %1664 = vmatprep.subr.bf16.mxu0 0
    %1665 = vmatpush2.bf16.msra.mxu0 0
    %1666 = vmatprep.subr.bf16.mxu0 0
    %1667 = vmatpush2.bf16.msra.mxu0 0
    %1668 = vmatprep.mubr.bf16.mxu0 0
    %1669 = vmatmul.mubr.bf16.gmra.mxu0 %v1631
    %v1670 = vpop.f32.mrf.mxu0
    %v1671 = vadd.f32 0.0, %v1670
    %v1672 = vpop.f32.mrf.mxu0
    %v1673 = vpop.f32.mrf.mxu0
    %v1674 = vpop.f32.mrf.mxu0
    %1675 = vdwg.mxu0
    %1677 = vrot.lane.b32.xlu0 %v1442, 120
    %v1678 = vpop.permute.xlu0 %1677
    %1679 = vrot.lane.b32.xlu0 %v1444, 120
    %v1680 = vpop.permute.xlu0 %1679
    %v1682 = vsel %vm265, %v1678, 0
    %v1685 = vsel %vm265, %v1680, 0
    %1687 = vmatprep.subr.bf16.mxu0 0
    %1688 = vmatpush1.bf16.xpose.msra.mxu0 0
    %1689 = vmatprep.subr.bf16.mxu0 0
    %1690 = vmatpush1.bf16.xpose.msra.mxu0 0
    %1691 = vmatprep.subr.bf16.mxu0 0
    %1692 = vmatpush1.bf16.xpose.msra.mxu0 0
    %1693 = vmatprep.subr.bf16.mxu0 0
    %1694 = vmatpush1.bf16.xpose.msra.mxu0 0
    %1695 = vmatprep.subr.bf16.mxu0 0
    %1696 = vmatpush1.bf16.xpose.msra.mxu0 0
    %1697 = vmatprep.subr.bf16.mxu0 0
    %1698 = vmatpush1.bf16.xpose.msra.mxu0 0
    %1699 = vmatprep.subr.bf16.mxu0 0
    %1700 = vmatpush1.bf16.xpose.msra.mxu0 0
    %1701 = vmatprep.subr.bf16.mxu0 0
    %1702 = vmatpush1.bf16.xpose.msra.mxu0 %v1685
    %1703 = vmatprep.subr.bf16.mxu0 0
    %1704 = vmatpush2.bf16.xpose.msra.mxu0 0
    %1705 = vmatprep.subr.bf16.mxu0 0
    %1706 = vmatpush2.bf16.xpose.msra.mxu0 0
    %1707 = vmatprep.subr.bf16.mxu0 0
    %1708 = vmatpush2.bf16.xpose.msra.mxu0 0
    %1709 = vmatprep.subr.bf16.mxu0 0
    %1710 = vmatpush2.bf16.xpose.msra.mxu0 0
    %1711 = vmatprep.subr.bf16.mxu0 0
    %1712 = vmatpush2.bf16.xpose.msra.mxu0 0
    %1713 = vmatprep.subr.bf16.mxu0 0
    %1714 = vmatpush2.bf16.xpose.msra.mxu0 0
    %1715 = vmatprep.subr.bf16.mxu0 0
    %1716 = vmatpush2.bf16.xpose.msra.mxu0 0
    %1717 = vmatprep.subr.bf16.mxu0 0
    %1718 = vmatpush2.bf16.xpose.msra.mxu0 0
    %1719 = vmatprep.mubr.bf16.mxu0 0
    %1720 = vmatmul.mubr.bf16.gmra.mxu0 %v1682
    %v1721 = vpop.f32.mrf.mxu0
    %v1722 = vadd.f32 %v1453, %v1721
    %v1723 = vpop.f32.mrf.mxu0
    %v1724 = vpop.f32.mrf.mxu0
    %v1725 = vpop.f32.mrf.mxu0
    %1726 = vdwg.mxu0
    %1728 = vrot.lane.b32.xlu0 %v1443, 120
    %v1729 = vpop.permute.xlu0 %1728
    %1730 = vrot.lane.b32.xlu0 %v1445, 120
    %v1731 = vpop.permute.xlu0 %1730
    %v1733 = vsel %vm265, %v1729, 0
    %v1736 = vsel %vm265, %v1731, 0
    %1738 = vmatprep.subr.bf16.mxu0 0
    %1739 = vmatpush1.bf16.xpose.msra.mxu0 0
    %1740 = vmatprep.subr.bf16.mxu0 0
    %1741 = vmatpush1.bf16.xpose.msra.mxu0 0
    %1742 = vmatprep.subr.bf16.mxu0 0
    %1743 = vmatpush1.bf16.xpose.msra.mxu0 0
    %1744 = vmatprep.subr.bf16.mxu0 0
    %1745 = vmatpush1.bf16.xpose.msra.mxu0 0
    %1746 = vmatprep.subr.bf16.mxu0 0
    %1747 = vmatpush1.bf16.xpose.msra.mxu0 0
    %1748 = vmatprep.subr.bf16.mxu0 0
    %1749 = vmatpush1.bf16.xpose.msra.mxu0 0
    %1750 = vmatprep.subr.bf16.mxu0 0
    %1751 = vmatpush1.bf16.xpose.msra.mxu0 0
    %1752 = vmatprep.subr.bf16.mxu0 0
    %1753 = vmatpush1.bf16.xpose.msra.mxu0 %v1736
    %1754 = vmatprep.subr.bf16.mxu0 0
    %1755 = vmatpush2.bf16.xpose.msra.mxu0 0
    %1756 = vmatprep.subr.bf16.mxu0 0
    %1757 = vmatpush2.bf16.xpose.msra.mxu0 0
    %1758 = vmatprep.subr.bf16.mxu0 0
    %1759 = vmatpush2.bf16.xpose.msra.mxu0 0
    %1760 = vmatprep.subr.bf16.mxu0 0
    %1761 = vmatpush2.bf16.xpose.msra.mxu0 0
    %1762 = vmatprep.subr.bf16.mxu0 0
    %1763 = vmatpush2.bf16.xpose.msra.mxu0 0
    %1764 = vmatprep.subr.bf16.mxu0 0
    %1765 = vmatpush2.bf16.xpose.msra.mxu0 0
    %1766 = vmatprep.subr.bf16.mxu0 0
    %1767 = vmatpush2.bf16.xpose.msra.mxu0 0
    %1768 = vmatprep.subr.bf16.mxu0 0
    %1769 = vmatpush2.bf16.xpose.msra.mxu0 0
    %1770 = vmatprep.mubr.bf16.mxu0 0
    %1771 = vmatmul.mubr.bf16.gmra.mxu0 %v1733
    %v1772 = vpop.f32.mrf.mxu0
    %v1773 = vadd.f32 %v1457, %v1772
    %v1774 = vpop.f32.mrf.mxu0
    %v1775 = vpop.f32.mrf.mxu0
    %v1776 = vpop.f32.mrf.mxu0
    %1777 = vdwg.mxu0
    %v1778 = vsel %vm265, %v1722, -inf
    %1779 = vmax.xlane.f32.xlu0 %v1778
    %v1780 = vpop.xlane.xlu0 %1779
    %v1781 = vsel %vm265, %v1773, -inf
    %1782 = vmax.xlane.f32.xlu0 %v1781
    %v1783 = vpop.xlane.xlu0 %1782
    %v1784 = vsub.f32 %v1722, %v1780
    %v1785 = vsub.f32 %v1773, %v1783
    %v1786 = vmul.f32 %v1784, 1.442695
    %v1787 = vpow.pop %v1786
    %v1788 = vmul.f32 %v1785, 1.442695
    %v1789 = vpow.pop %v1788
    %v1790 = vsel %vm265, %v1787, 0.0
    %1791 = vadd.xlane.f32.xlu0 %v1790
    %v1792 = vpop.xlane.xlu0 %1791
    %v1793 = vsel %vm265, %v1789, 0.0
    %1794 = vadd.xlane.f32.xlu0 %v1793
    %v1795 = vpop.xlane.xlu0 %1794
    %v1796 = vrcp.pop %v1792
    %v1797 = vrcp.pop %v1795
    %v1798 = vmul.f32 %v1787, %v1796
    %v1799 = vmul.f32 %v1789, %v1797
    %s1800 = scalar_lea.vmem [#allocation19], 16
    %1801 = vst.msk [vmem:[%s1800] sm:$0xff] %vm265, %v1798
    %1802 = vst.msk [vmem:[%s1800 + $0x8] sm:$0xff] %vm265, %v1799
    %v1803 = vpack.c.bf16 %v1798, %v1798
    %v1804 = vpack.c.bf16 %v1799, %v1799
    %1805 = vrot.lane.b32.xlu0 %v1444, 88
    %v1806 = vpop.permute.xlu0 %1805
    %v1808 = vsel %vm265, %v1803, 0
    %v1811 = vsel %vm392, %v1806, 0
    %1813 = vmatprep.subr.bf16.mxu0 0
    %1814 = vmatpush1.bf16.msra.mxu0 0
    %1815 = vmatprep.subr.bf16.mxu0 0
    %1816 = vmatpush1.bf16.msra.mxu0 0
    %1817 = vmatprep.subr.bf16.mxu0 0
    %1818 = vmatpush1.bf16.msra.mxu0 0
    %1819 = vmatprep.subr.bf16.mxu0 0
    %1820 = vmatpush1.bf16.msra.mxu0 0
    %1821 = vmatprep.subr.bf16.mxu0 0
    %1822 = vmatpush1.bf16.msra.mxu0 0
    %1823 = vmatprep.subr.bf16.mxu0 0
    %1824 = vmatpush1.bf16.msra.mxu0 0
    %1825 = vmatprep.subr.bf16.mxu0 0
    %1826 = vmatpush1.bf16.msra.mxu0 0
    %1827 = vmatprep.subr.bf16.mxu0 0
    %1828 = vmatpush1.bf16.msra.mxu0 %v1811
    %1829 = vmatprep.subr.bf16.mxu0 0
    %1830 = vmatpush2.bf16.msra.mxu0 0
    %1831 = vmatprep.subr.bf16.mxu0 0
    %1832 = vmatpush2.bf16.msra.mxu0 0
    %1833 = vmatprep.subr.bf16.mxu0 0
    %1834 = vmatpush2.bf16.msra.mxu0 0
    %1835 = vmatprep.subr.bf16.mxu0 0
    %1836 = vmatpush2.bf16.msra.mxu0 0
    %1837 = vmatprep.subr.bf16.mxu0 0
    %1838 = vmatpush2.bf16.msra.mxu0 0
    %1839 = vmatprep.subr.bf16.mxu0 0
    %1840 = vmatpush2.bf16.msra.mxu0 0
    %1841 = vmatprep.subr.bf16.mxu0 0
    %1842 = vmatpush2.bf16.msra.mxu0 0
    %1843 = vmatprep.subr.bf16.mxu0 0
    %1844 = vmatpush2.bf16.msra.mxu0 0
    %1845 = vmatprep.mubr.bf16.mxu0 0
    %1846 = vmatmul.mubr.bf16.gmra.mxu0 %v1808
    %v1847 = vpop.f32.mrf.mxu0
    %v1848 = vadd.f32 0.0, %v1847
    %v1849 = vpop.f32.mrf.mxu0
    %v1850 = vpop.f32.mrf.mxu0
    %v1851 = vpop.f32.mrf.mxu0
    %1852 = vdwg.mxu0
    %1853 = vrot.lane.b32.xlu0 %v1445, 88
    %v1854 = vpop.permute.xlu0 %1853
    %v1856 = vsel %vm265, %v1804, 0
    %v1859 = vsel %vm392, %v1854, 0
    %1861 = vmatprep.subr.bf16.mxu0 0
    %1862 = vmatpush1.bf16.msra.mxu0 0
    %1863 = vmatprep.subr.bf16.mxu0 0
    %1864 = vmatpush1.bf16.msra.mxu0 0
    %1865 = vmatprep.subr.bf16.mxu0 0
    %1866 = vmatpush1.bf16.msra.mxu0 0
    %1867 = vmatprep.subr.bf16.mxu0 0
    %1868 = vmatpush1.bf16.msra.mxu0 0
    %1869 = vmatprep.subr.bf16.mxu0 0
    %1870 = vmatpush1.bf16.msra.mxu0 0
    %1871 = vmatprep.subr.bf16.mxu0 0
    %1872 = vmatpush1.bf16.msra.mxu0 0
    %1873 = vmatprep.subr.bf16.mxu0 0
    %1874 = vmatpush1.bf16.msra.mxu0 0
    %1875 = vmatprep.subr.bf16.mxu0 0
    %1876 = vmatpush1.bf16.msra.mxu0 %v1859
    %1877 = vmatprep.subr.bf16.mxu0 0
    %1878 = vmatpush2.bf16.msra.mxu0 0
    %1879 = vmatprep.subr.bf16.mxu0 0
    %1880 = vmatpush2.bf16.msra.mxu0 0
    %1881 = vmatprep.subr.bf16.mxu0 0
    %1882 = vmatpush2.bf16.msra.mxu0 0
    %1883 = vmatprep.subr.bf16.mxu0 0
    %1884 = vmatpush2.bf16.msra.mxu0 0
    %1885 = vmatprep.subr.bf16.mxu0 0
    %1886 = vmatpush2.bf16.msra.mxu0 0
    %1887 = vmatprep.subr.bf16.mxu0 0
    %1888 = vmatpush2.bf16.msra.mxu0 0
    %1889 = vmatprep.subr.bf16.mxu0 0
    %1890 = vmatpush2.bf16.msra.mxu0 0
    %1891 = vmatprep.subr.bf16.mxu0 0
    %1892 = vmatpush2.bf16.msra.mxu0 0
    %1893 = vmatprep.mubr.bf16.mxu0 0
    %1894 = vmatmul.mubr.bf16.gmra.mxu0 %v1856
    %v1895 = vpop.f32.mrf.mxu0
    %v1896 = vadd.f32 0.0, %v1895
    %v1897 = vpop.f32.mrf.mxu0
    %v1898 = vpop.f32.mrf.mxu0
    %v1899 = vpop.f32.mrf.mxu0
    %1900 = vdwg.mxu0
    %1901 = vrot.lane.b32.xlu0 %v1442, 112
    %v1902 = vpop.permute.xlu0 %1901
    %1903 = vrot.lane.b32.xlu0 %v1444, 112
    %v1904 = vpop.permute.xlu0 %1903
    %v1906 = vsel %vm265, %v1902, 0
    %v1909 = vsel %vm265, %v1904, 0
    %1911 = vmatprep.subr.bf16.mxu0 0
    %1912 = vmatpush1.bf16.xpose.msra.mxu0 0
    %1913 = vmatprep.subr.bf16.mxu0 0
    %1914 = vmatpush1.bf16.xpose.msra.mxu0 0
    %1915 = vmatprep.subr.bf16.mxu0 0
    %1916 = vmatpush1.bf16.xpose.msra.mxu0 0
    %1917 = vmatprep.subr.bf16.mxu0 0
    %1918 = vmatpush1.bf16.xpose.msra.mxu0 0
    %1919 = vmatprep.subr.bf16.mxu0 0
    %1920 = vmatpush1.bf16.xpose.msra.mxu0 0
    %1921 = vmatprep.subr.bf16.mxu0 0
    %1922 = vmatpush1.bf16.xpose.msra.mxu0 0
    %1923 = vmatprep.subr.bf16.mxu0 0
    %1924 = vmatpush1.bf16.xpose.msra.mxu0 0
    %1925 = vmatprep.subr.bf16.mxu0 0
    %1926 = vmatpush1.bf16.xpose.msra.mxu0 %v1909
    %1927 = vmatprep.subr.bf16.mxu0 0
    %1928 = vmatpush2.bf16.xpose.msra.mxu0 0
    %1929 = vmatprep.subr.bf16.mxu0 0
    %1930 = vmatpush2.bf16.xpose.msra.mxu0 0
    %1931 = vmatprep.subr.bf16.mxu0 0
    %1932 = vmatpush2.bf16.xpose.msra.mxu0 0
    %1933 = vmatprep.subr.bf16.mxu0 0
    %1934 = vmatpush2.bf16.xpose.msra.mxu0 0
    %1935 = vmatprep.subr.bf16.mxu0 0
    %1936 = vmatpush2.bf16.xpose.msra.mxu0 0
    %1937 = vmatprep.subr.bf16.mxu0 0
    %1938 = vmatpush2.bf16.xpose.msra.mxu0 0
    %1939 = vmatprep.subr.bf16.mxu0 0
    %1940 = vmatpush2.bf16.xpose.msra.mxu0 0
    %1941 = vmatprep.subr.bf16.mxu0 0
    %1942 = vmatpush2.bf16.xpose.msra.mxu0 0
    %1943 = vmatprep.mubr.bf16.mxu0 0
    %1944 = vmatmul.mubr.bf16.gmra.mxu0 %v1906
    %v1945 = vpop.f32.mrf.mxu0
    %v1946 = vadd.f32 %v1453, %v1945
    %v1947 = vpop.f32.mrf.mxu0
    %v1948 = vpop.f32.mrf.mxu0
    %v1949 = vpop.f32.mrf.mxu0
    %1950 = vdwg.mxu0
    %1951 = vrot.lane.b32.xlu0 %v1443, 112
    %v1952 = vpop.permute.xlu0 %1951
    %1953 = vrot.lane.b32.xlu0 %v1445, 112
    %v1954 = vpop.permute.xlu0 %1953
    %v1956 = vsel %vm265, %v1952, 0
    %v1959 = vsel %vm265, %v1954, 0
    %1961 = vmatprep.subr.bf16.mxu0 0
    %1962 = vmatpush1.bf16.xpose.msra.mxu0 0
    %1963 = vmatprep.subr.bf16.mxu0 0
    %1964 = vmatpush1.bf16.xpose.msra.mxu0 0
    %1965 = vmatprep.subr.bf16.mxu0 0
    %1966 = vmatpush1.bf16.xpose.msra.mxu0 0
    %1967 = vmatprep.subr.bf16.mxu0 0
    %1968 = vmatpush1.bf16.xpose.msra.mxu0 0
    %1969 = vmatprep.subr.bf16.mxu0 0
    %1970 = vmatpush1.bf16.xpose.msra.mxu0 0
    %1971 = vmatprep.subr.bf16.mxu0 0
    %1972 = vmatpush1.bf16.xpose.msra.mxu0 0
    %1973 = vmatprep.subr.bf16.mxu0 0
    %1974 = vmatpush1.bf16.xpose.msra.mxu0 0
    %1975 = vmatprep.subr.bf16.mxu0 0
    %1976 = vmatpush1.bf16.xpose.msra.mxu0 %v1959
    %1977 = vmatprep.subr.bf16.mxu0 0
    %1978 = vmatpush2.bf16.xpose.msra.mxu0 0
    %1979 = vmatprep.subr.bf16.mxu0 0
    %1980 = vmatpush2.bf16.xpose.msra.mxu0 0
    %1981 = vmatprep.subr.bf16.mxu0 0
    %1982 = vmatpush2.bf16.xpose.msra.mxu0 0
    %1983 = vmatprep.subr.bf16.mxu0 0
    %1984 = vmatpush2.bf16.xpose.msra.mxu0 0
    %1985 = vmatprep.subr.bf16.mxu0 0
    %1986 = vmatpush2.bf16.xpose.msra.mxu0 0
    %1987 = vmatprep.subr.bf16.mxu0 0
    %1988 = vmatpush2.bf16.xpose.msra.mxu0 0
    %1989 = vmatprep.subr.bf16.mxu0 0
    %1990 = vmatpush2.bf16.xpose.msra.mxu0 0
    %1991 = vmatprep.subr.bf16.mxu0 0
    %1992 = vmatpush2.bf16.xpose.msra.mxu0 0
    %1993 = vmatprep.mubr.bf16.mxu0 0
    %1994 = vmatmul.mubr.bf16.gmra.mxu0 %v1956
    %v1995 = vpop.f32.mrf.mxu0
    %v1996 = vadd.f32 %v1457, %v1995
    %v1997 = vpop.f32.mrf.mxu0
    %v1998 = vpop.f32.mrf.mxu0
    %v1999 = vpop.f32.mrf.mxu0
    %2000 = vdwg.mxu0
    %v2001 = vsel %vm265, %v1946, -inf
    %2002 = vmax.xlane.f32.xlu0 %v2001
    %v2003 = vpop.xlane.xlu0 %2002
    %v2004 = vsel %vm265, %v1996, -inf
    %2005 = vmax.xlane.f32.xlu0 %v2004
    %v2006 = vpop.xlane.xlu0 %2005
    %v2007 = vsub.f32 %v1946, %v2003
    %v2008 = vsub.f32 %v1996, %v2006
    %v2009 = vmul.f32 %v2007, 1.442695
    %v2010 = vpow.pop %v2009
    %v2011 = vmul.f32 %v2008, 1.442695
    %v2012 = vpow.pop %v2011
    %v2013 = vsel %vm265, %v2010, 0.0
    %2014 = vadd.xlane.f32.xlu0 %v2013
    %v2015 = vpop.xlane.xlu0 %2014
    %v2016 = vsel %vm265, %v2012, 0.0
    %2017 = vadd.xlane.f32.xlu0 %v2016
    %v2018 = vpop.xlane.xlu0 %2017
    %v2019 = vrcp.pop %v2015
    %v2020 = vrcp.pop %v2018
    %v2021 = vmul.f32 %v2010, %v2019
    %v2022 = vmul.f32 %v2012, %v2020
    %s2023 = scalar_lea.vmem [#allocation19], 32
    %2024 = vst.msk [vmem:[%s2023] sm:$0xff] %vm265, %v2021
    %2025 = vst.msk [vmem:[%s2023 + $0x8] sm:$0xff] %vm265, %v2022
    %v2026 = vpack.c.bf16 %v2021, %v2021
    %v2027 = vpack.c.bf16 %v2022, %v2022
    %2028 = vrot.lane.b32.xlu0 %v1444, 80
    %v2029 = vpop.permute.xlu0 %2028
    %v2031 = vsel %vm265, %v2026, 0
    %v2034 = vsel %vm392, %v2029, 0
    %2036 = vmatprep.subr.bf16.mxu0 0
    %2037 = vmatpush1.bf16.msra.mxu0 0
    %2038 = vmatprep.subr.bf16.mxu0 0
    %2039 = vmatpush1.bf16.msra.mxu0 0
    %2040 = vmatprep.subr.bf16.mxu0 0
    %2041 = vmatpush1.bf16.msra.mxu0 0
    %2042 = vmatprep.subr.bf16.mxu0 0
    %2043 = vmatpush1.bf16.msra.mxu0 0
    %2044 = vmatprep.subr.bf16.mxu0 0
    %2045 = vmatpush1.bf16.msra.mxu0 0
    %2046 = vmatprep.subr.bf16.mxu0 0
    %2047 = vmatpush1.bf16.msra.mxu0 0
    %2048 = vmatprep.subr.bf16.mxu0 0
    %2049 = vmatpush1.bf16.msra.mxu0 0
    %2050 = vmatprep.subr.bf16.mxu0 0
    %2051 = vmatpush1.bf16.msra.mxu0 %v2034
    %2052 = vmatprep.subr.bf16.mxu0 0
    %2053 = vmatpush2.bf16.msra.mxu0 0
    %2054 = vmatprep.subr.bf16.mxu0 0
    %2055 = vmatpush2.bf16.msra.mxu0 0
    %2056 = vmatprep.subr.bf16.mxu0 0
    %2057 = vmatpush2.bf16.msra.mxu0 0
    %2058 = vmatprep.subr.bf16.mxu0 0
    %2059 = vmatpush2.bf16.msra.mxu0 0
    %2060 = vmatprep.subr.bf16.mxu0 0
    %2061 = vmatpush2.bf16.msra.mxu0 0
    %2062 = vmatprep.subr.bf16.mxu0 0
    %2063 = vmatpush2.bf16.msra.mxu0 0
    %2064 = vmatprep.subr.bf16.mxu0 0
    %2065 = vmatpush2.bf16.msra.mxu0 0
    %2066 = vmatprep.subr.bf16.mxu0 0
    %2067 = vmatpush2.bf16.msra.mxu0 0
    %2068 = vmatprep.mubr.bf16.mxu0 0
    %2069 = vmatmul.mubr.bf16.gmra.mxu0 %v2031
    %v2070 = vpop.f32.mrf.mxu0
    %v2071 = vadd.f32 0.0, %v2070
    %v2072 = vpop.f32.mrf.mxu0
    %v2073 = vpop.f32.mrf.mxu0
    %v2074 = vpop.f32.mrf.mxu0
    %2075 = vdwg.mxu0
    %2076 = vrot.lane.b32.xlu0 %v1445, 80
    %v2077 = vpop.permute.xlu0 %2076
    %v2079 = vsel %vm265, %v2027, 0
    %v2082 = vsel %vm392, %v2077, 0
    %2084 = vmatprep.subr.bf16.mxu0 0
    %2085 = vmatpush1.bf16.msra.mxu0 0
    %2086 = vmatprep.subr.bf16.mxu0 0
    %2087 = vmatpush1.bf16.msra.mxu0 0
    %2088 = vmatprep.subr.bf16.mxu0 0
    %2089 = vmatpush1.bf16.msra.mxu0 0
    %2090 = vmatprep.subr.bf16.mxu0 0
    %2091 = vmatpush1.bf16.msra.mxu0 0
    %2092 = vmatprep.subr.bf16.mxu0 0
    %2093 = vmatpush1.bf16.msra.mxu0 0
    %2094 = vmatprep.subr.bf16.mxu0 0
    %2095 = vmatpush1.bf16.msra.mxu0 0
    %2096 = vmatprep.subr.bf16.mxu0 0
    %2097 = vmatpush1.bf16.msra.mxu0 0
    %2098 = vmatprep.subr.bf16.mxu0 0
    %2099 = vmatpush1.bf16.msra.mxu0 %v2082
    %2100 = vmatprep.subr.bf16.mxu0 0
    %2101 = vmatpush2.bf16.msra.mxu0 0
    %2102 = vmatprep.subr.bf16.mxu0 0
    %2103 = vmatpush2.bf16.msra.mxu0 0
    %2104 = vmatprep.subr.bf16.mxu0 0
    %2105 = vmatpush2.bf16.msra.mxu0 0
    %2106 = vmatprep.subr.bf16.mxu0 0
    %2107 = vmatpush2.bf16.msra.mxu0 0
    %2108 = vmatprep.subr.bf16.mxu0 0
    %2109 = vmatpush2.bf16.msra.mxu0 0
    %2110 = vmatprep.subr.bf16.mxu0 0
    %2111 = vmatpush2.bf16.msra.mxu0 0
    %2112 = vmatprep.subr.bf16.mxu0 0
    %2113 = vmatpush2.bf16.msra.mxu0 0
    %2114 = vmatprep.subr.bf16.mxu0 0
    %2115 = vmatpush2.bf16.msra.mxu0 0
    %2116 = vmatprep.mubr.bf16.mxu0 0
    %2117 = vmatmul.mubr.bf16.gmra.mxu0 %v2079
    %v2118 = vpop.f32.mrf.mxu0
    %v2119 = vadd.f32 0.0, %v2118
    %v2120 = vpop.f32.mrf.mxu0
    %v2121 = vpop.f32.mrf.mxu0
    %v2122 = vpop.f32.mrf.mxu0
    %2123 = vdwg.mxu0
    %2124 = vrot.lane.b32.xlu0 %v1442, 104
    %v2125 = vpop.permute.xlu0 %2124
    %2126 = vrot.lane.b32.xlu0 %v1444, 104
    %v2127 = vpop.permute.xlu0 %2126
    %v2129 = vsel %vm265, %v2125, 0
    %v2132 = vsel %vm265, %v2127, 0
    %2134 = vmatprep.subr.bf16.mxu0 0
    %2135 = vmatpush1.bf16.xpose.msra.mxu0 0
    %2136 = vmatprep.subr.bf16.mxu0 0
    %2137 = vmatpush1.bf16.xpose.msra.mxu0 0
    %2138 = vmatprep.subr.bf16.mxu0 0
    %2139 = vmatpush1.bf16.xpose.msra.mxu0 0
    %2140 = vmatprep.subr.bf16.mxu0 0
    %2141 = vmatpush1.bf16.xpose.msra.mxu0 0
    %2142 = vmatprep.subr.bf16.mxu0 0
    %2143 = vmatpush1.bf16.xpose.msra.mxu0 0
    %2144 = vmatprep.subr.bf16.mxu0 0
    %2145 = vmatpush1.bf16.xpose.msra.mxu0 0
    %2146 = vmatprep.subr.bf16.mxu0 0
    %2147 = vmatpush1.bf16.xpose.msra.mxu0 0
    %2148 = vmatprep.subr.bf16.mxu0 0
    %2149 = vmatpush1.bf16.xpose.msra.mxu0 %v2132
    %2150 = vmatprep.subr.bf16.mxu0 0
    %2151 = vmatpush2.bf16.xpose.msra.mxu0 0
    %2152 = vmatprep.subr.bf16.mxu0 0
    %2153 = vmatpush2.bf16.xpose.msra.mxu0 0
    %2154 = vmatprep.subr.bf16.mxu0 0
    %2155 = vmatpush2.bf16.xpose.msra.mxu0 0
    %2156 = vmatprep.subr.bf16.mxu0 0
    %2157 = vmatpush2.bf16.xpose.msra.mxu0 0
    %2158 = vmatprep.subr.bf16.mxu0 0
    %2159 = vmatpush2.bf16.xpose.msra.mxu0 0
    %2160 = vmatprep.subr.bf16.mxu0 0
    %2161 = vmatpush2.bf16.xpose.msra.mxu0 0
    %2162 = vmatprep.subr.bf16.mxu0 0
    %2163 = vmatpush2.bf16.xpose.msra.mxu0 0
    %2164 = vmatprep.subr.bf16.mxu0 0
    %2165 = vmatpush2.bf16.xpose.msra.mxu0 0
    %2166 = vmatprep.mubr.bf16.mxu0 0
    %2167 = vmatmul.mubr.bf16.gmra.mxu0 %v2129
    %v2168 = vpop.f32.mrf.mxu0
    %v2169 = vadd.f32 %v1453, %v2168
    %v2170 = vpop.f32.mrf.mxu0
    %v2171 = vpop.f32.mrf.mxu0
    %v2172 = vpop.f32.mrf.mxu0
    %2173 = vdwg.mxu0
    %2174 = vrot.lane.b32.xlu0 %v1443, 104
    %v2175 = vpop.permute.xlu0 %2174
    %2176 = vrot.lane.b32.xlu0 %v1445, 104
    %v2177 = vpop.permute.xlu0 %2176
    %v2179 = vsel %vm265, %v2175, 0
    %v2182 = vsel %vm265, %v2177, 0
    %2184 = vmatprep.subr.bf16.mxu0 0
    %2185 = vmatpush1.bf16.xpose.msra.mxu0 0
    %2186 = vmatprep.subr.bf16.mxu0 0
    %2187 = vmatpush1.bf16.xpose.msra.mxu0 0
    %2188 = vmatprep.subr.bf16.mxu0 0
    %2189 = vmatpush1.bf16.xpose.msra.mxu0 0
    %2190 = vmatprep.subr.bf16.mxu0 0
    %2191 = vmatpush1.bf16.xpose.msra.mxu0 0
    %2192 = vmatprep.subr.bf16.mxu0 0
    %2193 = vmatpush1.bf16.xpose.msra.mxu0 0
    %2194 = vmatprep.subr.bf16.mxu0 0
    %2195 = vmatpush1.bf16.xpose.msra.mxu0 0
    %2196 = vmatprep.subr.bf16.mxu0 0
    %2197 = vmatpush1.bf16.xpose.msra.mxu0 0
    %2198 = vmatprep.subr.bf16.mxu0 0
    %2199 = vmatpush1.bf16.xpose.msra.mxu0 %v2182
    %2200 = vmatprep.subr.bf16.mxu0 0
    %2201 = vmatpush2.bf16.xpose.msra.mxu0 0
    %2202 = vmatprep.subr.bf16.mxu0 0
    %2203 = vmatpush2.bf16.xpose.msra.mxu0 0
    %2204 = vmatprep.subr.bf16.mxu0 0
    %2205 = vmatpush2.bf16.xpose.msra.mxu0 0
    %2206 = vmatprep.subr.bf16.mxu0 0
    %2207 = vmatpush2.bf16.xpose.msra.mxu0 0
    %2208 = vmatprep.subr.bf16.mxu0 0
    %2209 = vmatpush2.bf16.xpose.msra.mxu0 0
    %2210 = vmatprep.subr.bf16.mxu0 0
    %2211 = vmatpush2.bf16.xpose.msra.mxu0 0
    %2212 = vmatprep.subr.bf16.mxu0 0
    %2213 = vmatpush2.bf16.xpose.msra.mxu0 0
    %2214 = vmatprep.subr.bf16.mxu0 0
    %2215 = vmatpush2.bf16.xpose.msra.mxu0 0
    %2216 = vmatprep.mubr.bf16.mxu0 0
    %2217 = vmatmul.mubr.bf16.gmra.mxu0 %v2179
    %v2218 = vpop.f32.mrf.mxu0
    %v2219 = vadd.f32 %v1457, %v2218
    %v2220 = vpop.f32.mrf.mxu0
    %v2221 = vpop.f32.mrf.mxu0
    %v2222 = vpop.f32.mrf.mxu0
    %2223 = vdwg.mxu0
    %v2224 = vsel %vm265, %v2169, -inf
    %2225 = vmax.xlane.f32.xlu0 %v2224
    %v2226 = vpop.xlane.xlu0 %2225
    %v2227 = vsel %vm265, %v2219, -inf
    %2228 = vmax.xlane.f32.xlu0 %v2227
    %v2229 = vpop.xlane.xlu0 %2228
    %v2230 = vsub.f32 %v2169, %v2226
    %v2231 = vsub.f32 %v2219, %v2229
    %v2232 = vmul.f32 %v2230, 1.442695
    %v2233 = vpow.pop %v2232
    %v2234 = vmul.f32 %v2231, 1.442695
    %v2235 = vpow.pop %v2234
    %v2236 = vsel %vm265, %v2233, 0.0
    %2237 = vadd.xlane.f32.xlu0 %v2236
    %v2238 = vpop.xlane.xlu0 %2237
    %v2239 = vsel %vm265, %v2235, 0.0
    %2240 = vadd.xlane.f32.xlu0 %v2239
    %v2241 = vpop.xlane.xlu0 %2240
    %v2242 = vrcp.pop %v2238
    %v2243 = vrcp.pop %v2241
    %v2244 = vmul.f32 %v2233, %v2242
    %v2245 = vmul.f32 %v2235, %v2243
    %s2246 = scalar_lea.vmem [#allocation19], 48
    %2247 = vst.msk [vmem:[%s2246] sm:$0xff] %vm265, %v2244
    %2248 = vst.msk [vmem:[%s2246 + $0x8] sm:$0xff] %vm265, %v2245
    %v2249 = vpack.c.bf16 %v2244, %v2244
    %v2250 = vpack.c.bf16 %v2245, %v2245
    %2251 = vrot.lane.b32.xlu0 %v1444, 72
    %v2252 = vpop.permute.xlu0 %2251
    %v2254 = vsel %vm265, %v2249, 0
    %v2257 = vsel %vm392, %v2252, 0
    %2259 = vmatprep.subr.bf16.mxu0 0
    %2260 = vmatpush1.bf16.msra.mxu0 0
    %2261 = vmatprep.subr.bf16.mxu0 0
    %2262 = vmatpush1.bf16.msra.mxu0 0
    %2263 = vmatprep.subr.bf16.mxu0 0
    %2264 = vmatpush1.bf16.msra.mxu0 0
    %2265 = vmatprep.subr.bf16.mxu0 0
    %2266 = vmatpush1.bf16.msra.mxu0 0
    %2267 = vmatprep.subr.bf16.mxu0 0
    %2268 = vmatpush1.bf16.msra.mxu0 0
    %2269 = vmatprep.subr.bf16.mxu0 0
    %2270 = vmatpush1.bf16.msra.mxu0 0
    %2271 = vmatprep.subr.bf16.mxu0 0
    %2272 = vmatpush1.bf16.msra.mxu0 0
    %2273 = vmatprep.subr.bf16.mxu0 0
    %2274 = vmatpush1.bf16.msra.mxu0 %v2257
    %2275 = vmatprep.subr.bf16.mxu0 0
    %2276 = vmatpush2.bf16.msra.mxu0 0
    %2277 = vmatprep.subr.bf16.mxu0 0
    %2278 = vmatpush2.bf16.msra.mxu0 0
    %2279 = vmatprep.subr.bf16.mxu0 0
    %2280 = vmatpush2.bf16.msra.mxu0 0
    %2281 = vmatprep.subr.bf16.mxu0 0
    %2282 = vmatpush2.bf16.msra.mxu0 0
    %2283 = vmatprep.subr.bf16.mxu0 0
    %2284 = vmatpush2.bf16.msra.mxu0 0
    %2285 = vmatprep.subr.bf16.mxu0 0
    %2286 = vmatpush2.bf16.msra.mxu0 0
    %2287 = vmatprep.subr.bf16.mxu0 0
    %2288 = vmatpush2.bf16.msra.mxu0 0
    %2289 = vmatprep.subr.bf16.mxu0 0
    %2290 = vmatpush2.bf16.msra.mxu0 0
    %2291 = vmatprep.mubr.bf16.mxu0 0
    %2292 = vmatmul.mubr.bf16.gmra.mxu0 %v2254
    %v2293 = vpop.f32.mrf.mxu0
    %v2294 = vadd.f32 0.0, %v2293
    %v2295 = vpop.f32.mrf.mxu0
    %v2296 = vpop.f32.mrf.mxu0
    %v2297 = vpop.f32.mrf.mxu0
    %2298 = vdwg.mxu0
    %2299 = vrot.lane.b32.xlu0 %v1445, 72
    %v2300 = vpop.permute.xlu0 %2299
    %v2302 = vsel %vm265, %v2250, 0
    %v2305 = vsel %vm392, %v2300, 0
    %2307 = vmatprep.subr.bf16.mxu0 0
    %2308 = vmatpush1.bf16.msra.mxu0 0
    %2309 = vmatprep.subr.bf16.mxu0 0
    %2310 = vmatpush1.bf16.msra.mxu0 0
    %2311 = vmatprep.subr.bf16.mxu0 0
    %2312 = vmatpush1.bf16.msra.mxu0 0
    %2313 = vmatprep.subr.bf16.mxu0 0
    %2314 = vmatpush1.bf16.msra.mxu0 0
    %2315 = vmatprep.subr.bf16.mxu0 0
    %2316 = vmatpush1.bf16.msra.mxu0 0
    %2317 = vmatprep.subr.bf16.mxu0 0
    %2318 = vmatpush1.bf16.msra.mxu0 0
    %2319 = vmatprep.subr.bf16.mxu0 0
    %2320 = vmatpush1.bf16.msra.mxu0 0
    %2321 = vmatprep.subr.bf16.mxu0 0
    %2322 = vmatpush1.bf16.msra.mxu0 %v2305
    %2323 = vmatprep.subr.bf16.mxu0 0
    %2324 = vmatpush2.bf16.msra.mxu0 0
    %2325 = vmatprep.subr.bf16.mxu0 0
    %2326 = vmatpush2.bf16.msra.mxu0 0
    %2327 = vmatprep.subr.bf16.mxu0 0
    %2328 = vmatpush2.bf16.msra.mxu0 0
    %2329 = vmatprep.subr.bf16.mxu0 0
    %2330 = vmatpush2.bf16.msra.mxu0 0
    %2331 = vmatprep.subr.bf16.mxu0 0
    %2332 = vmatpush2.bf16.msra.mxu0 0
    %2333 = vmatprep.subr.bf16.mxu0 0
    %2334 = vmatpush2.bf16.msra.mxu0 0
    %2335 = vmatprep.subr.bf16.mxu0 0
    %2336 = vmatpush2.bf16.msra.mxu0 0
    %2337 = vmatprep.subr.bf16.mxu0 0
    %2338 = vmatpush2.bf16.msra.mxu0 0
    %2339 = vmatprep.mubr.bf16.mxu0 0
    %2340 = vmatmul.mubr.bf16.gmra.mxu0 %v2302
    %v2341 = vpop.f32.mrf.mxu0
    %v2342 = vadd.f32 0.0, %v2341
    %v2343 = vpop.f32.mrf.mxu0
    %v2344 = vpop.f32.mrf.mxu0
    %v2345 = vpop.f32.mrf.mxu0
    %2346 = vdwg.mxu0
    %2349 = vrot.lane.b32.xlu0 %v1848, 8
    %v2350 = vpop.permute.xlu0 %2349
    %2351 = vrot.lane.b32.xlu0 %v1896, 8
    %v2352 = vpop.permute.xlu0 %2351
    %2357 = vrot.lane.b32.xlu0 %v2071, 16
    %v2358 = vpop.permute.xlu0 %2357
    %2359 = vrot.lane.b32.xlu0 %v2119, 16
    %v2360 = vpop.permute.xlu0 %2359
    %2365 = vrot.lane.b32.xlu0 %v2294, 24
    %v2366 = vpop.permute.xlu0 %2365
    %2367 = vrot.lane.b32.xlu0 %v2342, 24
    %v2368 = vpop.permute.xlu0 %2367
    %v2371 = vsel %vm265, %v1622, %v2350
    %v2372 = vsel %vm265, %v1671, %v2352
    %v2373 = vsel %vm1181, %v2371, %v2358
    %v2374 = vsel %vm1181, %v2372, %v2360
    %v2375 = vsel %vm1184, %v2373, %v2366
    %v2376 = vsel %vm1184, %v2374, %v2368
    %v2377 = vpack.c.bf16 %v2376, %v2375
    %v2378 = vld [vmem:[#allocation13] sm:$0xf]
    %v2379 = vld [vmem:[#allocation13 + $0x4] sm:$0xf]
    %v2380 = vld [vmem:[#allocation13 + $0x8] sm:$0xf]
    %v2381 = vld [vmem:[#allocation13 + $0xc] sm:$0xf]
    %v2382 = vld [vmem:[%s12] sm:$0x1]
    %v2384 = vlaneseq
    %v2385 = vshrl.u32 %v2384, 7
    %v2386 = vsub.s32 0, %v2385
    %v2387 = vrot.slane %v2382, %v2386
    %v2393 = vunpack.c.l.b16 %v2378
    %v2394 = vunpack.c.l.b16 %v2379
    %v2395 = vunpack.c.l.b16 %v2380
    %v2396 = vunpack.c.l.b16 %v2381
    %v2397 = vpack.c.b16 %v2394, %v2393
    %v2398 = vpack.c.b16 %v2396, %v2395
    %v2402 = vsel %vm211, %v2377, 0
    %2404 = vmatprep.subr.bf16.mxu0 0
    %2405 = vmatpush1.bf16.msra.mxu0 0
    %2406 = vmatprep.subr.bf16.mxu0 0
    %2407 = vmatpush1.bf16.msra.mxu0 0
    %2408 = vmatprep.subr.bf16.mxu0 0
    %2409 = vmatpush1.bf16.msra.mxu0 0
    %2410 = vmatprep.subr.bf16.mxu0 0
    %2411 = vmatpush1.bf16.msra.mxu0 0
    %2412 = vmatprep.subr.bf16.mxu0 0
    %2413 = vmatpush1.bf16.msra.mxu0 0
    %2414 = vmatprep.subr.bf16.mxu0 0
    %2415 = vmatpush1.bf16.msra.mxu0 0
    %2416 = vmatprep.subr.bf16.mxu0 0
    %2417 = vmatpush1.bf16.msra.mxu0 %v2398
    %2418 = vmatprep.subr.bf16.mxu0 0
    %2419 = vmatpush1.bf16.msra.mxu0 %v2397
    %2420 = vmatprep.subr.bf16.mxu0 0
    %2421 = vmatpush2.bf16.msra.mxu0 0
    %2422 = vmatprep.subr.bf16.mxu0 0
    %2423 = vmatpush2.bf16.msra.mxu0 0
    %2424 = vmatprep.subr.bf16.mxu0 0
    %2425 = vmatpush2.bf16.msra.mxu0 0
    %2426 = vmatprep.subr.bf16.mxu0 0
    %2427 = vmatpush2.bf16.msra.mxu0 0
    %2428 = vmatprep.subr.bf16.mxu0 0
    %2429 = vmatpush2.bf16.msra.mxu0 0
    %2430 = vmatprep.subr.bf16.mxu0 0
    %2431 = vmatpush2.bf16.msra.mxu0 0
    %2432 = vmatprep.subr.bf16.mxu0 0
    %2433 = vmatpush2.bf16.msra.mxu0 0
    %2434 = vmatprep.subr.bf16.mxu0 0
    %2435 = vmatpush2.bf16.msra.mxu0 0
    %2436 = vmatprep.mubr.bf16.mxu0 0
    %2437 = vmatmul.mubr.bf16.gmra.mxu0 %v2402
    %v2438 = vpop.f32.mrf.mxu0
    %v2439 = vadd.f32 %v2387, %v2438
    %v2440 = vpop.f32.mrf.mxu0
    %v2441 = vpop.f32.mrf.mxu0
    %v2442 = vadd.f32 %v2387, %v2441
    %v2443 = vpop.f32.mrf.mxu0
    %2444 = vdwg.mxu0
    %v2445 = vadd.f32 %v2439, %v1300
    %v2446 = vadd.f32 %v2442, %v1301
    %v2447 = vsel %vm211, %v2445, 0.0
    %2448 = vadd.xlane.f32.xlu0 %v2447
    %v2449 = vpop.xlane.xlu0 %2448
    %v2450 = vsel %vm211, %v2446, 0.0
    %2451 = vadd.xlane.f32.xlu0 %v2450
    %v2452 = vpop.xlane.xlu0 %2451
    %v2453 = vmul.f32 %v2449, %v1263
    %v2454 = vmul.f32 %v2452, %v1263
    %v2455 = vsub.f32 %v2445, %v2453
    %v2456 = vsub.f32 %v2446, %v2454
    %v2457 = vmul.f32 %v2455, %v2455
    %v2458 = vmul.f32 %v2456, %v2456
    %v2459 = vsel %vm211, %v2457, 0.0
    %2460 = vadd.xlane.f32.xlu0 %v2459
    %v2461 = vpop.xlane.xlu0 %2460
    %v2462 = vsel %vm211, %v2458, 0.0
    %2463 = vadd.xlane.f32.xlu0 %v2462
    %v2464 = vpop.xlane.xlu0 %2463
    %v2465 = vmul.f32 %v2461, %v1263
    %v2466 = vmul.f32 %v2464, %v1263
    %v2467 = vadd.f32 %v2465, 1e-06
    %v2468 = vadd.f32 %v2466, 1e-06
    %v2469 = vrsqrt.pop %v2467
    %v2470 = vrsqrt.pop %v2468
    %v2471 = vmul.f32 %v2455, %v2469
    %v2472 = vmul.f32 %v2456, %v2470
    %v2473 = vld [vmem:[%s19] sm:$0x1]
    %v2475 = vlaneseq
    %v2476 = vshrl.u32 %v2475, 7
    %v2477 = vsub.s32 0, %v2476
    %v2478 = vrot.slane %v2473, %v2477
    %v2480 = vmul.f32 %v2471, %v2478
    %v2481 = vmul.f32 %v2472, %v2478
    %v2482 = vld [vmem:[%s20] sm:$0x1]
    %v2484 = vlaneseq
    %v2485 = vshrl.u32 %v2484, 7
    %v2486 = vsub.s32 0, %v2485
    %v2487 = vrot.slane %v2482, %v2486
    %v2489 = vadd.f32 %v2480, %v2487
    %v2490 = vadd.f32 %v2481, %v2487
    %v2491 = vpack.c.bf16 %v2490, %v2489
    %v2492 = vld [vmem:[#allocation14] sm:$0xf]
    %v2493 = vld [vmem:[#allocation14 + $0x4] sm:$0xf]
    %v2494 = vld [vmem:[#allocation14 + $0x8] sm:$0xf]
    %v2495 = vld [vmem:[#allocation14 + $0xc] sm:$0xf]
    %v2496 = vld [vmem:[%s14] sm:$0x1]
    %v2498 = vlaneseq
    %v2499 = vshrl.u32 %v2498, 7
    %v2500 = vsub.s32 0, %v2499
    %v2501 = vrot.slane %v2496, %v2500
    %v2507 = vunpack.c.l.b16 %v2492
    %v2508 = vunpack.c.l.b16 %v2493
    %v2509 = vunpack.c.l.b16 %v2494
    %v2510 = vunpack.c.l.b16 %v2495
    %v2511 = vpack.c.b16 %v2508, %v2507
    %v2512 = vpack.c.b16 %v2510, %v2509
    %v2516 = vsel %vm211, %v2491, 0
    %2518 = vmatprep.subr.bf16.mxu0 0
    %2519 = vmatpush1.bf16.msra.mxu0 0
    %2520 = vmatprep.subr.bf16.mxu0 0
    %2521 = vmatpush1.bf16.msra.mxu0 0
    %2522 = vmatprep.subr.bf16.mxu0 0
    %2523 = vmatpush1.bf16.msra.mxu0 0
    %2524 = vmatprep.subr.bf16.mxu0 0
    %2525 = vmatpush1.bf16.msra.mxu0 0
    %2526 = vmatprep.subr.bf16.mxu0 0
    %2527 = vmatpush1.bf16.msra.mxu0 0
    %2528 = vmatprep.subr.bf16.mxu0 0
    %2529 = vmatpush1.bf16.msra.mxu0 0
    %2530 = vmatprep.subr.bf16.mxu0 0
    %2531 = vmatpush1.bf16.msra.mxu0 %v2512
    %2532 = vmatprep.subr.bf16.mxu0 0
    %2533 = vmatpush1.bf16.msra.mxu0 %v2511
    %2534 = vmatprep.subr.bf16.mxu0 0
    %2535 = vmatpush2.bf16.msra.mxu0 0
    %2536 = vmatprep.subr.bf16.mxu0 0
    %2537 = vmatpush2.bf16.msra.mxu0 0
    %2538 = vmatprep.subr.bf16.mxu0 0
    %2539 = vmatpush2.bf16.msra.mxu0 0
    %2540 = vmatprep.subr.bf16.mxu0 0
    %2541 = vmatpush2.bf16.msra.mxu0 0
    %2542 = vmatprep.subr.bf16.mxu0 0
    %2543 = vmatpush2.bf16.msra.mxu0 0
    %2544 = vmatprep.subr.bf16.mxu0 0
    %2545 = vmatpush2.bf16.msra.mxu0 0
    %2546 = vmatprep.subr.bf16.mxu0 0
    %2547 = vmatpush2.bf16.msra.mxu0 0
    %2548 = vmatprep.subr.bf16.mxu0 0
    %2549 = vmatpush2.bf16.msra.mxu0 0
    %2550 = vmatprep.mubr.bf16.mxu0 0
    %2551 = vmatmul.mubr.bf16.gmra.mxu0 %v2516
    %v2552 = vpop.f32.mrf.mxu0
    %v2553 = vadd.f32 %v2501, %v2552
    %v2554 = vpop.f32.mrf.mxu0
    %v2555 = vpop.f32.mrf.mxu0
    %v2556 = vadd.f32 %v2501, %v2555
    %v2557 = vpop.f32.mrf.mxu0
    %2558 = vdwg.mxu0
    %v2559 = vmax.f32 %v2553, 0.0
    %v2560 = vmax.f32 %v2556, 0.0
    %v2561 = vpack.c.bf16 %v2560, %v2559
    %v2562 = vld [vmem:[%s15] sm:$0xf]
    %v2563 = vld [vmem:[%s15 + $0x4] sm:$0xf]
    %v2564 = vld [vmem:[%s15 + $0x8] sm:$0xf]
    %v2565 = vld [vmem:[%s15 + $0xc] sm:$0xf]
    %v2566 = vld [vmem:[%s15 + $0x10] sm:$0xf]
    %v2567 = vld [vmem:[%s15 + $0x14] sm:$0xf]
    %v2568 = vld [vmem:[%s15 + $0x18] sm:$0xf]
    %v2569 = vld [vmem:[%s15 + $0x1c] sm:$0xf]
    %v2570 = vld [vmem:[%s16] sm:$0x1]
    %v2572 = vlaneseq
    %v2573 = vshrl.u32 %v2572, 7
    %v2574 = vsub.s32 0, %v2573
    %v2575 = vrot.slane %v2570, %v2574
    %v2585 = vunpack.c.l.b16 %v2562
    %v2586 = vunpack.c.l.b16 %v2563
    %v2587 = vunpack.c.l.b16 %v2564
    %v2588 = vunpack.c.l.b16 %v2565
    %v2589 = vunpack.c.l.b16 %v2566
    %v2590 = vunpack.c.l.b16 %v2567
    %v2591 = vunpack.c.l.b16 %v2568
    %v2592 = vunpack.c.l.b16 %v2569
    %v2593 = vpack.c.b16 %v2586, %v2585
    %v2594 = vpack.c.b16 %v2588, %v2587
    %v2595 = vpack.c.b16 %v2590, %v2589
    %v2596 = vpack.c.b16 %v2592, %v2591
    %vm2601 = vcmask 523264
    %v2603 = vsel %vm2601, %v2561, 0
    %2605 = vmatprep.subr.bf16.mxu0 0
    %2606 = vmatpush1.bf16.msra.mxu0 0
    %2607 = vmatprep.subr.bf16.mxu0 0
    %2608 = vmatpush1.bf16.msra.mxu0 0
    %2609 = vmatprep.subr.bf16.mxu0 0
    %2610 = vmatpush1.bf16.msra.mxu0 0
    %2611 = vmatprep.subr.bf16.mxu0 0
    %2612 = vmatpush1.bf16.msra.mxu0 0
    %2613 = vmatprep.subr.bf16.mxu0 0
    %2614 = vmatpush1.bf16.msra.mxu0 %v2596
    %2615 = vmatprep.subr.bf16.mxu0 0
    %2616 = vmatpush1.bf16.msra.mxu0 %v2595
    %2617 = vmatprep.subr.bf16.mxu0 0
    %2618 = vmatpush1.bf16.msra.mxu0 %v2594
    %2619 = vmatprep.subr.bf16.mxu0 0
    %2620 = vmatpush1.bf16.msra.mxu0 %v2593
    %2621 = vmatprep.subr.bf16.mxu0 0
    %2622 = vmatpush2.bf16.msra.mxu0 0
    %2623 = vmatprep.subr.bf16.mxu0 0
    %2624 = vmatpush2.bf16.msra.mxu0 0
    %2625 = vmatprep.subr.bf16.mxu0 0
    %2626 = vmatpush2.bf16.msra.mxu0 0
    %2627 = vmatprep.subr.bf16.mxu0 0
    %2628 = vmatpush2.bf16.msra.mxu0 0
    %2629 = vmatprep.subr.bf16.mxu0 0
    %2630 = vmatpush2.bf16.msra.mxu0 0
    %2631 = vmatprep.subr.bf16.mxu0 0
    %2632 = vmatpush2.bf16.msra.mxu0 0
    %2633 = vmatprep.subr.bf16.mxu0 0
    %2634 = vmatpush2.bf16.msra.mxu0 0
    %2635 = vmatprep.subr.bf16.mxu0 0
    %2636 = vmatpush2.bf16.msra.mxu0 0
    %2637 = vmatprep.mubr.bf16.mxu0 0
    %2638 = vmatmul.mubr.bf16.gmra.mxu0 %v2603
    %v2639 = vpop.f32.mrf.mxu0
    %v2640 = vadd.f32 %v2575, %v2639
    %v2641 = vpop.f32.mrf.mxu0
    %v2642 = vpop.f32.mrf.mxu0
    %v2643 = vadd.f32 %v2575, %v2642
    %v2644 = vpop.f32.mrf.mxu0
    %2645 = vdwg.mxu0
    %v2646 = vadd.f32 %v2640, %v2489
    %v2647 = vadd.f32 %v2643, %v2490
    %v2648 = vsel %vm211, %v2646, 0.0
    %2649 = vadd.xlane.f32.xlu0 %v2648
    %v2650 = vpop.xlane.xlu0 %2649
    %v2651 = vsel %vm211, %v2647, 0.0
    %2652 = vadd.xlane.f32.xlu0 %v2651
    %v2653 = vpop.xlane.xlu0 %2652
    %v2654 = vmul.f32 %v2650, %v1263
    %v2655 = vmul.f32 %v2653, %v1263
    %v2656 = vsub.f32 %v2646, %v2654
    %v2657 = vsub.f32 %v2647, %v2655
    %v2658 = vmul.f32 %v2656, %v2656
    %v2659 = vmul.f32 %v2657, %v2657
    %v2660 = vsel %vm211, %v2658, 0.0
    %2661 = vadd.xlane.f32.xlu0 %v2660
    %v2662 = vpop.xlane.xlu0 %2661
    %v2663 = vsel %vm211, %v2659, 0.0
    %2664 = vadd.xlane.f32.xlu0 %v2663
    %v2665 = vpop.xlane.xlu0 %2664
    %v2666 = vmul.f32 %v2662, %v1263
    %v2667 = vmul.f32 %v2665, %v1263
    %v2668 = vadd.f32 %v2666, 1e-06
    %v2669 = vadd.f32 %v2667, 1e-06
    %v2670 = vrsqrt.pop %v2668
    %v2671 = vrsqrt.pop %v2669
    %v2672 = vmul.f32 %v2656, %v2670
    %v2673 = vmul.f32 %v2657, %v2671
    %v2674 = vld [vmem:[%s21] sm:$0x1]
    %v2676 = vlaneseq
    %v2677 = vshrl.u32 %v2676, 7
    %v2678 = vsub.s32 0, %v2677
    %v2679 = vrot.slane %v2674, %v2678
    %v2681 = vmul.f32 %v2672, %v2679
    %v2682 = vmul.f32 %v2673, %v2679
    %v2683 = vld [vmem:[%s22] sm:$0x1]
    %v2685 = vlaneseq
    %v2686 = vshrl.u32 %v2685, 7
    %v2687 = vsub.s32 0, %v2686
    %v2688 = vrot.slane %v2683, %v2687
    %v2690 = vadd.f32 %v2681, %v2688
    %v2691 = vadd.f32 %v2682, %v2688
    %2692 = vst.msk [vmem:[#allocation16] sm:$0xff] %vm211, %v2690
    %2693 = vst.msk [vmem:[#allocation16 + $0x8] sm:$0xff] %vm211, %v2691
    // Predicated region
    $region126: #{tpu_custom_call.1} parent=1 // pred_check
      _
    $region127: #{tpu_custom_call.1} parent=1 // pred_check_branch
      %2695 = sbr.rel (0) target = $region129
    $region128: #{tpu_custom_call.1} parent=1 // pred_region
      %s2697 = ssub.s32 256, 256
      %2698 = vsyncadd [#allocation4], %s2697
      %s2699 = sshll.u32 [#allocation16], 4
      %s2700 = int_to_ptr.vmem [resolvable:$true] %s2699
      %2705 = dma.vmem_to_hbm [thread:$0]  %s2700, 256, %s23, [#allocation4], 128, 128, 8
    $region129: #{tpu_custom_call.1} parent=1 // pred_fallthru
      _
    // Predicated region
    $region130: #{tpu_custom_call.1} parent=1 // pred_check
      _
    $region131: #{tpu_custom_call.1} parent=1 // pred_check_branch
      %2707 = sbr.rel (0) target = $region133
    $region132: #{tpu_custom_call.1} parent=1 // pred_region
      %s2709 = ssub.s32 1024, 1024
      %2710 = vsyncadd [#allocation18], %s2709
      %s2711 = sshll.u32 [#allocation17], 4
      %s2712 = int_to_ptr.vmem [resolvable:$true] %s2711
      %2717 = dma.vmem_to_hbm [thread:$0]  %s2712, 1024, %s24, [#allocation18], 128, 128, 8
    $region133: #{tpu_custom_call.1} parent=1 // pred_fallthru
      _
    // Predicated region
    $region134: #{tpu_custom_call.1} parent=1 // pred_check
      _
    $region135: #{tpu_custom_call.1} parent=1 // pred_check_branch
      %2719 = sbr.rel (0) target = $region137
    $region136: #{tpu_custom_call.1} parent=1 // pred_region
      %s2721 = ssub.s32 1024, 1024
      %2722 = vsyncadd [#allocation18], %s2721
      %s2723 = sshll.u32 [#allocation19], 4
      %s2724 = int_to_ptr.vmem [resolvable:$true] %s2723
      %2729 = dma.vmem_to_hbm [thread:$0]  %s2724, 1024, %s25, [#allocation18], 128, 128, 8
    $region137: #{tpu_custom_call.1} parent=1 // pred_fallthru
      _
    // Predicated region
    $region138: #{tpu_custom_call.1} parent=1 // pred_check
      _
    $region139: #{tpu_custom_call.1} parent=1 // pred_check_branch
      %2731 = sbr.rel (0) target = $region141
    $region140: #{tpu_custom_call.1} parent=1 // pred_region
      %2732 = dma.done [#allocation4], 256
    $region141: #{tpu_custom_call.1} parent=1 // pred_fallthru
      _
    // Predicated region
    $region142: #{tpu_custom_call.1} parent=1 // pred_check
      _
    $region143: #{tpu_custom_call.1} parent=1 // pred_check_branch
      %2734 = sbr.rel (0) target = $region145
    $region144: #{tpu_custom_call.1} parent=1 // pred_region
      %2735 = dma.done [#allocation18], 1024
    $region145: #{tpu_custom_call.1} parent=1 // pred_fallthru
      _
    // Predicated region
    $region146: #{tpu_custom_call.1} parent=1 // pred_check
      _
    $region147: #{tpu_custom_call.1} parent=1 // pred_check_branch
      %2737 = sbr.rel (0) target = $region149
    $region148: #{tpu_custom_call.1} parent=1 // pred_region
      %2738 = dma.done [#allocation18], 1024
    $region149: #{tpu_custom_call.1} parent=1 // pred_fallthru
      _
    %2739 = vsyncpa [#allocation3], 1
    %2740 = vsyncpa [#allocation6], 1
    %2741 = vsyncpa [#allocation9], 1
    %2742 = vsyncpa [#allocation12], 1
    %2743 = vsyncpa [#allocation15], 1
    %2744 = vsyncpa [#allocation4], 1
    %2745 = vsyncpa [#allocation18], 1

</llo_original>
